<compile_context>
chip_gen: v6e
topology: v6e:2x2x1
jax: 0.10.0
libtpu: 0.0.40
codegen_flags: <defaults>
</compile_context>

<pallas_src>
import jax
import jax.numpy as jnp
import numpy as np
from jax.experimental import pallas as pl
from jax.experimental.pallas import tpu as pltpu


_STREAMS = ("for_rnn", "rev_rnn", "for_cites", "rev_cites")
_DIR_STREAMS = (("for_rnn", "for_cites"), ("rev_rnn", "rev_cites"))


# ----------------------------------------------------------------------------
# Kernel 1: per grid step (direction d, node-row tile nt), run BOTH GRU stacks
# (rnn + cites) that consume that direction's adjacency, all layers, full T
# recurrence, and emit the per-direction sum rnn_h + cites_h of the last layer.
#
# PyTorch GRU (gate order r, z, n):
#   r = sigmoid(x W_ir + b_ir + h W_hr + b_hr)
#   z = sigmoid(x W_iz + b_iz + h W_hz + b_hz)
#   n = tanh   (x W_in + b_in + r * (h W_hn + b_hn))
#   h' = (1 - z) * n + z * h
# Packing: W_i -> (D, 6H) = [rnn r|z|n | cites r|z|n], W_h -> (H, 6H),
# b_i' = [b_ir+b_hr | b_iz+b_hz | b_in] per stream (r/z recurrent biases folded
# into the hoisted input bias), b_hn kept separately as (1, 2H).
# ----------------------------------------------------------------------------
def _make_gru_kernel(enc_dims, T, tile_n):
    num_layers = len(enc_dims) - 1
    Hs = enc_dims[1:]

    def kernel(adj_ref, *rest):
        w_refs = rest[:4 * num_layers]
        out_ref = rest[4 * num_layers]
        scr = (rest[4 * num_layers + 1], rest[4 * num_layers + 2])  # rnn, cites

        def run_recurrence(xg, wh, bhn, write):
            """xg: (T*tile_n, 3H) with b_i + b_h{r,z} folded in; bhn: (1, H)."""
            H = wh.shape[0]
            # t == 0: h == 0 -> skip the recurrent matmul entirely.
            xg0 = xg[0:tile_n]
            r = jax.nn.sigmoid(xg0[:, :H])
            z = jax.nn.sigmoid(xg0[:, H:2 * H])
            n = jnp.tanh(xg0[:, 2 * H:] + r * bhn)
            h = (1.0 - z) * n
            write(0, h)
            for t in range(1, T):                 # static unroll (small win_size)
                xgt = xg[t * tile_n:(t + 1) * tile_n]
                hg = jnp.dot(h, wh, preferred_element_type=jnp.float32)
                r = jax.nn.sigmoid(xgt[:, :H] + hg[:, :H])
                z = jax.nn.sigmoid(xgt[:, H:2 * H] + hg[:, H:2 * H])
                n = jnp.tanh(xgt[:, 2 * H:] + r * (hg[:, 2 * H:] + bhn))
                h = (1.0 - z) * n + z * h
                write(t, h)

        # Layer 0: both streams of this direction share the adjacency input ->
        # ONE hoisted bf16 (T*tile_n, N) @ (N, 6H) MXU projection.
        x0 = adj_ref[0, 0]                                  # (T*tile_n, D0) bf16
        wi0 = w_refs[0][0]                                  # (D0, 6H1)      bf16
        bi0 = w_refs[2][0]                                  # (1, 6H1)       f32
        xg_fused = jnp.dot(x0, wi0, preferred_element_type=jnp.float32) + bi0

        for l in range(num_layers):
            H = Hs[l]
            wh_all = w_refs[4 * l + 1][0]                   # (H, 6H)
            bhn_all = w_refs[4 * l + 3][0]                  # (1, 2H)
            if l > 0:
                D = Hs[l - 1]
                wi_all = w_refs[4 * l][0]                   # (D, 6H)
                bi_all = w_refs[4 * l + 2][0]               # (1, 6H)
            last = (l == num_layers - 1)
            for s in range(2):                              # 0 = *_rnn, 1 = *_cites
                if l == 0:
                    xg_s = xg_fused[:, 3 * H * s:3 * H * (s + 1)]
                else:
                    x_s = scr[s][:, :D]                     # previous layer output
                    xg_s = (jnp.dot(x_s, wi_all[:, 3 * H * s:3 * H * (s + 1)],
                                    preferred_element_type=jnp.float32)
                            + bi_all[:, 3 * H * s:3 * H * (s + 1)])
                wh_s = wh_all[:, 3 * H * s:3 * H * (s + 1)]
                bhn_s = bhn_all[:, H * s:H * (s + 1)]
                if last and s == 1:
                    # cites stream of the last layer: fuse the 'add' fusion and
                    # write the per-direction sum straight to the output block.
                    def write(t, h, H=H):
                        out_ref[0, 0, t * tile_n:(t + 1) * tile_n, :] = (
                            h + scr[0][t * tile_n:(t + 1) * tile_n, :H])
                else:
                    def write(t, h, s=s, H=H):
                        scr[s][t * tile_n:(t + 1) * tile_n, :H] = h
                run_recurrence(xg_s, wh_s, bhn_s, write)

    return kernel


def gru_streams_pallas(adj2, layer_weights, enc_dims, T, N, tile_n):
    """adj2: (2, n_tiles, T*tile_n, N) bf16 -> (2, n_tiles, T*tile_n, H_last)."""
    num_layers = len(enc_dims) - 1
    H_last = enc_dims[-1]
    Hmax = max(enc_dims[1:])
    D0 = enc_dims[0]
    n_tiles = N // tile_n
    R = T * tile_n

    in_specs = [pl.BlockSpec((1, 1, R, D0), lambda d, nt: (d, nt, 0, 0))]
    for w in layer_weights:
        nd = w.ndim
        in_specs.append(pl.BlockSpec((1,) + w.shape[1:],
                                     lambda d, nt, nd=nd: (d,) + (0,) * (nd - 1)))

    return pl.pallas_call(
        _make_gru_kernel(enc_dims, T, tile_n),
        out_shape=jax.ShapeDtypeStruct((2, n_tiles, R, H_last), jnp.float32),
        grid_spec=pltpu.PrefetchScalarGridSpec(
            num_scalar_prefetch=0,
            grid=(2, n_tiles),
            in_specs=in_specs,
            out_specs=pl.BlockSpec((1, 1, R, H_last), lambda d, nt: (d, nt, 0, 0)),
            scratch_shapes=[pltpu.VMEM((R, Hmax), jnp.float32),
                            pltpu.VMEM((R, Hmax), jnp.float32)],
        ),
        compiler_params=pltpu.CompilerParams(
            dimension_semantics=("parallel", "parallel"),
            vmem_limit_bytes=48 * 1024 * 1024,
        ),
    )(adj2, *layer_weights)


# ----------------------------------------------------------------------------
# Kernel 2: grid=(T,).  Per timestep t:
#   out_t = dirsum[for, t] @ W1 + dirsum[rev, t] @ W2 + b   (== RNN_out == cites_out)
#   emb[t]  <- out_t                      (contiguous (N, C) block store)
#   loss    += sum((Linear(out_t) - gt_t)^2) / (N*T)   (resident accumulator)
# ----------------------------------------------------------------------------
def fusion_pallas(dirsum, mw1, mw2, mb, pw, pb, gt, T, N):
    H = dirsum.shape[-1]
    C = 2 * H

    def kernel(ds_ref, mw1_ref, mw2_ref, mb_ref, pw_ref, pb_ref, gt_ref,
               emb_ref, loss_ref):
        t = pl.program_id(0)
        left = ds_ref[0, 0]                   # (N, H): for_rnn + for_cites
        right = ds_ref[1, 0]                  # (N, H): rev_rnn + rev_cites
        out = (jnp.dot(left, mw1_ref[...], preferred_element_type=jnp.float32)
               + jnp.dot(right, mw2_ref[...], preferred_element_type=jnp.float32)
               + mb_ref[...])                 # (N, C)
        emb_ref[0] = out
        # FcPredictor stand-in: Linear(C, 1) via VPU reduce.
        pred = jnp.sum(out * pw_ref[...], axis=1, keepdims=True) + pb_ref[...]
        diff = pred - gt_ref[0]

        @pl.when(t == 0)
        def _():
            loss_ref[...] = jnp.zeros_like(loss_ref)

        loss_ref[...] += jnp.sum(diff * diff, keepdims=True) / (N * T)

    emb, loss = pl.pallas_call(
        kernel,
        out_shape=(jax.ShapeDtypeStruct((T, N, C), jnp.float32),
                   jax.ShapeDtypeStruct((1, 1), jnp.float32)),
        grid_spec=pltpu.PrefetchScalarGridSpec(
            num_scalar_prefetch=0,
            grid=(T,),
            in_specs=[
                pl.BlockSpec((2, 1, N, H), lambda t: (0, t, 0, 0)),
                pl.BlockSpec((H, C), lambda t: (0, 0)),
                pl.BlockSpec((H, C), lambda t: (0, 0)),
                pl.BlockSpec((1, C), lambda t: (0, 0)),
                pl.BlockSpec((1, C), lambda t: (0, 0)),
                pl.BlockSpec((1, 1), lambda t: (0, 0)),
                pl.BlockSpec((1, N, 1), lambda t: (t, 0, 0)),
            ],
            out_specs=[pl.BlockSpec((1, N, C), lambda t: (t, 0, 0)),
                       pl.BlockSpec((1, 1), lambda t: (0, 0))],
        ),
        compiler_params=pltpu.CompilerParams(dimension_semantics=("arbitrary",)),
    )(dirsum, mw1, mw2, mb, pw, pb, gt)
    return emb, loss


# ----------------------------------------------------------------------------
# Parameter init (deterministic, PyTorch-style uniform(-1/sqrt(H), 1/sqrt(H)))
# and direction/stream-fused, gate-concatenated packing for the kernels.
# ----------------------------------------------------------------------------
def init_gru_params(key, D, H):
    ks = jax.random.split(key, 12)
    k = 1.0 / np.sqrt(H)
    u = lambda kk, shape: jax.random.uniform(kk, shape, jnp.float32, -k, k)
    return {
        "w_ir": u(ks[0], (D, H)), "w_iz": u(ks[1], (D, H)), "w_in": u(ks[2], (D, H)),
        "w_hr": u(ks[3], (H, H)), "w_hz": u(ks[4], (H, H)), "w_hn": u(ks[5], (H, H)),
        "b_ir": u(ks[6], (1, H)), "b_iz": u(ks[7], (1, H)), "b_in": u(ks[8], (1, H)),
        "b_hr": u(ks[9], (1, H)), "b_hz": u(ks[10], (1, H)), "b_hn": u(ks[11], (1, H)),
    }


def _pack_gru(p):
    wi = jnp.concatenate([p["w_ir"], p["w_iz"], p["w_in"]], axis=1)          # (D, 3H)
    wh = jnp.concatenate([p["w_hr"], p["w_hz"], p["w_hn"]], axis=1)          # (H, 3H)
    # Fold r/z recurrent biases into the hoisted input bias; only b_hn remains
    # per step (it sits inside r * (h W_hn + b_hn)).
    bi = jnp.concatenate([p["b_ir"] + p["b_hr"], p["b_iz"] + p["b_hz"],
                          p["b_in"]], axis=1)                                # (1, 3H)
    return wi, wh, bi, p["b_hn"]


def pack_layer_weights(params, enc_dims):
    """Per layer: wi (2, D, 6H), wh (2, H, 6H), bi (2, 1, 6H), bhn (2, 1, 2H),
    leading dim = direction (for, rev); 6H = [rnn gates | cites gates]."""
    num_layers = len(enc_dims) - 1
    flat = []
    for l in range(num_layers):
        wi_d, wh_d, bi_d, bhn_d = [], [], [], []
        for rnn_name, cit_name in _DIR_STREAMS:
            wir, whr, bir, bhnr = _pack_gru(params[rnn_name][l])
            wic, whc, bic, bhnc = _pack_gru(params[cit_name][l])
            wi_d.append(jnp.concatenate([wir, wic], axis=1))
            wh_d.append(jnp.concatenate([whr, whc], axis=1))
            bi_d.append(jnp.concatenate([bir, bic], axis=1))
            bhn_d.append(jnp.concatenate([bhnr, bhnc], axis=1))
        wi = jnp.stack(wi_d, axis=0)
        if l == 0:
            wi = wi.astype(jnp.bfloat16)   # adjacency is 0/1; weights pre-rounded
        flat += [wi, jnp.stack(wh_d, 0), jnp.stack(bi_d, 0), jnp.stack(bhn_d, 0)]
    return flat


def init_params(key, enc_dims):
    num_layers = len(enc_dims) - 1
    H = enc_dims[-1]
    C = 2 * H  # hidden_channels
    params = {name: [] for name in _STREAMS}
    keys = jax.random.split(key, 4 * num_layers + 2)
    ki = 0
    for name in _STREAMS:
        for l in range(num_layers):
            params[name].append(init_gru_params(keys[ki], enc_dims[l], enc_dims[l + 1]))
            ki += 1
    km = 1.0 / np.sqrt(C)
    kmlp, kpred = keys[ki], keys[ki + 1]
    kk = jax.random.split(kmlp, 2)
    mlp_wt = jax.random.uniform(kk[0], (C, C), jnp.float32, -km, km)   # (in, out)
    params["mlp_w1"] = mlp_wt[:H]      # (H, C)  rows hit by the forward-direction sum
    params["mlp_w2"] = mlp_wt[H:]      # (H, C)  rows hit by the reverse-direction sum
    params["mlp_b"] = jax.random.uniform(kk[1], (1, C), jnp.float32, -km, km)
    kp = jax.random.split(kpred, 2)
    params["pred_w"] = jax.random.uniform(kp[0], (1, C), jnp.float32, -km, km)
    params["pred_b"] = jax.random.uniform(kp[1], (1, 1), jnp.float32, -km, km)
    return params


def round_layer0_input_weights_to_bf16(params):
    """Pre-round layer-0 W_i so the kernel's bf16 MXU path and the f32 reference
    use bit-identical weight values (cast to bf16 is then lossless)."""
    for name in _STREAMS:
        p = dict(params[name][0])
        for k in ("w_ir", "w_iz", "w_in"):
            p[k] = p[k].astype(jnp.bfloat16).astype(jnp.float32)
        params[name][0] = p
    return params


# ----------------------------------------------------------------------------
# Full DDNE_Enc forward (Pallas) and a pure-JAX reference for verification.
# ----------------------------------------------------------------------------
def build_cites_gt(adj_list):
    # TODO(synk): stand-in for cites_loader.build_cites (external): normalized
    # in-degree as the per-node citation target, shape (T, N, 1).
    N = adj_list[0].shape[0]
    gts = [jnp.log1p(jnp.sum(a, axis=0)) / jnp.log1p(float(N)) for a in adj_list]
    return jnp.stack(gts)[..., None].astype(jnp.float32)


def _pick_tile_n(N):
    if N <= 256:
        return N
    for cand in (256, 128, 64, 32, 16):   # multiples of 16: bf16 sublane tile
        if N % cand == 0:
            return cand
    return N


def _node_tile(adj, n_tiles, tile_n):
    """(T, N, N) -> (n_tiles, T*tile_n, N): one contiguous 2-D slab per node tile."""
    T, N, _ = adj.shape
    return (adj.reshape(T, n_tiles, tile_n, N).transpose(1, 0, 2, 3)
               .reshape(n_tiles, T * tile_n, N))


def ddne_enc_forward_pallas(adj_list, params, enc_dims, tile_n=None):
    T = len(adj_list)
    N = adj_list[0].shape[0]
    H = enc_dims[-1]
    C = 2 * H
    if tile_n is None:
        tile_n = _pick_tile_n(N)
    n_tiles = N // tile_n

    for_adj = jnp.stack(adj_list)            # (T, N, N)
    rev_adj = jnp.stack(adj_list[::-1])
    # Single (2, ...) adjacency (for, rev) - no 4x duplication - cast to bf16
    # (0/1 entries are exact) for halved DMA bytes + the bf16 MXU projection.
    adj2 = jnp.stack([_node_tile(for_adj, n_tiles, tile_n),
                      _node_tile(rev_adj, n_tiles, tile_n)],
                     axis=0).astype(jnp.bfloat16)

    layer_weights = pack_layer_weights(params, enc_dims)
    out = gru_streams_pallas(adj2, layer_weights, enc_dims, T, N, tile_n)
    # (2, n_tiles, T*tile_n, H) -> (2, T, N, H): pure layout plumbing (XLA side).
    dirsum = (out.reshape(2, n_tiles, T, tile_n, H).transpose(0, 2, 1, 3, 4)
                 .reshape(2, T, N, H))

    gt = build_cites_gt(adj_list)            # (T, N, 1)
    emb_tnc, loss = fusion_pallas(dirsum, params["mlp_w1"], params["mlp_w2"],
                                  params["mlp_b"], params["pred_w"],
                                  params["pred_b"], gt, T, N)
    # torch.hstack(RNN_out_list): (T, N, C) -> (N, T*C).
    dyn_emb = jnp.transpose(emb_tnc, (1, 0, 2)).reshape(N, T * C)
    return dyn_emb, loss[0, 0]


def _gru_ref(x, p):
    def step(h, xt):
        r = jax.nn.sigmoid(xt @ p["w_ir"] + p["b_ir"] + h @ p["w_hr"] + p["b_hr"])
        z = jax.nn.sigmoid(xt @ p["w_iz"] + p["b_iz"] + h @ p["w_hz"] + p["b_hz"])
        n = jnp.tanh(xt @ p["w_in"] + p["b_in"] + r * (h @ p["w_hn"] + p["b_hn"]))
        h_new = (1.0 - z) * n + z * h
        return h_new, h_new
    h0 = jnp.zeros((x.shape[1], p["w_hr"].shape[1]), jnp.float32)
    _, ys = jax.lax.scan(step, h0, x)
    return ys


def ddne_enc_forward_ref(adj_list, params, num_layers):
    for_in = jnp.stack(adj_list)
    rev_in = jnp.stack(adj_list[::-1])
    fc_in, rc_in = for_in, rev_in
    for l in range(num_layers):
        for_in = _gru_ref(for_in, params["for_rnn"][l])
        rev_in = _gru_ref(rev_in, params["rev_rnn"][l])
        fc_in = _gru_ref(fc_in, params["for_cites"][l])
        rc_in = _gru_ref(rc_in, params["rev_cites"][l])
    gt = build_cites_gt(adj_list)
    W = jnp.concatenate([params["mlp_w1"], params["mlp_w2"]], axis=0)  # (C, C)
    T = for_in.shape[0]
    emb_list, loss = [], 0.0
    for t in range(T):
        hh_rnn = jnp.concatenate([for_in[t], rev_in[t]], axis=1)
        hh_cites = jnp.concatenate([fc_in[t], rc_in[t]], axis=1)
        rnn_out = (hh_rnn + hh_cites) @ W + params["mlp_b"]
        cites_out = (hh_cites + hh_rnn) @ W + params["mlp_b"]
        emb_list.append(rnn_out)
        pred = jnp.sum(cites_out * params["pred_w"], axis=1, keepdims=True) + params["pred_b"]
        loss = loss + jnp.mean(jnp.sum(jnp.square(pred - gt[t]), axis=1))
    return jnp.concatenate(emb_list, axis=1), loss / T


if __name__ == "__main__":
    # Small shapes: N=16 nodes, win_size T=4, enc_dims=[16, 32, 32].
    N, T = 16, 4
    enc_dims = [N, 32, 32]
    num_layers = len(enc_dims) - 1

    key = jax.random.PRNGKey(0)
    k_adj, k_par = jax.random.split(key)
    adj_keys = jax.random.split(k_adj, T)
    adj_list = [jax.random.bernoulli(adj_keys[t], 0.2, (N, N)).astype(jnp.float32)
                for t in range(T)]

    params = init_params(k_par, enc_dims)
    params = round_layer0_input_weights_to_bf16(params)

    dyn_emb, node_loss = ddne_enc_forward_pallas(adj_list, params, enc_dims)
    dyn_emb = jax.block_until_ready(dyn_emb)
    node_loss = jax.block_until_ready(node_loss)

    # Verify against pure-JAX reference.
    emb_ref, loss_ref = ddne_enc_forward_ref(adj_list, params, num_layers)
    assert dyn_emb.shape == (N, T * 2 * enc_dims[-1])
    np.testing.assert_allclose(np.asarray(dyn_emb), np.asarray(emb_ref),
                               rtol=1e-3, atol=1e-4)
    np.testing.assert_allclose(float(node_loss), float(loss_ref),
                               rtol=1e-3, atol=1e-4)

    print("KERNEL_OK")
</pallas_src>

<mosaic_0001>
module attributes {stable_mosaic.version = 11 : i64} {
  func.func @kernel(%arg0: i32, %arg1: i32, %arg2: memref<1x1x64x16xbf16, #tpu.memory_space<vmem>>, %arg3: memref<1x16x192xbf16, #tpu.memory_space<vmem>>, %arg4: memref<1x32x192xf32, #tpu.memory_space<vmem>>, %arg5: memref<1x1x192xf32, #tpu.memory_space<vmem>>, %arg6: memref<1x1x64xf32, #tpu.memory_space<vmem>>, %arg7: memref<1x32x192xf32, #tpu.memory_space<vmem>>, %arg8: memref<1x32x192xf32, #tpu.memory_space<vmem>>, %arg9: memref<1x1x192xf32, #tpu.memory_space<vmem>>, %arg10: memref<1x1x64xf32, #tpu.memory_space<vmem>>, %arg11: memref<1x1x64x32xf32, #tpu.memory_space<vmem>>, %arg12: memref<64x32xf32, #tpu.memory_space<vmem>>, %arg13: memref<64x32xf32, #tpu.memory_space<vmem>>) attributes {dimension_semantics = [#tpu.dimension_semantics<parallel>, #tpu.dimension_semantics<parallel>], iteration_bounds = array<i64: 2, 1>, scalar_prefetch = 0 : i64, scratch_operands = 2 : i64, tpu.core_type = #tpu.core_type<tc>, window_params = [{transform_indices = @transform_0, window_bounds = array<i64: 1, 1, 64, 16>}, {transform_indices = @transform_1, window_bounds = array<i64: 1, 16, 192>}, {transform_indices = @transform_2, window_bounds = array<i64: 1, 32, 192>}, {transform_indices = @transform_3, window_bounds = array<i64: 1, 1, 192>}, {transform_indices = @transform_4, window_bounds = array<i64: 1, 1, 64>}, {transform_indices = @transform_5, window_bounds = array<i64: 1, 32, 192>}, {transform_indices = @transform_6, window_bounds = array<i64: 1, 32, 192>}, {transform_indices = @transform_7, window_bounds = array<i64: 1, 1, 192>}, {transform_indices = @transform_8, window_bounds = array<i64: 1, 1, 64>}, {transform_indices = @transform_9, window_bounds = array<i64: 1, 1, 64, 32>}]} {
    %c0 = arith.constant 0 : index
    %c0_0 = arith.constant 0 : index
    %c0_1 = arith.constant 0 : index
    %c0_2 = arith.constant 0 : index
    %0 = vector.load %arg2[%c0, %c0_0, %c0_1, %c0_2] : memref<1x1x64x16xbf16, #tpu.memory_space<vmem>>, vector<1x1x64x16xbf16>
    %1 = vector.shape_cast %0 : vector<1x1x64x16xbf16> to vector<64x16xbf16>
    %c0_3 = arith.constant 0 : index
    %c0_4 = arith.constant 0 : index
    %c0_5 = arith.constant 0 : index
    %2 = vector.load %arg3[%c0_3, %c0_4, %c0_5] : memref<1x16x192xbf16, #tpu.memory_space<vmem>>, vector<1x16x192xbf16>
    %3 = vector.shape_cast %2 : vector<1x16x192xbf16> to vector<16x192xbf16>
    %c0_6 = arith.constant 0 : index
    %c0_7 = arith.constant 0 : index
    %c0_8 = arith.constant 0 : index
    %4 = vector.load %arg5[%c0_6, %c0_7, %c0_8] : memref<1x1x192xf32, #tpu.memory_space<vmem>>, vector<1x1x192xf32>
    %5 = vector.shape_cast %4 : vector<1x1x192xf32> to vector<1x192xf32>
    %cst = arith.constant dense<0.000000e+00> : vector<64x192xf32>
    %6 = tpu.matmul %1, %3, %cst {dimension_numbers = #tpu.dot_dimension_numbers<[1], [0], [0], [1], [0, 0, 1, 1], [], []>} : vector<64x16xbf16>, vector<16x192xbf16>, vector<64x192xf32> -> vector<64x192xf32>
    %7 = vector.broadcast %5 : vector<1x192xf32> to vector<64x192xf32>
    %8 = arith.addf %6, %7 : vector<64x192xf32>
    %c0_9 = arith.constant 0 : index
    %c0_10 = arith.constant 0 : index
    %c0_11 = arith.constant 0 : index
    %9 = vector.load %arg4[%c0_9, %c0_10, %c0_11] : memref<1x32x192xf32, #tpu.memory_space<vmem>>, vector<1x32x192xf32>
    %10 = vector.shape_cast %9 : vector<1x32x192xf32> to vector<32x192xf32>
    %c0_12 = arith.constant 0 : index
    %c0_13 = arith.constant 0 : index
    %c0_14 = arith.constant 0 : index
    %11 = vector.load %arg6[%c0_12, %c0_13, %c0_14] : memref<1x1x64xf32, #tpu.memory_space<vmem>>, vector<1x1x64xf32>
    %12 = vector.shape_cast %11 : vector<1x1x64xf32> to vector<1x64xf32>
    %13 = vector.extract_strided_slice %8 {offsets = [0, 0], sizes = [64, 96], strides = [1, 1]} : vector<64x192xf32> to vector<64x96xf32>
    %14 = vector.extract_strided_slice %10 {offsets = [0, 0], sizes = [32, 96], strides = [1, 1]} : vector<32x192xf32> to vector<32x96xf32>
    %15 = vector.extract_strided_slice %12 {offsets = [0, 0], sizes = [1, 32], strides = [1, 1]} : vector<1x64xf32> to vector<1x32xf32>
    %16 = vector.extract_strided_slice %13 {offsets = [0, 0], sizes = [16, 96], strides = [1, 1]} : vector<64x96xf32> to vector<16x96xf32>
    %17 = vector.extract_strided_slice %16 {offsets = [0, 0], sizes = [16, 32], strides = [1, 1]} : vector<16x96xf32> to vector<16x32xf32>
    %18 = arith.negf %17 : vector<16x32xf32>
    %19 = math.exp %18 : vector<16x32xf32>
    %cst_15 = arith.constant 1.000000e+00 : f32
    %20 = vector.broadcast %cst_15 : f32 to vector<16x32xf32>
    %21 = arith.addf %20, %19 : vector<16x32xf32>
    %22 = arith.divf %20, %21 : vector<16x32xf32>
    %23 = vector.extract_strided_slice %16 {offsets = [0, 32], sizes = [16, 32], strides = [1, 1]} : vector<16x96xf32> to vector<16x32xf32>
    %24 = arith.negf %23 : vector<16x32xf32>
    %25 = math.exp %24 : vector<16x32xf32>
    %cst_16 = arith.constant 1.000000e+00 : f32
    %26 = vector.broadcast %cst_16 : f32 to vector<16x32xf32>
    %27 = arith.addf %26, %25 : vector<16x32xf32>
    %28 = arith.divf %26, %27 : vector<16x32xf32>
    %29 = vector.extract_strided_slice %16 {offsets = [0, 64], sizes = [16, 32], strides = [1, 1]} : vector<16x96xf32> to vector<16x32xf32>
    %30 = vector.broadcast %15 : vector<1x32xf32> to vector<16x32xf32>
    %31 = arith.mulf %22, %30 : vector<16x32xf32>
    %32 = arith.addf %29, %31 : vector<16x32xf32>
    %33 = math.tanh %32 : vector<16x32xf32>
    %cst_17 = arith.constant 1.000000e+00 : f32
    %34 = vector.broadcast %cst_17 : f32 to vector<16x32xf32>
    %35 = arith.subf %34, %28 : vector<16x32xf32>
    %36 = arith.mulf %35, %33 : vector<16x32xf32>
    %c0_18 = arith.constant 0 : index
    %c0_19 = arith.constant 0 : index
    %37 = vector.load %arg12[%c0_18, %c0_19] : memref<64x32xf32, #tpu.memory_space<vmem>>, vector<16x32xf32>
    tpu.vector_store %arg12[%c0_18, %c0_19], %36 {strides = array<i32>} : memref<64x32xf32, #tpu.memory_space<vmem>>, vector<16x32xf32>,
    %38 = vector.extract_strided_slice %13 {offsets = [16, 0], sizes = [16, 96], strides = [1, 1]} : vector<64x96xf32> to vector<16x96xf32>
    %cst_20 = arith.constant dense<0.000000e+00> : vector<16x96xf32>
    %39 = tpu.matmul %36, %14, %cst_20 {dimension_numbers = #tpu.dot_dimension_numbers<[1], [0], [0], [1], [0, 0, 1, 1], [], []>} : vector<16x32xf32>, vector<32x96xf32>, vector<16x96xf32> -> vector<16x96xf32>
    %40 = vector.extract_strided_slice %38 {offsets = [0, 0], sizes = [16, 32], strides = [1, 1]} : vector<16x96xf32> to vector<16x32xf32>
    %41 = vector.extract_strided_slice %39 {offsets = [0, 0], sizes = [16, 32], strides = [1, 1]} : vector<16x96xf32> to vector<16x32xf32>
    %42 = arith.addf %40, %41 : vector<16x32xf32>
    %43 = arith.negf %42 : vector<16x32xf32>
    %44 = math.exp %43 : vector<16x32xf32>
    %cst_21 = arith.constant 1.000000e+00 : f32
    %45 = vector.broadcast %cst_21 : f32 to vector<16x32xf32>
    %46 = arith.addf %45, %44 : vector<16x32xf32>
    %47 = arith.divf %45, %46 : vector<16x32xf32>
    %48 = vector.extract_strided_slice %38 {offsets = [0, 32], sizes = [16, 32], strides = [1, 1]} : vector<16x96xf32> to vector<16x32xf32>
    %49 = vector.extract_strided_slice %39 {offsets = [0, 32], sizes = [16, 32], strides = [1, 1]} : vector<16x96xf32> to vector<16x32xf32>
    %50 = arith.addf %48, %49 : vector<16x32xf32>
    %51 = arith.negf %50 : vector<16x32xf32>
    %52 = math.exp %51 : vector<16x32xf32>
    %cst_22 = arith.constant 1.000000e+00 : f32
    %53 = vector.broadcast %cst_22 : f32 to vector<16x32xf32>
    %54 = arith.addf %53, %52 : vector<16x32xf32>
    %55 = arith.divf %53, %54 : vector<16x32xf32>
    %56 = vector.extract_strided_slice %38 {offsets = [0, 64], sizes = [16, 32], strides = [1, 1]} : vector<16x96xf32> to vector<16x32xf32>
    %57 = vector.extract_strided_slice %39 {offsets = [0, 64], sizes = [16, 32], strides = [1, 1]} : vector<16x96xf32> to vector<16x32xf32>
    %58 = vector.broadcast %15 : vector<1x32xf32> to vector<16x32xf32>
    %59 = arith.addf %57, %58 : vector<16x32xf32>
    %60 = arith.mulf %47, %59 : vector<16x32xf32>
    %61 = arith.addf %56, %60 : vector<16x32xf32>
    %62 = math.tanh %61 : vector<16x32xf32>
    %cst_23 = arith.constant 1.000000e+00 : f32
    %63 = vector.broadcast %cst_23 : f32 to vector<16x32xf32>
    %64 = arith.subf %63, %55 : vector<16x32xf32>
    %65 = arith.mulf %64, %62 : vector<16x32xf32>
    %66 = arith.mulf %55, %36 : vector<16x32xf32>
    %67 = arith.addf %65, %66 : vector<16x32xf32>
    %c16 = arith.constant 16 : index
    %c0_24 = arith.constant 0 : index
    %68 = vector.load %arg12[%c16, %c0_24] : memref<64x32xf32, #tpu.memory_space<vmem>>, vector<16x32xf32>
    tpu.vector_store %arg12[%c16, %c0_24], %67 {strides = array<i32>} : memref<64x32xf32, #tpu.memory_space<vmem>>, vector<16x32xf32>,
    %69 = vector.extract_strided_slice %13 {offsets = [32, 0], sizes = [16, 96], strides = [1, 1]} : vector<64x96xf32> to vector<16x96xf32>
    %cst_25 = arith.constant dense<0.000000e+00> : vector<16x96xf32>
    %70 = tpu.matmul %67, %14, %cst_25 {dimension_numbers = #tpu.dot_dimension_numbers<[1], [0], [0], [1], [0, 0, 1, 1], [], []>} : vector<16x32xf32>, vector<32x96xf32>, vector<16x96xf32> -> vector<16x96xf32>
    %71 = vector.extract_strided_slice %69 {offsets = [0, 0], sizes = [16, 32], strides = [1, 1]} : vector<16x96xf32> to vector<16x32xf32>
    %72 = vector.extract_strided_slice %70 {offsets = [0, 0], sizes = [16, 32], strides = [1, 1]} : vector<16x96xf32> to vector<16x32xf32>
    %73 = arith.addf %71, %72 : vector<16x32xf32>
    %74 = arith.negf %73 : vector<16x32xf32>
    %75 = math.exp %74 : vector<16x32xf32>
    %cst_26 = arith.constant 1.000000e+00 : f32
    %76 = vector.broadcast %cst_26 : f32 to vector<16x32xf32>
    %77 = arith.addf %76, %75 : vector<16x32xf32>
    %78 = arith.divf %76, %77 : vector<16x32xf32>
    %79 = vector.extract_strided_slice %69 {offsets = [0, 32], sizes = [16, 32], strides = [1, 1]} : vector<16x96xf32> to vector<16x32xf32>
    %80 = vector.extract_strided_slice %70 {offsets = [0, 32], sizes = [16, 32], strides = [1, 1]} : vector<16x96xf32> to vector<16x32xf32>
    %81 = arith.addf %79, %80 : vector<16x32xf32>
    %82 = arith.negf %81 : vector<16x32xf32>
    %83 = math.exp %82 : vector<16x32xf32>
    %cst_27 = arith.constant 1.000000e+00 : f32
    %84 = vector.broadcast %cst_27 : f32 to vector<16x32xf32>
    %85 = arith.addf %84, %83 : vector<16x32xf32>
    %86 = arith.divf %84, %85 : vector<16x32xf32>
    %87 = vector.extract_strided_slice %69 {offsets = [0, 64], sizes = [16, 32], strides = [1, 1]} : vector<16x96xf32> to vector<16x32xf32>
    %88 = vector.extract_strided_slice %70 {offsets = [0, 64], sizes = [16, 32], strides = [1, 1]} : vector<16x96xf32> to vector<16x32xf32>
    %89 = vector.broadcast %15 : vector<1x32xf32> to vector<16x32xf32>
    %90 = arith.addf %88, %89 : vector<16x32xf32>
    %91 = arith.mulf %78, %90 : vector<16x32xf32>
    %92 = arith.addf %87, %91 : vector<16x32xf32>
    %93 = math.tanh %92 : vector<16x32xf32>
    %cst_28 = arith.constant 1.000000e+00 : f32
    %94 = vector.broadcast %cst_28 : f32 to vector<16x32xf32>
    %95 = arith.subf %94, %86 : vector<16x32xf32>
    %96 = arith.mulf %95, %93 : vector<16x32xf32>
    %97 = arith.mulf %86, %67 : vector<16x32xf32>
    %98 = arith.addf %96, %97 : vector<16x32xf32>
    %c32 = arith.constant 32 : index
    %c0_29 = arith.constant 0 : index
    %99 = vector.load %arg12[%c32, %c0_29] : memref<64x32xf32, #tpu.memory_space<vmem>>, vector<16x32xf32>
    tpu.vector_store %arg12[%c32, %c0_29], %98 {strides = array<i32>} : memref<64x32xf32, #tpu.memory_space<vmem>>, vector<16x32xf32>,
    %100 = vector.extract_strided_slice %13 {offsets = [48, 0], sizes = [16, 96], strides = [1, 1]} : vector<64x96xf32> to vector<16x96xf32>
    %cst_30 = arith.constant dense<0.000000e+00> : vector<16x96xf32>
    %101 = tpu.matmul %98, %14, %cst_30 {dimension_numbers = #tpu.dot_dimension_numbers<[1], [0], [0], [1], [0, 0, 1, 1], [], []>} : vector<16x32xf32>, vector<32x96xf32>, vector<16x96xf32> -> vector<16x96xf32>
    %102 = vector.extract_strided_slice %100 {offsets = [0, 0], sizes = [16, 32], strides = [1, 1]} : vector<16x96xf32> to vector<16x32xf32>
    %103 = vector.extract_strided_slice %101 {offsets = [0, 0], sizes = [16, 32], strides = [1, 1]} : vector<16x96xf32> to vector<16x32xf32>
    %104 = arith.addf %102, %103 : vector<16x32xf32>
    %105 = arith.negf %104 : vector<16x32xf32>
    %106 = math.exp %105 : vector<16x32xf32>
    %cst_31 = arith.constant 1.000000e+00 : f32
    %107 = vector.broadcast %cst_31 : f32 to vector<16x32xf32>
    %108 = arith.addf %107, %106 : vector<16x32xf32>
    %109 = arith.divf %107, %108 : vector<16x32xf32>
    %110 = vector.extract_strided_slice %100 {offsets = [0, 32], sizes = [16, 32], strides = [1, 1]} : vector<16x96xf32> to vector<16x32xf32>
    %111 = vector.extract_strided_slice %101 {offsets = [0, 32], sizes = [16, 32], strides = [1, 1]} : vector<16x96xf32> to vector<16x32xf32>
    %112 = arith.addf %110, %111 : vector<16x32xf32>
    %113 = arith.negf %112 : vector<16x32xf32>
    %114 = math.exp %113 : vector<16x32xf32>
    %cst_32 = arith.constant 1.000000e+00 : f32
    %115 = vector.broadcast %cst_32 : f32 to vector<16x32xf32>
    %116 = arith.addf %115, %114 : vector<16x32xf32>
    %117 = arith.divf %115, %116 : vector<16x32xf32>
    %118 = vector.extract_strided_slice %100 {offsets = [0, 64], sizes = [16, 32], strides = [1, 1]} : vector<16x96xf32> to vector<16x32xf32>
    %119 = vector.extract_strided_slice %101 {offsets = [0, 64], sizes = [16, 32], strides = [1, 1]} : vector<16x96xf32> to vector<16x32xf32>
    %120 = vector.broadcast %15 : vector<1x32xf32> to vector<16x32xf32>
    %121 = arith.addf %119, %120 : vector<16x32xf32>
    %122 = arith.mulf %109, %121 : vector<16x32xf32>
    %123 = arith.addf %118, %122 : vector<16x32xf32>
    %124 = math.tanh %123 : vector<16x32xf32>
    %cst_33 = arith.constant 1.000000e+00 : f32
    %125 = vector.broadcast %cst_33 : f32 to vector<16x32xf32>
    %126 = arith.subf %125, %117 : vector<16x32xf32>
    %127 = arith.mulf %126, %124 : vector<16x32xf32>
    %128 = arith.mulf %117, %98 : vector<16x32xf32>
    %129 = arith.addf %127, %128 : vector<16x32xf32>
    %c48 = arith.constant 48 : index
    %c0_34 = arith.constant 0 : index
    %130 = vector.load %arg12[%c48, %c0_34] : memref<64x32xf32, #tpu.memory_space<vmem>>, vector<16x32xf32>
    tpu.vector_store %arg12[%c48, %c0_34], %129 {strides = array<i32>} : memref<64x32xf32, #tpu.memory_space<vmem>>, vector<16x32xf32>,
    %131 = vector.extract_strided_slice %8 {offsets = [0, 96], sizes = [64, 96], strides = [1, 1]} : vector<64x192xf32> to vector<64x96xf32>
    %132 = vector.extract_strided_slice %10 {offsets = [0, 96], sizes = [32, 96], strides = [1, 1]} : vector<32x192xf32> to vector<32x96xf32>
    %133 = vector.extract_strided_slice %12 {offsets = [0, 32], sizes = [1, 32], strides = [1, 1]} : vector<1x64xf32> to vector<1x32xf32>
    %134 = vector.extract_strided_slice %131 {offsets = [0, 0], sizes = [16, 96], strides = [1, 1]} : vector<64x96xf32> to vector<16x96xf32>
    %135 = vector.extract_strided_slice %134 {offsets = [0, 0], sizes = [16, 32], strides = [1, 1]} : vector<16x96xf32> to vector<16x32xf32>
    %136 = arith.negf %135 : vector<16x32xf32>
    %137 = math.exp %136 : vector<16x32xf32>
    %cst_35 = arith.constant 1.000000e+00 : f32
    %138 = vector.broadcast %cst_35 : f32 to vector<16x32xf32>
    %139 = arith.addf %138, %137 : vector<16x32xf32>
    %140 = arith.divf %138, %139 : vector<16x32xf32>
    %141 = vector.extract_strided_slice %134 {offsets = [0, 32], sizes = [16, 32], strides = [1, 1]} : vector<16x96xf32> to vector<16x32xf32>
    %142 = arith.negf %141 : vector<16x32xf32>
    %143 = math.exp %142 : vector<16x32xf32>
    %cst_36 = arith.constant 1.000000e+00 : f32
    %144 = vector.broadcast %cst_36 : f32 to vector<16x32xf32>
    %145 = arith.addf %144, %143 : vector<16x32xf32>
    %146 = arith.divf %144, %145 : vector<16x32xf32>
    %147 = vector.extract_strided_slice %134 {offsets = [0, 64], sizes = [16, 32], strides = [1, 1]} : vector<16x96xf32> to vector<16x32xf32>
    %148 = vector.broadcast %133 : vector<1x32xf32> to vector<16x32xf32>
    %149 = arith.mulf %140, %148 : vector<16x32xf32>
    %150 = arith.addf %147, %149 : vector<16x32xf32>
    %151 = math.tanh %150 : vector<16x32xf32>
    %cst_37 = arith.constant 1.000000e+00 : f32
    %152 = vector.broadcast %cst_37 : f32 to vector<16x32xf32>
    %153 = arith.subf %152, %146 : vector<16x32xf32>
    %154 = arith.mulf %153, %151 : vector<16x32xf32>
    %c0_38 = arith.constant 0 : index
    %c0_39 = arith.constant 0 : index
    %155 = vector.load %arg13[%c0_38, %c0_39] : memref<64x32xf32, #tpu.memory_space<vmem>>, vector<16x32xf32>
    tpu.vector_store %arg13[%c0_38, %c0_39], %154 {strides = array<i32>} : memref<64x32xf32, #tpu.memory_space<vmem>>, vector<16x32xf32>,
    %156 = vector.extract_strided_slice %131 {offsets = [16, 0], sizes = [16, 96], strides = [1, 1]} : vector<64x96xf32> to vector<16x96xf32>
    %cst_40 = arith.constant dense<0.000000e+00> : vector<16x96xf32>
    %157 = tpu.matmul %154, %132, %cst_40 {dimension_numbers = #tpu.dot_dimension_numbers<[1], [0], [0], [1], [0, 0, 1, 1], [], []>} : vector<16x32xf32>, vector<32x96xf32>, vector<16x96xf32> -> vector<16x96xf32>
    %158 = vector.extract_strided_slice %156 {offsets = [0, 0], sizes = [16, 32], strides = [1, 1]} : vector<16x96xf32> to vector<16x32xf32>
    %159 = vector.extract_strided_slice %157 {offsets = [0, 0], sizes = [16, 32], strides = [1, 1]} : vector<16x96xf32> to vector<16x32xf32>
    %160 = arith.addf %158, %159 : vector<16x32xf32>
    %161 = arith.negf %160 : vector<16x32xf32>
    %162 = math.exp %161 : vector<16x32xf32>
    %cst_41 = arith.constant 1.000000e+00 : f32
    %163 = vector.broadcast %cst_41 : f32 to vector<16x32xf32>
    %164 = arith.addf %163, %162 : vector<16x32xf32>
    %165 = arith.divf %163, %164 : vector<16x32xf32>
    %166 = vector.extract_strided_slice %156 {offsets = [0, 32], sizes = [16, 32], strides = [1, 1]} : vector<16x96xf32> to vector<16x32xf32>
    %167 = vector.extract_strided_slice %157 {offsets = [0, 32], sizes = [16, 32], strides = [1, 1]} : vector<16x96xf32> to vector<16x32xf32>
    %168 = arith.addf %166, %167 : vector<16x32xf32>
    %169 = arith.negf %168 : vector<16x32xf32>
    %170 = math.exp %169 : vector<16x32xf32>
    %cst_42 = arith.constant 1.000000e+00 : f32
    %171 = vector.broadcast %cst_42 : f32 to vector<16x32xf32>
    %172 = arith.addf %171, %170 : vector<16x32xf32>
    %173 = arith.divf %171, %172 : vector<16x32xf32>
    %174 = vector.extract_strided_slice %156 {offsets = [0, 64], sizes = [16, 32], strides = [1, 1]} : vector<16x96xf32> to vector<16x32xf32>
    %175 = vector.extract_strided_slice %157 {offsets = [0, 64], sizes = [16, 32], strides = [1, 1]} : vector<16x96xf32> to vector<16x32xf32>
    %176 = vector.broadcast %133 : vector<1x32xf32> to vector<16x32xf32>
    %177 = arith.addf %175, %176 : vector<16x32xf32>
    %178 = arith.mulf %165, %177 : vector<16x32xf32>
    %179 = arith.addf %174, %178 : vector<16x32xf32>
    %180 = math.tanh %179 : vector<16x32xf32>
    %cst_43 = arith.constant 1.000000e+00 : f32
    %181 = vector.broadcast %cst_43 : f32 to vector<16x32xf32>
    %182 = arith.subf %181, %173 : vector<16x32xf32>
    %183 = arith.mulf %182, %180 : vector<16x32xf32>
    %184 = arith.mulf %173, %154 : vector<16x32xf32>
    %185 = arith.addf %183, %184 : vector<16x32xf32>
    %c16_44 = arith.constant 16 : index
    %c0_45 = arith.constant 0 : index
    %186 = vector.load %arg13[%c16_44, %c0_45] : memref<64x32xf32, #tpu.memory_space<vmem>>, vector<16x32xf32>
    tpu.vector_store %arg13[%c16_44, %c0_45], %185 {strides = array<i32>} : memref<64x32xf32, #tpu.memory_space<vmem>>, vector<16x32xf32>,
    %187 = vector.extract_strided_slice %131 {offsets = [32, 0], sizes = [16, 96], strides = [1, 1]} : vector<64x96xf32> to vector<16x96xf32>
    %cst_46 = arith.constant dense<0.000000e+00> : vector<16x96xf32>
    %188 = tpu.matmul %185, %132, %cst_46 {dimension_numbers = #tpu.dot_dimension_numbers<[1], [0], [0], [1], [0, 0, 1, 1], [], []>} : vector<16x32xf32>, vector<32x96xf32>, vector<16x96xf32> -> vector<16x96xf32>
    %189 = vector.extract_strided_slice %187 {offsets = [0, 0], sizes = [16, 32], strides = [1, 1]} : vector<16x96xf32> to vector<16x32xf32>
    %190 = vector.extract_strided_slice %188 {offsets = [0, 0], sizes = [16, 32], strides = [1, 1]} : vector<16x96xf32> to vector<16x32xf32>
    %191 = arith.addf %189, %190 : vector<16x32xf32>
    %192 = arith.negf %191 : vector<16x32xf32>
    %193 = math.exp %192 : vector<16x32xf32>
    %cst_47 = arith.constant 1.000000e+00 : f32
    %194 = vector.broadcast %cst_47 : f32 to vector<16x32xf32>
    %195 = arith.addf %194, %193 : vector<16x32xf32>
    %196 = arith.divf %194, %195 : vector<16x32xf32>
    %197 = vector.extract_strided_slice %187 {offsets = [0, 32], sizes = [16, 32], strides = [1, 1]} : vector<16x96xf32> to vector<16x32xf32>
    %198 = vector.extract_strided_slice %188 {offsets = [0, 32], sizes = [16, 32], strides = [1, 1]} : vector<16x96xf32> to vector<16x32xf32>
    %199 = arith.addf %197, %198 : vector<16x32xf32>
    %200 = arith.negf %199 : vector<16x32xf32>
    %201 = math.exp %200 : vector<16x32xf32>
    %cst_48 = arith.constant 1.000000e+00 : f32
    %202 = vector.broadcast %cst_48 : f32 to vector<16x32xf32>
    %203 = arith.addf %202, %201 : vector<16x32xf32>
    %204 = arith.divf %202, %203 : vector<16x32xf32>
    %205 = vector.extract_strided_slice %187 {offsets = [0, 64], sizes = [16, 32], strides = [1, 1]} : vector<16x96xf32> to vector<16x32xf32>
    %206 = vector.extract_strided_slice %188 {offsets = [0, 64], sizes = [16, 32], strides = [1, 1]} : vector<16x96xf32> to vector<16x32xf32>
    %207 = vector.broadcast %133 : vector<1x32xf32> to vector<16x32xf32>
    %208 = arith.addf %206, %207 : vector<16x32xf32>
    %209 = arith.mulf %196, %208 : vector<16x32xf32>
    %210 = arith.addf %205, %209 : vector<16x32xf32>
    %211 = math.tanh %210 : vector<16x32xf32>
    %cst_49 = arith.constant 1.000000e+00 : f32
    %212 = vector.broadcast %cst_49 : f32 to vector<16x32xf32>
    %213 = arith.subf %212, %204 : vector<16x32xf32>
    %214 = arith.mulf %213, %211 : vector<16x32xf32>
    %215 = arith.mulf %204, %185 : vector<16x32xf32>
    %216 = arith.addf %214, %215 : vector<16x32xf32>
    %c32_50 = arith.constant 32 : index
    %c0_51 = arith.constant 0 : index
    %217 = vector.load %arg13[%c32_50, %c0_51] : memref<64x32xf32, #tpu.memory_space<vmem>>, vector<16x32xf32>
    tpu.vector_store %arg13[%c32_50, %c0_51], %216 {strides = array<i32>} : memref<64x32xf32, #tpu.memory_space<vmem>>, vector<16x32xf32>,
    %218 = vector.extract_strided_slice %131 {offsets = [48, 0], sizes = [16, 96], strides = [1, 1]} : vector<64x96xf32> to vector<16x96xf32>
    %cst_52 = arith.constant dense<0.000000e+00> : vector<16x96xf32>
    %219 = tpu.matmul %216, %132, %cst_52 {dimension_numbers = #tpu.dot_dimension_numbers<[1], [0], [0], [1], [0, 0, 1, 1], [], []>} : vector<16x32xf32>, vector<32x96xf32>, vector<16x96xf32> -> vector<16x96xf32>
    %220 = vector.extract_strided_slice %218 {offsets = [0, 0], sizes = [16, 32], strides = [1, 1]} : vector<16x96xf32> to vector<16x32xf32>
    %221 = vector.extract_strided_slice %219 {offsets = [0, 0], sizes = [16, 32], strides = [1, 1]} : vector<16x96xf32> to vector<16x32xf32>
    %222 = arith.addf %220, %221 : vector<16x32xf32>
    %223 = arith.negf %222 : vector<16x32xf32>
    %224 = math.exp %223 : vector<16x32xf32>
    %cst_53 = arith.constant 1.000000e+00 : f32
    %225 = vector.broadcast %cst_53 : f32 to vector<16x32xf32>
    %226 = arith.addf %225, %224 : vector<16x32xf32>
    %227 = arith.divf %225, %226 : vector<16x32xf32>
    %228 = vector.extract_strided_slice %218 {offsets = [0, 32], sizes = [16, 32], strides = [1, 1]} : vector<16x96xf32> to vector<16x32xf32>
    %229 = vector.extract_strided_slice %219 {offsets = [0, 32], sizes = [16, 32], strides = [1, 1]} : vector<16x96xf32> to vector<16x32xf32>
    %230 = arith.addf %228, %229 : vector<16x32xf32>
    %231 = arith.negf %230 : vector<16x32xf32>
    %232 = math.exp %231 : vector<16x32xf32>
    %cst_54 = arith.constant 1.000000e+00 : f32
    %233 = vector.broadcast %cst_54 : f32 to vector<16x32xf32>
    %234 = arith.addf %233, %232 : vector<16x32xf32>
    %235 = arith.divf %233, %234 : vector<16x32xf32>
    %236 = vector.extract_strided_slice %218 {offsets = [0, 64], sizes = [16, 32], strides = [1, 1]} : vector<16x96xf32> to vector<16x32xf32>
    %237 = vector.extract_strided_slice %219 {offsets = [0, 64], sizes = [16, 32], strides = [1, 1]} : vector<16x96xf32> to vector<16x32xf32>
    %238 = vector.broadcast %133 : vector<1x32xf32> to vector<16x32xf32>
    %239 = arith.addf %237, %238 : vector<16x32xf32>
    %240 = arith.mulf %227, %239 : vector<16x32xf32>
    %241 = arith.addf %236, %240 : vector<16x32xf32>
    %242 = math.tanh %241 : vector<16x32xf32>
    %cst_55 = arith.constant 1.000000e+00 : f32
    %243 = vector.broadcast %cst_55 : f32 to vector<16x32xf32>
    %244 = arith.subf %243, %235 : vector<16x32xf32>
    %245 = arith.mulf %244, %242 : vector<16x32xf32>
    %246 = arith.mulf %235, %216 : vector<16x32xf32>
    %247 = arith.addf %245, %246 : vector<16x32xf32>
    %c48_56 = arith.constant 48 : index
    %c0_57 = arith.constant 0 : index
    %248 = vector.load %arg13[%c48_56, %c0_57] : memref<64x32xf32, #tpu.memory_space<vmem>>, vector<16x32xf32>
    tpu.vector_store %arg13[%c48_56, %c0_57], %247 {strides = array<i32>} : memref<64x32xf32, #tpu.memory_space<vmem>>, vector<16x32xf32>,
    %c0_58 = arith.constant 0 : index
    %c0_59 = arith.constant 0 : index
    %c0_60 = arith.constant 0 : index
    %249 = vector.load %arg8[%c0_58, %c0_59, %c0_60] : memref<1x32x192xf32, #tpu.memory_space<vmem>>, vector<1x32x192xf32>
    %250 = vector.shape_cast %249 : vector<1x32x192xf32> to vector<32x192xf32>
    %c0_61 = arith.constant 0 : index
    %c0_62 = arith.constant 0 : index
    %c0_63 = arith.constant 0 : index
    %251 = vector.load %arg10[%c0_61, %c0_62, %c0_63] : memref<1x1x64xf32, #tpu.memory_space<vmem>>, vector<1x1x64xf32>
    %252 = vector.shape_cast %251 : vector<1x1x64xf32> to vector<1x64xf32>
    %c0_64 = arith.constant 0 : index
    %c0_65 = arith.constant 0 : index
    %c0_66 = arith.constant 0 : index
    %253 = vector.load %arg7[%c0_64, %c0_65, %c0_66] : memref<1x32x192xf32, #tpu.memory_space<vmem>>, vector<1x32x192xf32>
    %254 = vector.shape_cast %253 : vector<1x32x192xf32> to vector<32x192xf32>
    %c0_67 = arith.constant 0 : index
    %c0_68 = arith.constant 0 : index
    %c0_69 = arith.constant 0 : index
    %255 = vector.load %arg9[%c0_67, %c0_68, %c0_69] : memref<1x1x192xf32, #tpu.memory_space<vmem>>, vector<1x1x192xf32>
    %256 = vector.shape_cast %255 : vector<1x1x192xf32> to vector<1x192xf32>
    %c0_70 = arith.constant 0 : index
    %c0_71 = arith.constant 0 : index
    %257 = vector.load %arg12[%c0_70, %c0_71] : memref<64x32xf32, #tpu.memory_space<vmem>>, vector<64x32xf32>
    %258 = vector.extract_strided_slice %254 {offsets = [0, 0], sizes = [32, 96], strides = [1, 1]} : vector<32x192xf32> to vector<32x96xf32>
    %cst_72 = arith.constant dense<0.000000e+00> : vector<64x96xf32>
    %259 = tpu.matmul %257, %258, %cst_72 {dimension_numbers = #tpu.dot_dimension_numbers<[1], [0], [0], [1], [0, 0, 1, 1], [], []>} : vector<64x32xf32>, vector<32x96xf32>, vector<64x96xf32> -> vector<64x96xf32>
    %260 = vector.extract_strided_slice %256 {offsets = [0, 0], sizes = [1, 96], strides = [1, 1]} : vector<1x192xf32> to vector<1x96xf32>
    %261 = vector.broadcast %260 : vector<1x96xf32> to vector<64x96xf32>
    %262 = arith.addf %259, %261 : vector<64x96xf32>
    %263 = vector.extract_strided_slice %250 {offsets = [0, 0], sizes = [32, 96], strides = [1, 1]} : vector<32x192xf32> to vector<32x96xf32>
    %264 = vector.extract_strided_slice %252 {offsets = [0, 0], sizes = [1, 32], strides = [1, 1]} : vector<1x64xf32> to vector<1x32xf32>
    %265 = vector.extract_strided_slice %262 {offsets = [0, 0], sizes = [16, 96], strides = [1, 1]} : vector<64x96xf32> to vector<16x96xf32>
    %266 = vector.extract_strided_slice %265 {offsets = [0, 0], sizes = [16, 32], strides = [1, 1]} : vector<16x96xf32> to vector<16x32xf32>
    %267 = arith.negf %266 : vector<16x32xf32>
    %268 = math.exp %267 : vector<16x32xf32>
    %cst_73 = arith.constant 1.000000e+00 : f32
    %269 = vector.broadcast %cst_73 : f32 to vector<16x32xf32>
    %270 = arith.addf %269, %268 : vector<16x32xf32>
    %271 = arith.divf %269, %270 : vector<16x32xf32>
    %272 = vector.extract_strided_slice %265 {offsets = [0, 32], sizes = [16, 32], strides = [1, 1]} : vector<16x96xf32> to vector<16x32xf32>
    %273 = arith.negf %272 : vector<16x32xf32>
    %274 = math.exp %273 : vector<16x32xf32>
    %cst_74 = arith.constant 1.000000e+00 : f32
    %275 = vector.broadcast %cst_74 : f32 to vector<16x32xf32>
    %276 = arith.addf %275, %274 : vector<16x32xf32>
    %277 = arith.divf %275, %276 : vector<16x32xf32>
    %278 = vector.extract_strided_slice %265 {offsets = [0, 64], sizes = [16, 32], strides = [1, 1]} : vector<16x96xf32> to vector<16x32xf32>
    %279 = vector.broadcast %264 : vector<1x32xf32> to vector<16x32xf32>
    %280 = arith.mulf %271, %279 : vector<16x32xf32>
    %281 = arith.addf %278, %280 : vector<16x32xf32>
    %282 = math.tanh %281 : vector<16x32xf32>
    %cst_75 = arith.constant 1.000000e+00 : f32
    %283 = vector.broadcast %cst_75 : f32 to vector<16x32xf32>
    %284 = arith.subf %283, %277 : vector<16x32xf32>
    %285 = arith.mulf %284, %282 : vector<16x32xf32>
    %c0_76 = arith.constant 0 : index
    %c0_77 = arith.constant 0 : index
    %286 = vector.load %arg12[%c0_76, %c0_77] : memref<64x32xf32, #tpu.memory_space<vmem>>, vector<16x32xf32>
    tpu.vector_store %arg12[%c0_76, %c0_77], %285 {strides = array<i32>} : memref<64x32xf32, #tpu.memory_space<vmem>>, vector<16x32xf32>,
    %287 = vector.extract_strided_slice %262 {offsets = [16, 0], sizes = [16, 96], strides = [1, 1]} : vector<64x96xf32> to vector<16x96xf32>
    %cst_78 = arith.constant dense<0.000000e+00> : vector<16x96xf32>
    %288 = tpu.matmul %285, %263, %cst_78 {dimension_numbers = #tpu.dot_dimension_numbers<[1], [0], [0], [1], [0, 0, 1, 1], [], []>} : vector<16x32xf32>, vector<32x96xf32>, vector<16x96xf32> -> vector<16x96xf32>
    %289 = vector.extract_strided_slice %287 {offsets = [0, 0], sizes = [16, 32], strides = [1, 1]} : vector<16x96xf32> to vector<16x32xf32>
    %290 = vector.extract_strided_slice %288 {offsets = [0, 0], sizes = [16, 32], strides = [1, 1]} : vector<16x96xf32> to vector<16x32xf32>
    %291 = arith.addf %289, %290 : vector<16x32xf32>
    %292 = arith.negf %291 : vector<16x32xf32>
    %293 = math.exp %292 : vector<16x32xf32>
    %cst_79 = arith.constant 1.000000e+00 : f32
    %294 = vector.broadcast %cst_79 : f32 to vector<16x32xf32>
    %295 = arith.addf %294, %293 : vector<16x32xf32>
    %296 = arith.divf %294, %295 : vector<16x32xf32>
    %297 = vector.extract_strided_slice %287 {offsets = [0, 32], sizes = [16, 32], strides = [1, 1]} : vector<16x96xf32> to vector<16x32xf32>
    %298 = vector.extract_strided_slice %288 {offsets = [0, 32], sizes = [16, 32], strides = [1, 1]} : vector<16x96xf32> to vector<16x32xf32>
    %299 = arith.addf %297, %298 : vector<16x32xf32>
    %300 = arith.negf %299 : vector<16x32xf32>
    %301 = math.exp %300 : vector<16x32xf32>
    %cst_80 = arith.constant 1.000000e+00 : f32
    %302 = vector.broadcast %cst_80 : f32 to vector<16x32xf32>
    %303 = arith.addf %302, %301 : vector<16x32xf32>
    %304 = arith.divf %302, %303 : vector<16x32xf32>
    %305 = vector.extract_strided_slice %287 {offsets = [0, 64], sizes = [16, 32], strides = [1, 1]} : vector<16x96xf32> to vector<16x32xf32>
    %306 = vector.extract_strided_slice %288 {offsets = [0, 64], sizes = [16, 32], strides = [1, 1]} : vector<16x96xf32> to vector<16x32xf32>
    %307 = vector.broadcast %264 : vector<1x32xf32> to vector<16x32xf32>
    %308 = arith.addf %306, %307 : vector<16x32xf32>
    %309 = arith.mulf %296, %308 : vector<16x32xf32>
    %310 = arith.addf %305, %309 : vector<16x32xf32>
    %311 = math.tanh %310 : vector<16x32xf32>
    %cst_81 = arith.constant 1.000000e+00 : f32
    %312 = vector.broadcast %cst_81 : f32 to vector<16x32xf32>
    %313 = arith.subf %312, %304 : vector<16x32xf32>
    %314 = arith.mulf %313, %311 : vector<16x32xf32>
    %315 = arith.mulf %304, %285 : vector<16x32xf32>
    %316 = arith.addf %314, %315 : vector<16x32xf32>
    %c16_82 = arith.constant 16 : index
    %c0_83 = arith.constant 0 : index
    %317 = vector.load %arg12[%c16_82, %c0_83] : memref<64x32xf32, #tpu.memory_space<vmem>>, vector<16x32xf32>
    tpu.vector_store %arg12[%c16_82, %c0_83], %316 {strides = array<i32>} : memref<64x32xf32, #tpu.memory_space<vmem>>, vector<16x32xf32>,
    %318 = vector.extract_strided_slice %262 {offsets = [32, 0], sizes = [16, 96], strides = [1, 1]} : vector<64x96xf32> to vector<16x96xf32>
    %cst_84 = arith.constant dense<0.000000e+00> : vector<16x96xf32>
    %319 = tpu.matmul %316, %263, %cst_84 {dimension_numbers = #tpu.dot_dimension_numbers<[1], [0], [0], [1], [0, 0, 1, 1], [], []>} : vector<16x32xf32>, vector<32x96xf32>, vector<16x96xf32> -> vector<16x96xf32>
    %320 = vector.extract_strided_slice %318 {offsets = [0, 0], sizes = [16, 32], strides = [1, 1]} : vector<16x96xf32> to vector<16x32xf32>
    %321 = vector.extract_strided_slice %319 {offsets = [0, 0], sizes = [16, 32], strides = [1, 1]} : vector<16x96xf32> to vector<16x32xf32>
    %322 = arith.addf %320, %321 : vector<16x32xf32>
    %323 = arith.negf %322 : vector<16x32xf32>
    %324 = math.exp %323 : vector<16x32xf32>
    %cst_85 = arith.constant 1.000000e+00 : f32
    %325 = vector.broadcast %cst_85 : f32 to vector<16x32xf32>
    %326 = arith.addf %325, %324 : vector<16x32xf32>
    %327 = arith.divf %325, %326 : vector<16x32xf32>
    %328 = vector.extract_strided_slice %318 {offsets = [0, 32], sizes = [16, 32], strides = [1, 1]} : vector<16x96xf32> to vector<16x32xf32>
    %329 = vector.extract_strided_slice %319 {offsets = [0, 32], sizes = [16, 32], strides = [1, 1]} : vector<16x96xf32> to vector<16x32xf32>
    %330 = arith.addf %328, %329 : vector<16x32xf32>
    %331 = arith.negf %330 : vector<16x32xf32>
    %332 = math.exp %331 : vector<16x32xf32>
    %cst_86 = arith.constant 1.000000e+00 : f32
    %333 = vector.broadcast %cst_86 : f32 to vector<16x32xf32>
    %334 = arith.addf %333, %332 : vector<16x32xf32>
    %335 = arith.divf %333, %334 : vector<16x32xf32>
    %336 = vector.extract_strided_slice %318 {offsets = [0, 64], sizes = [16, 32], strides = [1, 1]} : vector<16x96xf32> to vector<16x32xf32>
    %337 = vector.extract_strided_slice %319 {offsets = [0, 64], sizes = [16, 32], strides = [1, 1]} : vector<16x96xf32> to vector<16x32xf32>
    %338 = vector.broadcast %264 : vector<1x32xf32> to vector<16x32xf32>
    %339 = arith.addf %337, %338 : vector<16x32xf32>
    %340 = arith.mulf %327, %339 : vector<16x32xf32>
    %341 = arith.addf %336, %340 : vector<16x32xf32>
    %342 = math.tanh %341 : vector<16x32xf32>
    %cst_87 = arith.constant 1.000000e+00 : f32
    %343 = vector.broadcast %cst_87 : f32 to vector<16x32xf32>
    %344 = arith.subf %343, %335 : vector<16x32xf32>
    %345 = arith.mulf %344, %342 : vector<16x32xf32>
    %346 = arith.mulf %335, %316 : vector<16x32xf32>
    %347 = arith.addf %345, %346 : vector<16x32xf32>
    %c32_88 = arith.constant 32 : index
    %c0_89 = arith.constant 0 : index
    %348 = vector.load %arg12[%c32_88, %c0_89] : memref<64x32xf32, #tpu.memory_space<vmem>>, vector<16x32xf32>
    tpu.vector_store %arg12[%c32_88, %c0_89], %347 {strides = array<i32>} : memref<64x32xf32, #tpu.memory_space<vmem>>, vector<16x32xf32>,
    %349 = vector.extract_strided_slice %262 {offsets = [48, 0], sizes = [16, 96], strides = [1, 1]} : vector<64x96xf32> to vector<16x96xf32>
    %cst_90 = arith.constant dense<0.000000e+00> : vector<16x96xf32>
    %350 = tpu.matmul %347, %263, %cst_90 {dimension_numbers = #tpu.dot_dimension_numbers<[1], [0], [0], [1], [0, 0, 1, 1], [], []>} : vector<16x32xf32>, vector<32x96xf32>, vector<16x96xf32> -> vector<16x96xf32>
    %351 = vector.extract_strided_slice %349 {offsets = [0, 0], sizes = [16, 32], strides = [1, 1]} : vector<16x96xf32> to vector<16x32xf32>
    %352 = vector.extract_strided_slice %350 {offsets = [0, 0], sizes = [16, 32], strides = [1, 1]} : vector<16x96xf32> to vector<16x32xf32>
    %353 = arith.addf %351, %352 : vector<16x32xf32>
    %354 = arith.negf %353 : vector<16x32xf32>
    %355 = math.exp %354 : vector<16x32xf32>
    %cst_91 = arith.constant 1.000000e+00 : f32
    %356 = vector.broadcast %cst_91 : f32 to vector<16x32xf32>
    %357 = arith.addf %356, %355 : vector<16x32xf32>
    %358 = arith.divf %356, %357 : vector<16x32xf32>
    %359 = vector.extract_strided_slice %349 {offsets = [0, 32], sizes = [16, 32], strides = [1, 1]} : vector<16x96xf32> to vector<16x32xf32>
    %360 = vector.extract_strided_slice %350 {offsets = [0, 32], sizes = [16, 32], strides = [1, 1]} : vector<16x96xf32> to vector<16x32xf32>
    %361 = arith.addf %359, %360 : vector<16x32xf32>
    %362 = arith.negf %361 : vector<16x32xf32>
    %363 = math.exp %362 : vector<16x32xf32>
    %cst_92 = arith.constant 1.000000e+00 : f32
    %364 = vector.broadcast %cst_92 : f32 to vector<16x32xf32>
    %365 = arith.addf %364, %363 : vector<16x32xf32>
    %366 = arith.divf %364, %365 : vector<16x32xf32>
    %367 = vector.extract_strided_slice %349 {offsets = [0, 64], sizes = [16, 32], strides = [1, 1]} : vector<16x96xf32> to vector<16x32xf32>
    %368 = vector.extract_strided_slice %350 {offsets = [0, 64], sizes = [16, 32], strides = [1, 1]} : vector<16x96xf32> to vector<16x32xf32>
    %369 = vector.broadcast %264 : vector<1x32xf32> to vector<16x32xf32>
    %370 = arith.addf %368, %369 : vector<16x32xf32>
    %371 = arith.mulf %358, %370 : vector<16x32xf32>
    %372 = arith.addf %367, %371 : vector<16x32xf32>
    %373 = math.tanh %372 : vector<16x32xf32>
    %cst_93 = arith.constant 1.000000e+00 : f32
    %374 = vector.broadcast %cst_93 : f32 to vector<16x32xf32>
    %375 = arith.subf %374, %366 : vector<16x32xf32>
    %376 = arith.mulf %375, %373 : vector<16x32xf32>
    %377 = arith.mulf %366, %347 : vector<16x32xf32>
    %378 = arith.addf %376, %377 : vector<16x32xf32>
    %c48_94 = arith.constant 48 : index
    %c0_95 = arith.constant 0 : index
    %379 = vector.load %arg12[%c48_94, %c0_95] : memref<64x32xf32, #tpu.memory_space<vmem>>, vector<16x32xf32>
    tpu.vector_store %arg12[%c48_94, %c0_95], %378 {strides = array<i32>} : memref<64x32xf32, #tpu.memory_space<vmem>>, vector<16x32xf32>,
    %c0_96 = arith.constant 0 : index
    %c0_97 = arith.constant 0 : index
    %380 = vector.load %arg13[%c0_96, %c0_97] : memref<64x32xf32, #tpu.memory_space<vmem>>, vector<64x32xf32>
    %381 = vector.extract_strided_slice %254 {offsets = [0, 96], sizes = [32, 96], strides = [1, 1]} : vector<32x192xf32> to vector<32x96xf32>
    %cst_98 = arith.constant dense<0.000000e+00> : vector<64x96xf32>
    %382 = tpu.matmul %380, %381, %cst_98 {dimension_numbers = #tpu.dot_dimension_numbers<[1], [0], [0], [1], [0, 0, 1, 1], [], []>} : vector<64x32xf32>, vector<32x96xf32>, vector<64x96xf32> -> vector<64x96xf32>
    %383 = vector.extract_strided_slice %256 {offsets = [0, 96], sizes = [1, 96], strides = [1, 1]} : vector<1x192xf32> to vector<1x96xf32>
    %384 = vector.broadcast %383 : vector<1x96xf32> to vector<64x96xf32>
    %385 = arith.addf %382, %384 : vector<64x96xf32>
    %386 = vector.extract_strided_slice %250 {offsets = [0, 96], sizes = [32, 96], strides = [1, 1]} : vector<32x192xf32> to vector<32x96xf32>
    %387 = vector.extract_strided_slice %252 {offsets = [0, 32], sizes = [1, 32], strides = [1, 1]} : vector<1x64xf32> to vector<1x32xf32>
    %388 = vector.extract_strided_slice %385 {offsets = [0, 0], sizes = [16, 96], strides = [1, 1]} : vector<64x96xf32> to vector<16x96xf32>
    %389 = vector.extract_strided_slice %388 {offsets = [0, 0], sizes = [16, 32], strides = [1, 1]} : vector<16x96xf32> to vector<16x32xf32>
    %390 = arith.negf %389 : vector<16x32xf32>
    %391 = math.exp %390 : vector<16x32xf32>
    %cst_99 = arith.constant 1.000000e+00 : f32
    %392 = vector.broadcast %cst_99 : f32 to vector<16x32xf32>
    %393 = arith.addf %392, %391 : vector<16x32xf32>
    %394 = arith.divf %392, %393 : vector<16x32xf32>
    %395 = vector.extract_strided_slice %388 {offsets = [0, 32], sizes = [16, 32], strides = [1, 1]} : vector<16x96xf32> to vector<16x32xf32>
    %396 = arith.negf %395 : vector<16x32xf32>
    %397 = math.exp %396 : vector<16x32xf32>
    %cst_100 = arith.constant 1.000000e+00 : f32
    %398 = vector.broadcast %cst_100 : f32 to vector<16x32xf32>
    %399 = arith.addf %398, %397 : vector<16x32xf32>
    %400 = arith.divf %398, %399 : vector<16x32xf32>
    %401 = vector.extract_strided_slice %388 {offsets = [0, 64], sizes = [16, 32], strides = [1, 1]} : vector<16x96xf32> to vector<16x32xf32>
    %402 = vector.broadcast %387 : vector<1x32xf32> to vector<16x32xf32>
    %403 = arith.mulf %394, %402 : vector<16x32xf32>
    %404 = arith.addf %401, %403 : vector<16x32xf32>
    %405 = math.tanh %404 : vector<16x32xf32>
    %cst_101 = arith.constant 1.000000e+00 : f32
    %406 = vector.broadcast %cst_101 : f32 to vector<16x32xf32>
    %407 = arith.subf %406, %400 : vector<16x32xf32>
    %408 = arith.mulf %407, %405 : vector<16x32xf32>
    %c0_102 = arith.constant 0 : index
    %c0_103 = arith.constant 0 : index
    %409 = vector.load %arg12[%c0_102, %c0_103] : memref<64x32xf32, #tpu.memory_space<vmem>>, vector<16x32xf32>
    %410 = arith.addf %408, %409 : vector<16x32xf32>
    %c0_104 = arith.constant 0 : index
    %c0_105 = arith.constant 0 : index
    %c0_106 = arith.constant 0 : index
    %c0_107 = arith.constant 0 : index
    %411 = vector.load %arg11[%c0_104, %c0_105, %c0_106, %c0_107] : memref<1x1x64x32xf32, #tpu.memory_space<vmem>>, vector<1x1x16x32xf32>
    %412 = vector.shape_cast %411 : vector<1x1x16x32xf32> to vector<16x32xf32>
    %413 = vector.shape_cast %410 : vector<16x32xf32> to vector<1x1x16x32xf32>
    tpu.vector_store %arg11[%c0_104, %c0_105, %c0_106, %c0_107], %413 {strides = array<i32>} : memref<1x1x64x32xf32, #tpu.memory_space<vmem>>, vector<1x1x16x32xf32>,
    %414 = vector.extract_strided_slice %385 {offsets = [16, 0], sizes = [16, 96], strides = [1, 1]} : vector<64x96xf32> to vector<16x96xf32>
    %cst_108 = arith.constant dense<0.000000e+00> : vector<16x96xf32>
    %415 = tpu.matmul %408, %386, %cst_108 {dimension_numbers = #tpu.dot_dimension_numbers<[1], [0], [0], [1], [0, 0, 1, 1], [], []>} : vector<16x32xf32>, vector<32x96xf32>, vector<16x96xf32> -> vector<16x96xf32>
    %416 = vector.extract_strided_slice %414 {offsets = [0, 0], sizes = [16, 32], strides = [1, 1]} : vector<16x96xf32> to vector<16x32xf32>
    %417 = vector.extract_strided_slice %415 {offsets = [0, 0], sizes = [16, 32], strides = [1, 1]} : vector<16x96xf32> to vector<16x32xf32>
    %418 = arith.addf %416, %417 : vector<16x32xf32>
    %419 = arith.negf %418 : vector<16x32xf32>
    %420 = math.exp %419 : vector<16x32xf32>
    %cst_109 = arith.constant 1.000000e+00 : f32
    %421 = vector.broadcast %cst_109 : f32 to vector<16x32xf32>
    %422 = arith.addf %421, %420 : vector<16x32xf32>
    %423 = arith.divf %421, %422 : vector<16x32xf32>
    %424 = vector.extract_strided_slice %414 {offsets = [0, 32], sizes = [16, 32], strides = [1, 1]} : vector<16x96xf32> to vector<16x32xf32>
    %425 = vector.extract_strided_slice %415 {offsets = [0, 32], sizes = [16, 32], strides = [1, 1]} : vector<16x96xf32> to vector<16x32xf32>
    %426 = arith.addf %424, %425 : vector<16x32xf32>
    %427 = arith.negf %426 : vector<16x32xf32>
    %428 = math.exp %427 : vector<16x32xf32>
    %cst_110 = arith.constant 1.000000e+00 : f32
    %429 = vector.broadcast %cst_110 : f32 to vector<16x32xf32>
    %430 = arith.addf %429, %428 : vector<16x32xf32>
    %431 = arith.divf %429, %430 : vector<16x32xf32>
    %432 = vector.extract_strided_slice %414 {offsets = [0, 64], sizes = [16, 32], strides = [1, 1]} : vector<16x96xf32> to vector<16x32xf32>
    %433 = vector.extract_strided_slice %415 {offsets = [0, 64], sizes = [16, 32], strides = [1, 1]} : vector<16x96xf32> to vector<16x32xf32>
    %434 = vector.broadcast %387 : vector<1x32xf32> to vector<16x32xf32>
    %435 = arith.addf %433, %434 : vector<16x32xf32>
    %436 = arith.mulf %423, %435 : vector<16x32xf32>
    %437 = arith.addf %432, %436 : vector<16x32xf32>
    %438 = math.tanh %437 : vector<16x32xf32>
    %cst_111 = arith.constant 1.000000e+00 : f32
    %439 = vector.broadcast %cst_111 : f32 to vector<16x32xf32>
    %440 = arith.subf %439, %431 : vector<16x32xf32>
    %441 = arith.mulf %440, %438 : vector<16x32xf32>
    %442 = arith.mulf %431, %408 : vector<16x32xf32>
    %443 = arith.addf %441, %442 : vector<16x32xf32>
    %c16_112 = arith.constant 16 : index
    %c0_113 = arith.constant 0 : index
    %444 = vector.load %arg12[%c16_112, %c0_113] : memref<64x32xf32, #tpu.memory_space<vmem>>, vector<16x32xf32>
    %445 = arith.addf %443, %444 : vector<16x32xf32>
    %c0_114 = arith.constant 0 : index
    %c0_115 = arith.constant 0 : index
    %c16_116 = arith.constant 16 : index
    %c0_117 = arith.constant 0 : index
    %446 = vector.load %arg11[%c0_114, %c0_115, %c16_116, %c0_117] : memref<1x1x64x32xf32, #tpu.memory_space<vmem>>, vector<1x1x16x32xf32>
    %447 = vector.shape_cast %446 : vector<1x1x16x32xf32> to vector<16x32xf32>
    %448 = vector.shape_cast %445 : vector<16x32xf32> to vector<1x1x16x32xf32>
    tpu.vector_store %arg11[%c0_114, %c0_115, %c16_116, %c0_117], %448 {strides = array<i32>} : memref<1x1x64x32xf32, #tpu.memory_space<vmem>>, vector<1x1x16x32xf32>,
    %449 = vector.extract_strided_slice %385 {offsets = [32, 0], sizes = [16, 96], strides = [1, 1]} : vector<64x96xf32> to vector<16x96xf32>
    %cst_118 = arith.constant dense<0.000000e+00> : vector<16x96xf32>
    %450 = tpu.matmul %443, %386, %cst_118 {dimension_numbers = #tpu.dot_dimension_numbers<[1], [0], [0], [1], [0, 0, 1, 1], [], []>} : vector<16x32xf32>, vector<32x96xf32>, vector<16x96xf32> -> vector<16x96xf32>
    %451 = vector.extract_strided_slice %449 {offsets = [0, 0], sizes = [16, 32], strides = [1, 1]} : vector<16x96xf32> to vector<16x32xf32>
    %452 = vector.extract_strided_slice %450 {offsets = [0, 0], sizes = [16, 32], strides = [1, 1]} : vector<16x96xf32> to vector<16x32xf32>
    %453 = arith.addf %451, %452 : vector<16x32xf32>
    %454 = arith.negf %453 : vector<16x32xf32>
    %455 = math.exp %454 : vector<16x32xf32>
    %cst_119 = arith.constant 1.000000e+00 : f32
    %456 = vector.broadcast %cst_119 : f32 to vector<16x32xf32>
    %457 = arith.addf %456, %455 : vector<16x32xf32>
    %458 = arith.divf %456, %457 : vector<16x32xf32>
    %459 = vector.extract_strided_slice %449 {offsets = [0, 32], sizes = [16, 32], strides = [1, 1]} : vector<16x96xf32> to vector<16x32xf32>
    %460 = vector.extract_strided_slice %450 {offsets = [0, 32], sizes = [16, 32], strides = [1, 1]} : vector<16x96xf32> to vector<16x32xf32>
    %461 = arith.addf %459, %460 : vector<16x32xf32>
    %462 = arith.negf %461 : vector<16x32xf32>
    %463 = math.exp %462 : vector<16x32xf32>
    %cst_120 = arith.constant 1.000000e+00 : f32
    %464 = vector.broadcast %cst_120 : f32 to vector<16x32xf32>
    %465 = arith.addf %464, %463 : vector<16x32xf32>
    %466 = arith.divf %464, %465 : vector<16x32xf32>
    %467 = vector.extract_strided_slice %449 {offsets = [0, 64], sizes = [16, 32], strides = [1, 1]} : vector<16x96xf32> to vector<16x32xf32>
    %468 = vector.extract_strided_slice %450 {offsets = [0, 64], sizes = [16, 32], strides = [1, 1]} : vector<16x96xf32> to vector<16x32xf32>
    %469 = vector.broadcast %387 : vector<1x32xf32> to vector<16x32xf32>
    %470 = arith.addf %468, %469 : vector<16x32xf32>
    %471 = arith.mulf %458, %470 : vector<16x32xf32>
    %472 = arith.addf %467, %471 : vector<16x32xf32>
    %473 = math.tanh %472 : vector<16x32xf32>
    %cst_121 = arith.constant 1.000000e+00 : f32
    %474 = vector.broadcast %cst_121 : f32 to vector<16x32xf32>
    %475 = arith.subf %474, %466 : vector<16x32xf32>
    %476 = arith.mulf %475, %473 : vector<16x32xf32>
    %477 = arith.mulf %466, %443 : vector<16x32xf32>
    %478 = arith.addf %476, %477 : vector<16x32xf32>
    %c32_122 = arith.constant 32 : index
    %c0_123 = arith.constant 0 : index
    %479 = vector.load %arg12[%c32_122, %c0_123] : memref<64x32xf32, #tpu.memory_space<vmem>>, vector<16x32xf32>
    %480 = arith.addf %478, %479 : vector<16x32xf32>
    %c0_124 = arith.constant 0 : index
    %c0_125 = arith.constant 0 : index
    %c32_126 = arith.constant 32 : index
    %c0_127 = arith.constant 0 : index
    %481 = vector.load %arg11[%c0_124, %c0_125, %c32_126, %c0_127] : memref<1x1x64x32xf32, #tpu.memory_space<vmem>>, vector<1x1x16x32xf32>
    %482 = vector.shape_cast %481 : vector<1x1x16x32xf32> to vector<16x32xf32>
    %483 = vector.shape_cast %480 : vector<16x32xf32> to vector<1x1x16x32xf32>
    tpu.vector_store %arg11[%c0_124, %c0_125, %c32_126, %c0_127], %483 {strides = array<i32>} : memref<1x1x64x32xf32, #tpu.memory_space<vmem>>, vector<1x1x16x32xf32>,
    %484 = vector.extract_strided_slice %385 {offsets = [48, 0], sizes = [16, 96], strides = [1, 1]} : vector<64x96xf32> to vector<16x96xf32>
    %cst_128 = arith.constant dense<0.000000e+00> : vector<16x96xf32>
    %485 = tpu.matmul %478, %386, %cst_128 {dimension_numbers = #tpu.dot_dimension_numbers<[1], [0], [0], [1], [0, 0, 1, 1], [], []>} : vector<16x32xf32>, vector<32x96xf32>, vector<16x96xf32> -> vector<16x96xf32>
    %486 = vector.extract_strided_slice %484 {offsets = [0, 0], sizes = [16, 32], strides = [1, 1]} : vector<16x96xf32> to vector<16x32xf32>
    %487 = vector.extract_strided_slice %485 {offsets = [0, 0], sizes = [16, 32], strides = [1, 1]} : vector<16x96xf32> to vector<16x32xf32>
    %488 = arith.addf %486, %487 : vector<16x32xf32>
    %489 = arith.negf %488 : vector<16x32xf32>
    %490 = math.exp %489 : vector<16x32xf32>
    %cst_129 = arith.constant 1.000000e+00 : f32
    %491 = vector.broadcast %cst_129 : f32 to vector<16x32xf32>
    %492 = arith.addf %491, %490 : vector<16x32xf32>
    %493 = arith.divf %491, %492 : vector<16x32xf32>
    %494 = vector.extract_strided_slice %484 {offsets = [0, 32], sizes = [16, 32], strides = [1, 1]} : vector<16x96xf32> to vector<16x32xf32>
    %495 = vector.extract_strided_slice %485 {offsets = [0, 32], sizes = [16, 32], strides = [1, 1]} : vector<16x96xf32> to vector<16x32xf32>
    %496 = arith.addf %494, %495 : vector<16x32xf32>
    %497 = arith.negf %496 : vector<16x32xf32>
    %498 = math.exp %497 : vector<16x32xf32>
    %cst_130 = arith.constant 1.000000e+00 : f32
    %499 = vector.broadcast %cst_130 : f32 to vector<16x32xf32>
    %500 = arith.addf %499, %498 : vector<16x32xf32>
    %501 = arith.divf %499, %500 : vector<16x32xf32>
    %502 = vector.extract_strided_slice %484 {offsets = [0, 64], sizes = [16, 32], strides = [1, 1]} : vector<16x96xf32> to vector<16x32xf32>
    %503 = vector.extract_strided_slice %485 {offsets = [0, 64], sizes = [16, 32], strides = [1, 1]} : vector<16x96xf32> to vector<16x32xf32>
    %504 = vector.broadcast %387 : vector<1x32xf32> to vector<16x32xf32>
    %505 = arith.addf %503, %504 : vector<16x32xf32>
    %506 = arith.mulf %493, %505 : vector<16x32xf32>
    %507 = arith.addf %502, %506 : vector<16x32xf32>
    %508 = math.tanh %507 : vector<16x32xf32>
    %cst_131 = arith.constant 1.000000e+00 : f32
    %509 = vector.broadcast %cst_131 : f32 to vector<16x32xf32>
    %510 = arith.subf %509, %501 : vector<16x32xf32>
    %511 = arith.mulf %510, %508 : vector<16x32xf32>
    %512 = arith.mulf %501, %478 : vector<16x32xf32>
    %513 = arith.addf %511, %512 : vector<16x32xf32>
    %c48_132 = arith.constant 48 : index
    %c0_133 = arith.constant 0 : index
    %514 = vector.load %arg12[%c48_132, %c0_133] : memref<64x32xf32, #tpu.memory_space<vmem>>, vector<16x32xf32>
    %515 = arith.addf %513, %514 : vector<16x32xf32>
    %c0_134 = arith.constant 0 : index
    %c0_135 = arith.constant 0 : index
    %c48_136 = arith.constant 48 : index
    %c0_137 = arith.constant 0 : index
    %516 = vector.load %arg11[%c0_134, %c0_135, %c48_136, %c0_137] : memref<1x1x64x32xf32, #tpu.memory_space<vmem>>, vector<1x1x16x32xf32>
    %517 = vector.shape_cast %516 : vector<1x1x16x32xf32> to vector<16x32xf32>
    %518 = vector.shape_cast %515 : vector<16x32xf32> to vector<1x1x16x32xf32>
    tpu.vector_store %arg11[%c0_134, %c0_135, %c48_136, %c0_137], %518 {strides = array<i32>} : memref<1x1x64x32xf32, #tpu.memory_space<vmem>>, vector<1x1x16x32xf32>,
    return
  }
  func.func @transform_0(%arg0: i32, %arg1: i32) -> (i32, i32, i32, i32) {
    %c0_i32 = arith.constant 0 : i32
    %c0_i32_0 = arith.constant 0 : i32
    %c0_i32_1 = arith.constant 0 : i32
    return %arg0, %arg1, %c0_i32, %c0_i32_0 : i32, i32, i32, i32
  }
  func.func @transform_1(%arg0: i32, %arg1: i32) -> (i32, i32, i32) {
    %c0_i32 = arith.constant 0 : i32
    %c0_i32_0 = arith.constant 0 : i32
    %c0_i32_1 = arith.constant 0 : i32
    return %arg0, %c0_i32, %c0_i32_0 : i32, i32, i32
  }
  func.func @transform_2(%arg0: i32, %arg1: i32) -> (i32, i32, i32) {
    %c0_i32 = arith.constant 0 : i32
    %c0_i32_0 = arith.constant 0 : i32
    %c0_i32_1 = arith.constant 0 : i32
    return %arg0, %c0_i32, %c0_i32_0 : i32, i32, i32
  }
  func.func @transform_3(%arg0: i32, %arg1: i32) -> (i32, i32, i32) {
    %c0_i32 = arith.constant 0 : i32
    %c0_i32_0 = arith.constant 0 : i32
    %c0_i32_1 = arith.constant 0 : i32
    return %arg0, %c0_i32, %c0_i32_0 : i32, i32, i32
  }
  func.func @transform_4(%arg0: i32, %arg1: i32) -> (i32, i32, i32) {
    %c0_i32 = arith.constant 0 : i32
    %c0_i32_0 = arith.constant 0 : i32
    %c0_i32_1 = arith.constant 0 : i32
    return %arg0, %c0_i32, %c0_i32_0 : i32, i32, i32
  }
  func.func @transform_5(%arg0: i32, %arg1: i32) -> (i32, i32, i32) {
    %c0_i32 = arith.constant 0 : i32
    %c0_i32_0 = arith.constant 0 : i32
    %c0_i32_1 = arith.constant 0 : i32
    return %arg0, %c0_i32, %c0_i32_0 : i32, i32, i32
  }
  func.func @transform_6(%arg0: i32, %arg1: i32) -> (i32, i32, i32) {
    %c0_i32 = arith.constant 0 : i32
    %c0_i32_0 = arith.constant 0 : i32
    %c0_i32_1 = arith.constant 0 : i32
    return %arg0, %c0_i32, %c0_i32_0 : i32, i32, i32
  }
  func.func @transform_7(%arg0: i32, %arg1: i32) -> (i32, i32, i32) {
    %c0_i32 = arith.constant 0 : i32
    %c0_i32_0 = arith.constant 0 : i32
    %c0_i32_1 = arith.constant 0 : i32
    return %arg0, %c0_i32, %c0_i32_0 : i32, i32, i32
  }
  func.func @transform_8(%arg0: i32, %arg1: i32) -> (i32, i32, i32) {
    %c0_i32 = arith.constant 0 : i32
    %c0_i32_0 = arith.constant 0 : i32
    %c0_i32_1 = arith.constant 0 : i32
    return %arg0, %c0_i32, %c0_i32_0 : i32, i32, i32
  }
  func.func @transform_9(%arg0: i32, %arg1: i32) -> (i32, i32, i32, i32) {
    %c0_i32 = arith.constant 0 : i32
    %c0_i32_0 = arith.constant 0 : i32
    %c0_i32_1 = arith.constant 0 : i32
    return %arg0, %arg1, %c0_i32, %c0_i32_0 : i32, i32, i32, i32
  }
}

</mosaic_0001>

<llo_original>
// kernel: tpu_custom_call.1
$region0: #{tpu_custom_call.1}
  #allocation0 [shape = 'u32[]', space=smem, size = 0x4, offset = 0x4, fixed_abs, tag = 'smem constant byte address 0x4 - core index']
  #allocation1 [shape = 'u32[144,128]{1,0:T(1,128)}', space=vmem, size = 0x12000, scoped, tag = 'internal scratch']
  #allocation2 [shape = 'f32[64,32]{1,0:T(8,128)}', space=vmem, size = 0x8000, scoped, tag = 'scratch operand']
  #allocation3 [shape = 'f32[64,32]{1,0:T(8,128)}', space=vmem, size = 0x8000, scoped, tag = 'scratch operand']
  %s0 = inlined_call_operand.vmem [shape: bf16[2,1,64,16], index: 0, kind: input, shape index: {}]
  %s1 = inlined_call_operand.vmem [shape: bf16[2,16,192], index: 1, kind: input, shape index: {}]
  %s2 = inlined_call_operand.hbm [shape: f32[2,32,192], index: 2, kind: input, shape index: {}]
  %s3 = inlined_call_operand.vmem [shape: f32[2,1,192], index: 3, kind: input, shape index: {}]
  %s4 = inlined_call_operand.vmem [shape: f32[2,1,64], index: 4, kind: input, shape index: {}]
  %s5 = inlined_call_operand.hbm [shape: f32[2,32,192], index: 5, kind: input, shape index: {}]
  %s6 = inlined_call_operand.hbm [shape: f32[2,32,192], index: 6, kind: input, shape index: {}]
  %s7 = inlined_call_operand.vmem [shape: f32[2,1,192], index: 7, kind: input, shape index: {}]
  %s8 = inlined_call_operand.vmem [shape: f32[2,1,64], index: 8, kind: input, shape index: {}]
  %s9 = inlined_call_operand.vmem [shape: f32[2,1,64,32], index: 9, kind: output, shape index: {}]
  %s10 = sld [smem:[#allocation0]]
  $region81: #{tpu_custom_call.1} parent=0
    _
  %s12 = ssub.s32 1, %s10
  %s13 = scalar_select 0, %s12, %s10
  $region1: #{tpu_custom_call.1} parent=0
    #allocation4 [shape = 'u8[65536]{0}', space=vmem, size = 0x10000, scoped, tag = 'input window, operand 2']
    #allocation5 [shape = 's32[2]{0}', space=sflag, size = 0x8, scoped, tag = 'scoped memory for tpu_custom_call.1']
    #allocation6 [shape = 'u8[65536]{0}', space=vmem, size = 0x10000, scoped, tag = 'input window, operand 5']
    #allocation7 [shape = 's32[2]{0}', space=sflag, size = 0x8, scoped, tag = 'scoped memory for tpu_custom_call.1']
    #allocation8 [shape = 'u8[65536]{0}', space=vmem, size = 0x10000, scoped, tag = 'input window, operand 6']
    %14 = vsyncpa [#allocation5], 0
    %s15 = scalar_lea.sflag [#allocation5], 1
    %16 = vsyncpa %s15, 0
    %17 = vsyncpa [#allocation7], 0
    %s18 = scalar_lea.sflag [#allocation7], 1
    %19 = vsyncpa %s18, 0
    loop: start=0, step=1, limit=4
    $region2: #{tpu_custom_call.1} parent=1 // loop_pre_header
      _
    $region3: #{tpu_custom_call.1} parent=1 // loop_header
      %s21 = sphi 0, %s25
      %p22 = scmp.ge.s32.totalorder %s21, 4
      %s28 = sphi 0, %s40
      %s29 = sphi 0, %s36
      %s30 = sphi 0, %s28
      %s31 = sphi 0, %s29
      %s32 = sphi 0, %s30
      %s33 = sphi 0, %s31
      %s45 = sphi 0, %s47
      %s48 = sphi 0, %s45
      %s49 = sphi 0, %s48
      %s65 = sphi 0, %s49
      %s71 = sphi 0, %s73
      %s74 = sphi 0, %s71
      %s75 = sphi 0, %s74
      %s91 = sphi 0, %s75
      %s97 = sphi 0, %s99
      %s100 = sphi 0, %s97
      %s101 = sphi 0, %s100
      %s117 = sphi 0, %s101
      %s123 = sphi 0, %s125
      %s126 = sphi 0, %s123
      %s127 = sphi 0, %s126
      %s143 = sphi 0, %s127
      %s149 = sphi 0, %s151
      %s152 = sphi 0, %s149
      %s153 = sphi 0, %s152
      %s169 = sphi 0, %s153
      %s175 = sphi 0, %s177
      %s178 = sphi 0, %s175
      %s179 = sphi 0, %s178
      %s195 = sphi 0, %s179
      %s201 = sphi 0, %s203
      %s204 = sphi 0, %s201
      %s205 = sphi 0, %s204
      %s221 = sphi 0, %s205
      %s227 = sphi 0, %s229
      %s230 = sphi 0, %s227
      %s231 = sphi 0, %s230
      %s247 = sphi 0, %s231
      %s253 = sphi 0, %s255
      %s256 = sphi 0, %s253
      %s257 = sphi 0, %s256
      %s273 = sphi 0, %s257
      %s281 = sphi 0, %s283
      %s284 = sphi 0, %s281
      %s285 = sphi 0, %s284
      %s301 = sphi 0, %s285
    $region4: #{tpu_custom_call.1} parent=1 // loop_header_branch
      %24 = sbr.rel (%p22) target = $region8
    $region5: #{tpu_custom_call.1} parent=1 // loop_body
      %s26 = ssub.s32 %s21, 1
      %s27 = ssub.s32 %s21, 2
      %s34 = sadd.s32 1, %s29
      %p35 = scmp.ge.s32.totalorder %s34, 1
      %s36 = scalar_select %p35, 0, %s34
      %s37 = sadd.s32 1, %s28
      %s38 = scalar_select %p35, %s37, %s28
      %p39 = scmp.ge.s32.totalorder %s38, 2
      %s40 = scalar_select %p39, 0, %s38
      %s41 = ssub.s32 %s28, %s40
      %s42 = ssub.s32 %s29, %s36
      %s43 = sor.u32 %s41, %s42
      %p44 = scmp.eq.s32.totalorder %s43, 0
      %s46 = sadd.s32 %s45, 1
      %s47 = scalar_select %p44, %s45, %s46
      %p50 = pneg %p44
      %p51 = scmp.eq.s32.totalorder %s21, 1
      %p52 = por %p50, %p51
      %p53 = scmp.ne.s32.totalorder %s45, %s48
      %p54 = scmp.eq.s32.totalorder %s21, 0
      %p55 = por %p53, %p54
      %p56 = scmp.ne.s32.totalorder %s45, %s48
      %p57 = scmp.eq.s32.totalorder %s26, 1
      %p58 = por %p56, %p57
      %p59 = scmp.ne.s32.totalorder %s48, %s49
      %p60 = scmp.eq.s32.totalorder %s26, 0
      %p61 = por %p59, %p60
      %p62 = scmp.ne.s32.totalorder %s48, %s49
      %p63 = scmp.eq.s32.totalorder %s27, 1
      %p64 = por %p62, %p63
      %p66 = scmp.ne.s32.totalorder %s49, %s65
      %p67 = scmp.eq.s32.totalorder %s27, 0
      %p68 = por %p66, %p67
      %s69 = ssub.s32 %s28, %s40
      %p70 = scmp.eq.s32.totalorder %s69, 0
      %s72 = sadd.s32 %s71, 1
      %s73 = scalar_select %p70, %s71, %s72
      %p76 = pneg %p70
      %p77 = scmp.eq.s32.totalorder %s21, 1
      %p78 = por %p76, %p77
      %p79 = scmp.ne.s32.totalorder %s71, %s74
      %p80 = scmp.eq.s32.totalorder %s21, 0
      %p81 = por %p79, %p80
      %p82 = scmp.ne.s32.totalorder %s71, %s74
      %p83 = scmp.eq.s32.totalorder %s26, 1
      %p84 = por %p82, %p83
      %p85 = scmp.ne.s32.totalorder %s74, %s75
      %p86 = scmp.eq.s32.totalorder %s26, 0
      %p87 = por %p85, %p86
      %p88 = scmp.ne.s32.totalorder %s74, %s75
      %p89 = scmp.eq.s32.totalorder %s27, 1
      %p90 = por %p88, %p89
      %p92 = scmp.ne.s32.totalorder %s75, %s91
      %p93 = scmp.eq.s32.totalorder %s27, 0
      %p94 = por %p92, %p93
      %s95 = ssub.s32 %s28, %s40
      %p96 = scmp.eq.s32.totalorder %s95, 0
      %s98 = sadd.s32 %s97, 1
      %s99 = scalar_select %p96, %s97, %s98
      %p102 = pneg %p96
      %p103 = scmp.eq.s32.totalorder %s21, 1
      %p104 = por %p102, %p103
      %p105 = scmp.ne.s32.totalorder %s97, %s100
      %p106 = scmp.eq.s32.totalorder %s21, 0
      %p107 = por %p105, %p106
      %p108 = scmp.ne.s32.totalorder %s97, %s100
      %p109 = scmp.eq.s32.totalorder %s26, 1
      %p110 = por %p108, %p109
      %p111 = scmp.ne.s32.totalorder %s100, %s101
      %p112 = scmp.eq.s32.totalorder %s26, 0
      %p113 = por %p111, %p112
      %p114 = scmp.ne.s32.totalorder %s100, %s101
      %p115 = scmp.eq.s32.totalorder %s27, 1
      %p116 = por %p114, %p115
      %p118 = scmp.ne.s32.totalorder %s101, %s117
      %p119 = scmp.eq.s32.totalorder %s27, 0
      %p120 = por %p118, %p119
      %s121 = ssub.s32 %s28, %s40
      %p122 = scmp.eq.s32.totalorder %s121, 0
      %s124 = sadd.s32 %s123, 1
      %s125 = scalar_select %p122, %s123, %s124
      %p128 = pneg %p122
      %p129 = scmp.eq.s32.totalorder %s21, 1
      %p130 = por %p128, %p129
      %p131 = scmp.ne.s32.totalorder %s123, %s126
      %p132 = scmp.eq.s32.totalorder %s21, 0
      %p133 = por %p131, %p132
      %p134 = scmp.ne.s32.totalorder %s123, %s126
      %p135 = scmp.eq.s32.totalorder %s26, 1
      %p136 = por %p134, %p135
      %p137 = scmp.ne.s32.totalorder %s126, %s127
      %p138 = scmp.eq.s32.totalorder %s26, 0
      %p139 = por %p137, %p138
      %p140 = scmp.ne.s32.totalorder %s126, %s127
      %p141 = scmp.eq.s32.totalorder %s27, 1
      %p142 = por %p140, %p141
      %p144 = scmp.ne.s32.totalorder %s127, %s143
      %p145 = scmp.eq.s32.totalorder %s27, 0
      %p146 = por %p144, %p145
      %s147 = ssub.s32 %s28, %s40
      %p148 = scmp.eq.s32.totalorder %s147, 0
      %s150 = sadd.s32 %s149, 1
      %s151 = scalar_select %p148, %s149, %s150
      %p154 = pneg %p148
      %p155 = scmp.eq.s32.totalorder %s21, 1
      %p156 = por %p154, %p155
      %p157 = scmp.ne.s32.totalorder %s149, %s152
      %p158 = scmp.eq.s32.totalorder %s21, 0
      %p159 = por %p157, %p158
      %p160 = scmp.ne.s32.totalorder %s149, %s152
      %p161 = scmp.eq.s32.totalorder %s26, 1
      %p162 = por %p160, %p161
      %p163 = scmp.ne.s32.totalorder %s152, %s153
      %p164 = scmp.eq.s32.totalorder %s26, 0
      %p165 = por %p163, %p164
      %p166 = scmp.ne.s32.totalorder %s152, %s153
      %p167 = scmp.eq.s32.totalorder %s27, 1
      %p168 = por %p166, %p167
      %p170 = scmp.ne.s32.totalorder %s153, %s169
      %p171 = scmp.eq.s32.totalorder %s27, 0
      %p172 = por %p170, %p171
      %s173 = ssub.s32 %s28, %s40
      %p174 = scmp.eq.s32.totalorder %s173, 0
      %s176 = sadd.s32 %s175, 1
      %s177 = scalar_select %p174, %s175, %s176
      %p180 = pneg %p174
      %p181 = scmp.eq.s32.totalorder %s21, 1
      %p182 = por %p180, %p181
      %p183 = scmp.ne.s32.totalorder %s175, %s178
      %p184 = scmp.eq.s32.totalorder %s21, 0
      %p185 = por %p183, %p184
      %p186 = scmp.ne.s32.totalorder %s175, %s178
      %p187 = scmp.eq.s32.totalorder %s26, 1
      %p188 = por %p186, %p187
      %p189 = scmp.ne.s32.totalorder %s178, %s179
      %p190 = scmp.eq.s32.totalorder %s26, 0
      %p191 = por %p189, %p190
      %p192 = scmp.ne.s32.totalorder %s178, %s179
      %p193 = scmp.eq.s32.totalorder %s27, 1
      %p194 = por %p192, %p193
      %p196 = scmp.ne.s32.totalorder %s179, %s195
      %p197 = scmp.eq.s32.totalorder %s27, 0
      %p198 = por %p196, %p197
      %s199 = ssub.s32 %s28, %s40
      %p200 = scmp.eq.s32.totalorder %s199, 0
      %s202 = sadd.s32 %s201, 1
      %s203 = scalar_select %p200, %s201, %s202
      %p206 = pneg %p200
      %p207 = scmp.eq.s32.totalorder %s21, 1
      %p208 = por %p206, %p207
      %p209 = scmp.ne.s32.totalorder %s201, %s204
      %p210 = scmp.eq.s32.totalorder %s21, 0
      %p211 = por %p209, %p210
      %p212 = scmp.ne.s32.totalorder %s201, %s204
      %p213 = scmp.eq.s32.totalorder %s26, 1
      %p214 = por %p212, %p213
      %p215 = scmp.ne.s32.totalorder %s204, %s205
      %p216 = scmp.eq.s32.totalorder %s26, 0
      %p217 = por %p215, %p216
      %p218 = scmp.ne.s32.totalorder %s204, %s205
      %p219 = scmp.eq.s32.totalorder %s27, 1
      %p220 = por %p218, %p219
      %p222 = scmp.ne.s32.totalorder %s205, %s221
      %p223 = scmp.eq.s32.totalorder %s27, 0
      %p224 = por %p222, %p223
      %s225 = ssub.s32 %s28, %s40
      %p226 = scmp.eq.s32.totalorder %s225, 0
      %s228 = sadd.s32 %s227, 1
      %s229 = scalar_select %p226, %s227, %s228
      %p232 = pneg %p226
      %p233 = scmp.eq.s32.totalorder %s21, 1
      %p234 = por %p232, %p233
      %p235 = scmp.ne.s32.totalorder %s227, %s230
      %p236 = scmp.eq.s32.totalorder %s21, 0
      %p237 = por %p235, %p236
      %p238 = scmp.ne.s32.totalorder %s227, %s230
      %p239 = scmp.eq.s32.totalorder %s26, 1
      %p240 = por %p238, %p239
      %p241 = scmp.ne.s32.totalorder %s230, %s231
      %p242 = scmp.eq.s32.totalorder %s26, 0
      %p243 = por %p241, %p242
      %p244 = scmp.ne.s32.totalorder %s230, %s231
      %p245 = scmp.eq.s32.totalorder %s27, 1
      %p246 = por %p244, %p245
      %p248 = scmp.ne.s32.totalorder %s231, %s247
      %p249 = scmp.eq.s32.totalorder %s27, 0
      %p250 = por %p248, %p249
      %s251 = ssub.s32 %s28, %s40
      %p252 = scmp.eq.s32.totalorder %s251, 0
      %s254 = sadd.s32 %s253, 1
      %s255 = scalar_select %p252, %s253, %s254
      %p258 = pneg %p252
      %p259 = scmp.eq.s32.totalorder %s21, 1
      %p260 = por %p258, %p259
      %p261 = scmp.ne.s32.totalorder %s253, %s256
      %p262 = scmp.eq.s32.totalorder %s21, 0
      %p263 = por %p261, %p262
      %p264 = scmp.ne.s32.totalorder %s253, %s256
      %p265 = scmp.eq.s32.totalorder %s26, 1
      %p266 = por %p264, %p265
      %p267 = scmp.ne.s32.totalorder %s256, %s257
      %p268 = scmp.eq.s32.totalorder %s26, 0
      %p269 = por %p267, %p268
      %p270 = scmp.ne.s32.totalorder %s256, %s257
      %p271 = scmp.eq.s32.totalorder %s27, 1
      %p272 = por %p270, %p271
      %p274 = scmp.ne.s32.totalorder %s257, %s273
      %p275 = scmp.eq.s32.totalorder %s27, 0
      %p276 = por %p274, %p275
      %s277 = ssub.s32 %s28, %s40
      %s278 = ssub.s32 %s29, %s36
      %s279 = sor.u32 %s277, %s278
      %p280 = scmp.eq.s32.totalorder %s279, 0
      %s282 = sadd.s32 %s281, 1
      %s283 = scalar_select %p280, %s281, %s282
      %p286 = pneg %p280
      %p287 = scmp.eq.s32.totalorder %s21, 1
      %p288 = por %p286, %p287
      %p289 = scmp.ne.s32.totalorder %s281, %s284
      %p290 = scmp.eq.s32.totalorder %s21, 0
      %p291 = por %p289, %p290
      %p292 = scmp.ne.s32.totalorder %s281, %s284
      %p293 = scmp.eq.s32.totalorder %s26, 1
      %p294 = por %p292, %p293
      %p295 = scmp.ne.s32.totalorder %s284, %s285
      %p296 = scmp.eq.s32.totalorder %s26, 0
      %p297 = por %p295, %p296
      %p298 = scmp.ne.s32.totalorder %s284, %s285
      %p299 = scmp.eq.s32.totalorder %s27, 1
      %p300 = por %p298, %p299
      %p302 = scmp.ne.s32.totalorder %s285, %s301
      %p303 = scmp.eq.s32.totalorder %s27, 0
      %p304 = por %p302, %p303
      %p305 = scmp.le.s32.totalorder 1, %s21
      %p306 = scmp.lt.s32.totalorder %s21, 3
      %p307 = pnand %p305, %p306
      %p308 = pneg %p307
      // Predicated region
      $region9: #{tpu_custom_call.1} parent=5 // pred_check
        _
      $region10: #{tpu_custom_call.1} parent=5 // pred_check_branch
        %310 = sbr.rel (%p307) target = $region12
      $region11: #{tpu_custom_call.1} parent=5 // pred_region
        %s311 = ssub.s32 %s21, 1
      $region12: #{tpu_custom_call.1} parent=5 // pred_fallthru
        _
      %p312 = scmp.lt.s32.totalorder %s21, 2
      // Predicated region
      $region13: #{tpu_custom_call.1} parent=5 // pred_check
        %p313 = pneg %p312
      $region14: #{tpu_custom_call.1} parent=5 // pred_check_branch
        %315 = sbr.rel (%p313) target = $region16
      $region15: #{tpu_custom_call.1} parent=5 // pred_region
        // Predicated region
        $region17: #{tpu_custom_call.1} parent=15 // pred_check
          %p316 = pneg %p55
        $region18: #{tpu_custom_call.1} parent=15 // pred_check_branch
          %318 = sbr.rel (%p316) target = $region20
        $region19: #{tpu_custom_call.1} parent=15 // pred_region
          %p319 = scmp.lt.s32.totalorder %s28, 1
          %s320 = scalar_select %p319, %s28, 1
          %p321 = scmp.lt.s32.totalorder %s29, 0
          %s322 = scalar_select %p321, %s29, 0
          %s323 = smul.addr %s322, 8
          %s324 = smul.addr %s320, 8
          %s325 = sadd.s32 %s323, %s324
          %s326 = smul.addr %s325, 4
          %s327 = scalar_lea.vmem %s0, %s326
        $region20: #{tpu_custom_call.1} parent=15 // pred_fallthru
          _
        // Predicated region
        $region21: #{tpu_custom_call.1} parent=15 // pred_check
          %p328 = pneg %p81
        $region22: #{tpu_custom_call.1} parent=15 // pred_check_branch
          %330 = sbr.rel (%p328) target = $region24
        $region23: #{tpu_custom_call.1} parent=15 // pred_region
          %p331 = scmp.lt.s32.totalorder %s28, 1
          %s332 = scalar_select %p331, %s28, 1
          %s333 = smul.addr %s332, 4
          %s334 = smul.addr %s333, 4
          %s335 = scalar_lea.vmem %s1, %s334
        $region24: #{tpu_custom_call.1} parent=15 // pred_fallthru
          _
        // Predicated region
        $region25: #{tpu_custom_call.1} parent=15 // pred_check
          %p336 = pneg %p107
        $region26: #{tpu_custom_call.1} parent=15 // pred_check_branch
          %338 = sbr.rel (%p336) target = $region28
        $region27: #{tpu_custom_call.1} parent=15 // pred_region
          %s339 = sand.u32 %s97, 1
          %s340 = scalar_lea.sflag [#allocation5], %s339
          %s341 = sand.u32 %s97, 1
          %s342 = smul.addr %s341, 64
          %s343 = scalar_lea.vmem [#allocation4], %s342
          %s345 = ssub.s32 1024, 1024
          %346 = vsyncadd %s340, %s345
          %s347 = smul.addr %s28, 8
          %s348 = smul.addr %s347, 128
          %s349 = scalar_lea.hbm %s2, %s348
          %s350 = sshll.u32 %s343, 4
          %s351 = int_to_ptr.vmem [resolvable:$true] %s350
          %356 = dma.hbm_to_vmem [thread:$0]  %s349, 1024, %s351, %s340, 256, 256, 16
        $region28: #{tpu_custom_call.1} parent=15 // pred_fallthru
          _
        // Predicated region
        $region29: #{tpu_custom_call.1} parent=15 // pred_check
          %p357 = pneg %p133
        $region30: #{tpu_custom_call.1} parent=15 // pred_check_branch
          %359 = sbr.rel (%p357) target = $region32
        $region31: #{tpu_custom_call.1} parent=15 // pred_region
          %p360 = scmp.lt.s32.totalorder %s28, 1
          %s361 = scalar_select %p360, %s28, 1
          %s362 = smul.addr %s361, 2
          %s363 = scalar_lea.vmem %s3, %s362
        $region32: #{tpu_custom_call.1} parent=15 // pred_fallthru
          _
        // Predicated region
        $region33: #{tpu_custom_call.1} parent=15 // pred_check
          %p364 = pneg %p159
        $region34: #{tpu_custom_call.1} parent=15 // pred_check_branch
          %366 = sbr.rel (%p364) target = $region36
        $region35: #{tpu_custom_call.1} parent=15 // pred_region
          %p367 = scmp.lt.s32.totalorder %s28, 1
          %s368 = scalar_select %p367, %s28, 1
          %s369 = scalar_lea.vmem %s4, %s368
        $region36: #{tpu_custom_call.1} parent=15 // pred_fallthru
          _
        // Predicated region
        $region37: #{tpu_custom_call.1} parent=15 // pred_check
          %p370 = pneg %p185
        $region38: #{tpu_custom_call.1} parent=15 // pred_check_branch
          %372 = sbr.rel (%p370) target = $region40
        $region39: #{tpu_custom_call.1} parent=15 // pred_region
          %s373 = sand.u32 %s21, 1
          %s374 = scalar_lea.sflag [#allocation7], %s373
          %s375 = sand.u32 %s175, 1
          %s376 = smul.addr %s375, 64
          %s377 = scalar_lea.vmem [#allocation6], %s376
          %s379 = ssub.s32 1024, 1024
          %380 = vsyncadd %s374, %s379
          %s381 = smul.addr %s28, 8
          %s382 = smul.addr %s381, 128
          %s383 = scalar_lea.hbm %s5, %s382
          %s384 = sshll.u32 %s377, 4
          %s385 = int_to_ptr.vmem [resolvable:$true] %s384
          %390 = dma.hbm_to_vmem [thread:$0]  %s383, 1024, %s385, %s374, 256, 256, 16
        $region40: #{tpu_custom_call.1} parent=15 // pred_fallthru
          _
        // Predicated region
        $region41: #{tpu_custom_call.1} parent=15 // pred_check
          %p391 = pneg %p211
        $region42: #{tpu_custom_call.1} parent=15 // pred_check_branch
          %393 = sbr.rel (%p391) target = $region44
        $region43: #{tpu_custom_call.1} parent=15 // pred_region
          %s394 = sand.u32 %s21, 1
          %s395 = scalar_lea.sflag [#allocation7], %s394
          %s396 = sand.u32 %s201, 1
          %s397 = smul.addr %s396, 64
          %s398 = scalar_lea.vmem [#allocation8], %s397
          %s400 = ssub.s32 1024, 1024
          %401 = vsyncadd %s395, %s400
          %s402 = smul.addr %s28, 8
          %s403 = smul.addr %s402, 128
          %s404 = scalar_lea.hbm %s6, %s403
          %s405 = sshll.u32 %s398, 4
          %s406 = int_to_ptr.vmem [resolvable:$true] %s405
          %411 = dma.hbm_to_vmem [thread:$0]  %s404, 1024, %s406, %s395, 256, 256, 16
        $region44: #{tpu_custom_call.1} parent=15 // pred_fallthru
          _
        // Predicated region
        $region45: #{tpu_custom_call.1} parent=15 // pred_check
          %p412 = pneg %p237
        $region46: #{tpu_custom_call.1} parent=15 // pred_check_branch
          %414 = sbr.rel (%p412) target = $region48
        $region47: #{tpu_custom_call.1} parent=15 // pred_region
          %p415 = scmp.lt.s32.totalorder %s28, 1
          %s416 = scalar_select %p415, %s28, 1
          %s417 = smul.addr %s416, 2
          %s418 = scalar_lea.vmem %s7, %s417
        $region48: #{tpu_custom_call.1} parent=15 // pred_fallthru
          _
        // Predicated region
        $region49: #{tpu_custom_call.1} parent=15 // pred_check
          %p419 = pneg %p263
        $region50: #{tpu_custom_call.1} parent=15 // pred_check_branch
          %421 = sbr.rel (%p419) target = $region52
        $region51: #{tpu_custom_call.1} parent=15 // pred_region
          %p422 = scmp.lt.s32.totalorder %s28, 1
          %s423 = scalar_select %p422, %s28, 1
          %s424 = scalar_lea.vmem %s8, %s423
        $region52: #{tpu_custom_call.1} parent=15 // pred_fallthru
          _
      $region16: #{tpu_custom_call.1} parent=5 // pred_fallthru
        _
      %p425 = scmp.le.s32.totalorder 1, %s21
      %p426 = scmp.lt.s32.totalorder %s21, 3
      %p427 = pnand %p425, %p426
      %p428 = pneg %p427
      // Predicated region
      $region53: #{tpu_custom_call.1} parent=5 // pred_check
        _
      $region54: #{tpu_custom_call.1} parent=5 // pred_check_branch
        %430 = sbr.rel (%p427) target = $region56
      $region55: #{tpu_custom_call.1} parent=5 // pred_region
        %s431 = ssub.s32 %s21, 1
        %s432 = sand.u32 %s100, 1
        %s433 = scalar_lea.sflag [#allocation5], %s432
        %s434 = sand.u32 %s100, 1
        %s435 = smul.addr %s434, 64
        %s436 = scalar_lea.vmem [#allocation4], %s435
        // Predicated region
        $region57: #{tpu_custom_call.1} parent=55 // pred_check
          %p437 = pneg %p113
        $region58: #{tpu_custom_call.1} parent=55 // pred_check_branch
          %439 = sbr.rel (%p437) target = $region60
        $region59: #{tpu_custom_call.1} parent=55 // pred_region
          %440 = dma.done %s433, 1024
        $region60: #{tpu_custom_call.1} parent=55 // pred_fallthru
          _
        %s441 = sand.u32 %s26, 1
        %s442 = scalar_lea.sflag [#allocation7], %s441
        %s443 = sand.u32 %s178, 1
        %s444 = smul.addr %s443, 64
        %s445 = scalar_lea.vmem [#allocation6], %s444
        // Predicated region
        $region61: #{tpu_custom_call.1} parent=55 // pred_check
          %p446 = pneg %p191
        $region62: #{tpu_custom_call.1} parent=55 // pred_check_branch
          %448 = sbr.rel (%p446) target = $region64
        $region63: #{tpu_custom_call.1} parent=55 // pred_region
          %449 = dma.done %s442, 1024
        $region64: #{tpu_custom_call.1} parent=55 // pred_fallthru
          _
        %s450 = sand.u32 %s26, 1
        %s451 = scalar_lea.sflag [#allocation7], %s450
        %s452 = sand.u32 %s204, 1
        %s453 = smul.addr %s452, 64
        %s454 = scalar_lea.vmem [#allocation8], %s453
        // Predicated region
        $region65: #{tpu_custom_call.1} parent=55 // pred_check
          %p455 = pneg %p217
        $region66: #{tpu_custom_call.1} parent=55 // pred_check_branch
          %457 = sbr.rel (%p455) target = $region68
        $region67: #{tpu_custom_call.1} parent=55 // pred_region
          %458 = dma.done %s451, 1024
        $region68: #{tpu_custom_call.1} parent=55 // pred_fallthru
          _
        %p459 = scmp.lt.s32.totalorder %s30, 1
        %s460 = scalar_select %p459, %s30, 1
        %p461 = scmp.lt.s32.totalorder %s31, 0
        %s462 = scalar_select %p461, %s31, 0
        %s463 = smul.addr %s462, 8
        %s464 = smul.addr %s460, 8
        %s465 = sadd.s32 %s463, %s464
        %s466 = smul.addr %s465, 4
        %s467 = scalar_lea.vmem %s0, %s466
        %p468 = pneg %p61
        %p469 = pneg %p58
        %p470 = scmp.lt.s32.totalorder %s30, 1
        %s471 = scalar_select %p470, %s30, 1
        %s472 = smul.addr %s471, 4
        %s473 = smul.addr %s472, 4
        %s474 = scalar_lea.vmem %s1, %s473
        %p475 = pneg %p87
        %p476 = pneg %p84
        %s477 = sand.u32 %s100, 1
        %s478 = scalar_lea.sflag [#allocation5], %s477
        %s479 = sand.u32 %s100, 1
        %s480 = smul.addr %s479, 64
        %s481 = scalar_lea.vmem [#allocation4], %s480
        %p482 = pneg %p113
        %p483 = pneg %p110
        %p484 = scmp.lt.s32.totalorder %s30, 1
        %s485 = scalar_select %p484, %s30, 1
        %s486 = smul.addr %s485, 2
        %s487 = scalar_lea.vmem %s3, %s486
        %p488 = pneg %p139
        %p489 = pneg %p136
        %p490 = scmp.lt.s32.totalorder %s30, 1
        %s491 = scalar_select %p490, %s30, 1
        %s492 = scalar_lea.vmem %s4, %s491
        %p493 = pneg %p165
        %p494 = pneg %p162
        %s495 = sand.u32 %s26, 1
        %s496 = scalar_lea.sflag [#allocation7], %s495
        %s497 = sand.u32 %s178, 1
        %s498 = smul.addr %s497, 64
        %s499 = scalar_lea.vmem [#allocation6], %s498
        %p500 = pneg %p191
        %p501 = pneg %p188
        %s502 = sand.u32 %s26, 1
        %s503 = scalar_lea.sflag [#allocation7], %s502
        %s504 = sand.u32 %s204, 1
        %s505 = smul.addr %s504, 64
        %s506 = scalar_lea.vmem [#allocation8], %s505
        %p507 = pneg %p217
        %p508 = pneg %p214
        %p509 = scmp.lt.s32.totalorder %s30, 1
        %s510 = scalar_select %p509, %s30, 1
        %s511 = smul.addr %s510, 2
        %s512 = scalar_lea.vmem %s7, %s511
        %p513 = pneg %p243
        %p514 = pneg %p240
        %p515 = scmp.lt.s32.totalorder %s30, 1
        %s516 = scalar_select %p515, %s30, 1
        %s517 = scalar_lea.vmem %s8, %s516
        %p518 = pneg %p269
        %p519 = pneg %p266
        %p520 = pneg %p297
        %p521 = pneg %p294
        %p522 = scmp.lt.s32.totalorder %s30, 1
        %s523 = scalar_select %p522, %s30, 1
        %p524 = scmp.lt.s32.totalorder %s31, 0
        %s525 = scalar_select %p524, %s31, 0
        %s526 = smul.addr %s525, 8
        %s527 = smul.addr %s523, 8
        %s528 = sadd.s32 %s526, %s527
        %s529 = smul.addr %s528, 8
        %s530 = scalar_lea.vmem %s9, %s529
        %p531 = scmp.lt.s32.totalorder %s30, 1
        %s532 = scalar_select %p531, %s30, 1
        %p533 = scmp.lt.s32.totalorder %s31, 0
        %s534 = scalar_select %p533, %s31, 0
        %s535 = smul.addr %s534, 8
        %s536 = smul.addr %s532, 8
        %s537 = sadd.s32 %s535, %s536
        %s538 = smul.addr %s537, 4
        %s539 = scalar_lea.vmem %s0, %s538
        %p540 = scmp.lt.s32.totalorder %s30, 1
        %s541 = scalar_select %p540, %s30, 1
        %s542 = smul.addr %s541, 4
        %s543 = smul.addr %s542, 4
        %s544 = scalar_lea.vmem %s1, %s543
        %p545 = scmp.lt.s32.totalorder %s30, 1
        %s546 = scalar_select %p545, %s30, 1
        %s547 = smul.addr %s546, 2
        %s548 = scalar_lea.vmem %s3, %s547
        %p549 = scmp.lt.s32.totalorder %s30, 1
        %s550 = scalar_select %p549, %s30, 1
        %s551 = scalar_lea.vmem %s4, %s550
        %p552 = scmp.lt.s32.totalorder %s30, 1
        %s553 = scalar_select %p552, %s30, 1
        %s554 = smul.addr %s553, 2
        %s555 = scalar_lea.vmem %s7, %s554
        %p556 = scmp.lt.s32.totalorder %s30, 1
        %s557 = scalar_select %p556, %s30, 1
        %s558 = scalar_lea.vmem %s8, %s557
        %p559 = scmp.lt.s32.totalorder %s30, 1
        %s560 = scalar_select %p559, %s30, 1
        %p561 = scmp.lt.s32.totalorder %s31, 0
        %s562 = scalar_select %p561, %s31, 0
        %s563 = smul.addr %s562, 8
        %s564 = smul.addr %s560, 8
        %s565 = sadd.s32 %s563, %s564
        %s566 = smul.addr %s565, 8
        %s567 = scalar_lea.vmem %s9, %s566
        %v569 = vld [vmem:[%s539] sm:$0xf]
        %v570 = vld [vmem:[%s539 + $0x4] sm:$0xf]
        %v571 = vld [vmem:[%s539 + $0x8] sm:$0xf]
        %v572 = vld [vmem:[%s539 + $0xc] sm:$0xf]
        %v573 = vld [vmem:[%s539 + $0x10] sm:$0xf]
        %v574 = vld [vmem:[%s539 + $0x14] sm:$0xf]
        %v575 = vld [vmem:[%s539 + $0x18] sm:$0xf]
        %v576 = vld [vmem:[%s539 + $0x1c] sm:$0xf]
        %v577 = vld [vmem:[%s544] sm:$0xff]
        %v578 = vld [vmem:[%s544 + $0x8] sm:$0xff]
        %v579 = vld [vmem:[%s548] sm:$0x3]
        %v581 = vlaneseq
        %v582 = vshrl.u32 %v581, 7
        %v583 = vsub.s32 0, %v582
        %v584 = vrot.slane %v579, %v583
        %v585 = vlaneseq
        %v586 = vshrl.u32 %v585, 7
        %v587 = vsub.s32 1, %v586
        %v588 = vrot.slane %v579, %v587
        %v599 = vunpack.c.l.b16 %v569
        %v600 = vunpack.c.l.b16 %v570
        %v601 = vunpack.c.l.b16 %v571
        %v602 = vunpack.c.l.b16 %v572
        %v603 = vunpack.c.l.b16 %v573
        %v604 = vunpack.c.l.b16 %v574
        %v605 = vunpack.c.l.b16 %v575
        %v606 = vunpack.c.l.b16 %v576
        %v607 = vpack.c.b16 %v600, %v599
        %v608 = vpack.c.b16 %v602, %v601
        %v609 = vpack.c.b16 %v604, %v603
        %v610 = vpack.c.b16 %v606, %v605
        %v613 = vunpack.c.l.b16 %v577
        %v614 = vunpack.c.h.b16 %v577
        %v615 = vunpack.c.l.b16 %v578
        %v616 = vunpack.c.h.b16 %v578
        %v617 = vpack.c.b16 %v615, %v613
        %v618 = vpack.c.b16 %v616, %v614
        %vm621 = vcmask 130048
        %v623 = vsel %vm621, %v607, 0
        %v626 = vsel %vm621, %v608, 0
        %v629 = vsel %vm621, %v609, 0
        %v632 = vsel %vm621, %v610, 0
        %634 = vmatprep.subr.bf16.mxu0 0
        %635 = vmatpush1.bf16.msra.mxu0 0
        %636 = vmatprep.subr.bf16.mxu0 0
        %637 = vmatpush1.bf16.msra.mxu0 0
        %638 = vmatprep.subr.bf16.mxu0 0
        %639 = vmatpush1.bf16.msra.mxu0 0
        %640 = vmatprep.subr.bf16.mxu0 0
        %641 = vmatpush1.bf16.msra.mxu0 0
        %642 = vmatprep.subr.bf16.mxu0 0
        %643 = vmatpush1.bf16.msra.mxu0 0
        %644 = vmatprep.subr.bf16.mxu0 0
        %645 = vmatpush1.bf16.msra.mxu0 0
        %646 = vmatprep.subr.bf16.mxu0 0
        %647 = vmatpush1.bf16.msra.mxu0 0
        %648 = vmatprep.subr.bf16.mxu0 %v618
        %649 = vmatpush1.bf16.msra.mxu0 %v617
        %650 = vmatprep.subr.bf16.mxu0 0
        %651 = vmatpush2.bf16.msra.mxu0 0
        %652 = vmatprep.subr.bf16.mxu0 0
        %653 = vmatpush2.bf16.msra.mxu0 0
        %654 = vmatprep.subr.bf16.mxu0 0
        %655 = vmatpush2.bf16.msra.mxu0 0
        %656 = vmatprep.subr.bf16.mxu0 0
        %657 = vmatpush2.bf16.msra.mxu0 0
        %658 = vmatprep.subr.bf16.mxu0 0
        %659 = vmatpush2.bf16.msra.mxu0 0
        %660 = vmatprep.subr.bf16.mxu0 0
        %661 = vmatpush2.bf16.msra.mxu0 0
        %662 = vmatprep.subr.bf16.mxu0 0
        %663 = vmatpush2.bf16.msra.mxu0 0
        %664 = vmatprep.subr.bf16.mxu0 0
        %665 = vmatpush2.bf16.msra.mxu0 0
        %666 = vmatprep.mubr.bf16.mxu0 0
        %667 = vmatmul.mubr.bf16.gmra.mxu0 %v623
        %v668 = vpop.f32.mrf.mxu0
        %v669 = vadd.f32 %v584, %v668
        %v670 = vpop.f32.mrf.mxu0
        %v671 = vadd.f32 %v588, %v670
        %v672 = vpop.f32.mrf.mxu0
        %v673 = vadd.f32 %v584, %v672
        %v674 = vpop.f32.mrf.mxu0
        %v675 = vadd.f32 %v588, %v674
        %676 = vmatprep.mubr.bf16.mxu0 0
        %677 = vmatmul.mubr.bf16.gmra.mxu0 %v626
        %v678 = vpop.f32.mrf.mxu0
        %v679 = vadd.f32 %v584, %v678
        %v680 = vpop.f32.mrf.mxu0
        %v681 = vadd.f32 %v588, %v680
        %v682 = vpop.f32.mrf.mxu0
        %v683 = vadd.f32 %v584, %v682
        %v684 = vpop.f32.mrf.mxu0
        %v685 = vadd.f32 %v588, %v684
        %686 = vmatprep.mubr.bf16.mxu0 0
        %687 = vmatmul.mubr.bf16.gmra.mxu0 %v629
        %v688 = vpop.f32.mrf.mxu0
        %v689 = vadd.f32 %v584, %v688
        %v690 = vpop.f32.mrf.mxu0
        %v691 = vadd.f32 %v588, %v690
        %v692 = vpop.f32.mrf.mxu0
        %v693 = vadd.f32 %v584, %v692
        %v694 = vpop.f32.mrf.mxu0
        %v695 = vadd.f32 %v588, %v694
        %696 = vmatprep.mubr.bf16.mxu0 0
        %697 = vmatmul.mubr.bf16.gmra.mxu0 %v632
        %v698 = vpop.f32.mrf.mxu0
        %v699 = vadd.f32 %v584, %v698
        %v700 = vpop.f32.mrf.mxu0
        %v701 = vadd.f32 %v588, %v700
        %v702 = vpop.f32.mrf.mxu0
        %v703 = vadd.f32 %v584, %v702
        %v704 = vpop.f32.mrf.mxu0
        %v705 = vadd.f32 %v588, %v704
        %706 = vdwg.mxu0
        %v707 = vld [vmem:[%s436] sm:$0xff]
        %v708 = vld [vmem:[%s436 + $0x8] sm:$0xff]
        %v709 = vld [vmem:[%s436 + $0x10] sm:$0xff]
        %v710 = vld [vmem:[%s436 + $0x18] sm:$0xff]
        %v711 = vld [vmem:[%s436 + $0x20] sm:$0xff]
        %v712 = vld [vmem:[%s436 + $0x28] sm:$0xff]
        %v713 = vld [vmem:[%s436 + $0x30] sm:$0xff]
        %v714 = vld [vmem:[%s436 + $0x38] sm:$0xff]
        %v715 = vld [vmem:[%s551] sm:$0x1]
        %v716 = vxor.u32 %v669, 2147483648
        %v717 = vxor.u32 %v673, 2147483648
        %v718 = vmul.f32 %v716, 1.442695
        %v719 = vpow.pop %v718
        %v720 = vmul.f32 %v717, 1.442695
        %v721 = vpow.pop %v720
        %v722 = vadd.f32 %v719, 1.0
        %v723 = vadd.f32 %v721, 1.0
        %v724 = vrcp.pop %v722
        %v725 = vmul.f32 1.0, %v724
        %v726 = vrcp.pop %v723
        %v727 = vmul.f32 1.0, %v726
        %v729 = vlaneseq
        %v730 = vshrl.u32 %v729, 7
        %v731 = vsub.s32 0, %v730
        %v732 = vrot.slane %v715, %v731
        %v734 = vmul.f32 %v725, %v732
        %v735 = vmul.f32 %v727, %v732
        %738 = vrot.lane.b32.xlu0 %v734, 64
        %v739 = vpop.permute.xlu0 %738
        %740 = vrot.lane.b32.xlu0 %v735, 64
        %v741 = vpop.permute.xlu0 %740
        %v744 = vadd.f32 %v669, %v739
        %v745 = vadd.f32 %v673, %v741
        %v746 = vtanh.pop %v744
        %v747 = vtanh.pop %v745
        %v748 = vsub.f32 1.0, %v725
        %v749 = vsub.f32 1.0, %v727
        %752 = vrot.lane.b32.xlu0 %v746, 96
        %v753 = vpop.permute.xlu0 %752
        %754 = vrot.lane.b32.xlu0 %v747, 96
        %v755 = vpop.permute.xlu0 %754
        %v758 = vmul.f32 %v748, %v753
        %v759 = vmul.f32 %v749, %v755
        %762 = vrot.lane.b32.xlu0 %v758, 96
        %v763 = vpop.permute.xlu0 %762
        %764 = vrot.lane.b32.xlu0 %v759, 96
        %v765 = vpop.permute.xlu0 %764
        %vm768 = vcmask 261120
        %769 = vst.msk [vmem:[#allocation2] sm:$0xff] %vm768, %v763
        %770 = vst.msk [vmem:[#allocation2 + $0x8] sm:$0xff] %vm768, %v765
        %v771 = vsel %vm768, %v763, 0
        %v773 = vsel %vm768, %v765, 0
        %775 = vmatprep.subr.mxu0 0.0
        %776 = vmatpush1.msra.mxu0 0.0
        %777 = vmatprep.subr.mxu0 0.0
        %778 = vmatpush1.msra.mxu0 0.0
        %779 = vmatprep.subr.mxu0 0.0
        %780 = vmatpush1.msra.mxu0 0.0
        %781 = vmatprep.subr.mxu0 0.0
        %782 = vmatpush1.msra.mxu0 0.0
        %783 = vmatprep.subr.mxu0 0.0
        %784 = vmatpush1.msra.mxu0 0.0
        %785 = vmatprep.subr.mxu0 0.0
        %786 = vmatpush1.msra.mxu0 0.0
        %787 = vmatprep.subr.mxu0 0.0
        %788 = vmatpush1.msra.mxu0 0.0
        %789 = vmatprep.subr.mxu0 0.0
        %790 = vmatpush1.msra.mxu0 0.0
        %791 = vmatprep.subr.mxu0 0.0
        %792 = vmatpush1.msra.mxu0 0.0
        %793 = vmatprep.subr.mxu0 0.0
        %794 = vmatpush1.msra.mxu0 0.0
        %795 = vmatprep.subr.mxu0 0.0
        %796 = vmatpush1.msra.mxu0 0.0
        %797 = vmatprep.subr.mxu0 0.0
        %798 = vmatpush1.msra.mxu0 0.0
        %799 = vmatprep.subr.mxu0 0.0
        %800 = vmatpush1.msra.mxu0 %v713
        %801 = vmatprep.subr.mxu0 0.0
        %802 = vmatpush1.msra.mxu0 %v711
        %803 = vmatprep.subr.mxu0 0.0
        %804 = vmatpush1.msra.mxu0 %v709
        %805 = vmatprep.subr.mxu0 0.0
        %806 = vmatpush1.msra.mxu0 %v707
        %807 = vmatprep.subr.mxu0 0.0
        %808 = vmatpush2.msra.mxu0 0.0
        %809 = vmatprep.subr.mxu0 0.0
        %810 = vmatpush2.msra.mxu0 0.0
        %811 = vmatprep.subr.mxu0 0.0
        %812 = vmatpush2.msra.mxu0 0.0
        %813 = vmatprep.subr.mxu0 0.0
        %814 = vmatpush2.msra.mxu0 0.0
        %815 = vmatprep.subr.mxu0 0.0
        %816 = vmatpush2.msra.mxu0 0.0
        %817 = vmatprep.subr.mxu0 0.0
        %818 = vmatpush2.msra.mxu0 0.0
        %819 = vmatprep.subr.mxu0 0.0
        %820 = vmatpush2.msra.mxu0 0.0
        %821 = vmatprep.subr.mxu0 0.0
        %822 = vmatpush2.msra.mxu0 0.0
        %823 = vmatprep.subr.mxu0 0.0
        %824 = vmatpush2.msra.mxu0 0.0
        %825 = vmatprep.subr.mxu0 0.0
        %826 = vmatpush2.msra.mxu0 0.0
        %827 = vmatprep.subr.mxu0 0.0
        %828 = vmatpush2.msra.mxu0 0.0
        %829 = vmatprep.subr.mxu0 0.0
        %830 = vmatpush2.msra.mxu0 0.0
        %831 = vmatprep.subr.mxu0 0.0
        %832 = vmatpush2.msra.mxu0 0.0
        %833 = vmatprep.subr.mxu0 0.0
        %834 = vmatpush2.msra.mxu0 0.0
        %835 = vmatprep.subr.mxu0 0.0
        %836 = vmatpush2.msra.mxu0 0.0
        %837 = vmatprep.subr.mxu0 0.0
        %838 = vmatpush2.msra.mxu0 0.0
        %839 = vmatprep.mubr.f32.mxu0 0.0
        %840 = vmatmul.mubr.f32.gmra.mxu0 %v771
        %v841 = vpop.f32.mrf.mxu0
        %v842 = vadd.f32 0.0, %v841
        %v843 = vpop.f32.mrf.mxu0
        %844 = vmatprep.mubr.f32.mxu0 0.0
        %845 = vmatmul.mubr.f32.gmra.mxu0 %v773
        %v846 = vpop.f32.mrf.mxu0
        %v847 = vadd.f32 0.0, %v846
        %v848 = vpop.f32.mrf.mxu0
        %849 = vdwg.mxu0
        %v850 = vadd.f32 %v679, %v842
        %v851 = vadd.f32 %v683, %v847
        %v852 = vxor.u32 %v850, 2147483648
        %v853 = vxor.u32 %v851, 2147483648
        %v854 = vmul.f32 %v852, 1.442695
        %v855 = vpow.pop %v854
        %v856 = vmul.f32 %v853, 1.442695
        %v857 = vpow.pop %v856
        %v858 = vadd.f32 %v855, 1.0
        %v859 = vadd.f32 %v857, 1.0
        %v860 = vrcp.pop %v858
        %v861 = vmul.f32 1.0, %v860
        %v862 = vrcp.pop %v859
        %v863 = vmul.f32 1.0, %v862
        %864 = vrot.lane.b32.xlu0 %v732, 64
        %v865 = vpop.permute.xlu0 %864
        %v867 = vadd.f32 %v842, %v865
        %v868 = vadd.f32 %v847, %v865
        %871 = vrot.lane.b32.xlu0 %v867, 64
        %v872 = vpop.permute.xlu0 %871
        %873 = vrot.lane.b32.xlu0 %v868, 64
        %v874 = vpop.permute.xlu0 %873
        %v877 = vmul.f32 %v861, %v872
        %v878 = vmul.f32 %v863, %v874
        %881 = vrot.lane.b32.xlu0 %v877, 64
        %v882 = vpop.permute.xlu0 %881
        %883 = vrot.lane.b32.xlu0 %v878, 64
        %v884 = vpop.permute.xlu0 %883
        %v887 = vadd.f32 %v679, %v882
        %v888 = vadd.f32 %v683, %v884
        %v889 = vtanh.pop %v887
        %v890 = vtanh.pop %v888
        %v891 = vsub.f32 1.0, %v861
        %v892 = vsub.f32 1.0, %v863
        %895 = vrot.lane.b32.xlu0 %v889, 96
        %v896 = vpop.permute.xlu0 %895
        %897 = vrot.lane.b32.xlu0 %v890, 96
        %v898 = vpop.permute.xlu0 %897
        %v901 = vmul.f32 %v891, %v896
        %v902 = vmul.f32 %v892, %v898
        %v903 = vmul.f32 %v861, %v758
        %v904 = vmul.f32 %v863, %v759
        %v905 = vadd.f32 %v901, %v903
        %v906 = vadd.f32 %v902, %v904
        %909 = vrot.lane.b32.xlu0 %v905, 96
        %v910 = vpop.permute.xlu0 %909
        %911 = vrot.lane.b32.xlu0 %v906, 96
        %v912 = vpop.permute.xlu0 %911
        %915 = vst.msk [vmem:[#allocation2 + $0x10] sm:$0xff] %vm768, %v910
        %916 = vst.msk [vmem:[#allocation2 + $0x18] sm:$0xff] %vm768, %v912
        %v917 = vsel %vm768, %v910, 0
        %v919 = vsel %vm768, %v912, 0
        %921 = vmatprep.subr.mxu0 0.0
        %922 = vmatpush1.msra.mxu0 0.0
        %923 = vmatprep.subr.mxu0 0.0
        %924 = vmatpush1.msra.mxu0 0.0
        %925 = vmatprep.subr.mxu0 0.0
        %926 = vmatpush1.msra.mxu0 0.0
        %927 = vmatprep.subr.mxu0 0.0
        %928 = vmatpush1.msra.mxu0 0.0
        %929 = vmatprep.subr.mxu0 0.0
        %930 = vmatpush1.msra.mxu0 0.0
        %931 = vmatprep.subr.mxu0 0.0
        %932 = vmatpush1.msra.mxu0 0.0
        %933 = vmatprep.subr.mxu0 0.0
        %934 = vmatpush1.msra.mxu0 0.0
        %935 = vmatprep.subr.mxu0 0.0
        %936 = vmatpush1.msra.mxu0 0.0
        %937 = vmatprep.subr.mxu0 0.0
        %938 = vmatpush1.msra.mxu0 0.0
        %939 = vmatprep.subr.mxu0 0.0
        %940 = vmatpush1.msra.mxu0 0.0
        %941 = vmatprep.subr.mxu0 0.0
        %942 = vmatpush1.msra.mxu0 0.0
        %943 = vmatprep.subr.mxu0 0.0
        %944 = vmatpush1.msra.mxu0 0.0
        %945 = vmatprep.subr.mxu0 0.0
        %946 = vmatpush1.msra.mxu0 %v713
        %947 = vmatprep.subr.mxu0 0.0
        %948 = vmatpush1.msra.mxu0 %v711
        %949 = vmatprep.subr.mxu0 0.0
        %950 = vmatpush1.msra.mxu0 %v709
        %951 = vmatprep.subr.mxu0 0.0
        %952 = vmatpush1.msra.mxu0 %v707
        %953 = vmatprep.subr.mxu0 0.0
        %954 = vmatpush2.msra.mxu0 0.0
        %955 = vmatprep.subr.mxu0 0.0
        %956 = vmatpush2.msra.mxu0 0.0
        %957 = vmatprep.subr.mxu0 0.0
        %958 = vmatpush2.msra.mxu0 0.0
        %959 = vmatprep.subr.mxu0 0.0
        %960 = vmatpush2.msra.mxu0 0.0
        %961 = vmatprep.subr.mxu0 0.0
        %962 = vmatpush2.msra.mxu0 0.0
        %963 = vmatprep.subr.mxu0 0.0
        %964 = vmatpush2.msra.mxu0 0.0
        %965 = vmatprep.subr.mxu0 0.0
        %966 = vmatpush2.msra.mxu0 0.0
        %967 = vmatprep.subr.mxu0 0.0
        %968 = vmatpush2.msra.mxu0 0.0
        %969 = vmatprep.subr.mxu0 0.0
        %970 = vmatpush2.msra.mxu0 0.0
        %971 = vmatprep.subr.mxu0 0.0
        %972 = vmatpush2.msra.mxu0 0.0
        %973 = vmatprep.subr.mxu0 0.0
        %974 = vmatpush2.msra.mxu0 0.0
        %975 = vmatprep.subr.mxu0 0.0
        %976 = vmatpush2.msra.mxu0 0.0
        %977 = vmatprep.subr.mxu0 0.0
        %978 = vmatpush2.msra.mxu0 0.0
        %979 = vmatprep.subr.mxu0 0.0
        %980 = vmatpush2.msra.mxu0 0.0
        %981 = vmatprep.subr.mxu0 0.0
        %982 = vmatpush2.msra.mxu0 0.0
        %983 = vmatprep.subr.mxu0 0.0
        %984 = vmatpush2.msra.mxu0 0.0
        %985 = vmatprep.mubr.f32.mxu0 0.0
        %986 = vmatmul.mubr.f32.gmra.mxu0 %v917
        %v987 = vpop.f32.mrf.mxu0
        %v988 = vadd.f32 0.0, %v987
        %v989 = vpop.f32.mrf.mxu0
        %990 = vmatprep.mubr.f32.mxu0 0.0
        %991 = vmatmul.mubr.f32.gmra.mxu0 %v919
        %v992 = vpop.f32.mrf.mxu0
        %v993 = vadd.f32 0.0, %v992
        %v994 = vpop.f32.mrf.mxu0
        %995 = vdwg.mxu0
        %v996 = vadd.f32 %v689, %v988
        %v997 = vadd.f32 %v693, %v993
        %v998 = vxor.u32 %v996, 2147483648
        %v999 = vxor.u32 %v997, 2147483648
        %v1000 = vmul.f32 %v998, 1.442695
        %v1001 = vpow.pop %v1000
        %v1002 = vmul.f32 %v999, 1.442695
        %v1003 = vpow.pop %v1002
        %v1004 = vadd.f32 %v1001, 1.0
        %v1005 = vadd.f32 %v1003, 1.0
        %v1006 = vrcp.pop %v1004
        %v1007 = vmul.f32 1.0, %v1006
        %v1008 = vrcp.pop %v1005
        %v1009 = vmul.f32 1.0, %v1008
        %v1010 = vadd.f32 %v988, %v865
        %v1011 = vadd.f32 %v993, %v865
        %1014 = vrot.lane.b32.xlu0 %v1010, 64
        %v1015 = vpop.permute.xlu0 %1014
        %1016 = vrot.lane.b32.xlu0 %v1011, 64
        %v1017 = vpop.permute.xlu0 %1016
        %v1020 = vmul.f32 %v1007, %v1015
        %v1021 = vmul.f32 %v1009, %v1017
        %1024 = vrot.lane.b32.xlu0 %v1020, 64
        %v1025 = vpop.permute.xlu0 %1024
        %1026 = vrot.lane.b32.xlu0 %v1021, 64
        %v1027 = vpop.permute.xlu0 %1026
        %v1030 = vadd.f32 %v689, %v1025
        %v1031 = vadd.f32 %v693, %v1027
        %v1032 = vtanh.pop %v1030
        %v1033 = vtanh.pop %v1031
        %v1034 = vsub.f32 1.0, %v1007
        %v1035 = vsub.f32 1.0, %v1009
        %1038 = vrot.lane.b32.xlu0 %v1032, 96
        %v1039 = vpop.permute.xlu0 %1038
        %1040 = vrot.lane.b32.xlu0 %v1033, 96
        %v1041 = vpop.permute.xlu0 %1040
        %v1044 = vmul.f32 %v1034, %v1039
        %v1045 = vmul.f32 %v1035, %v1041
        %v1046 = vmul.f32 %v1007, %v905
        %v1047 = vmul.f32 %v1009, %v906
        %v1048 = vadd.f32 %v1044, %v1046
        %v1049 = vadd.f32 %v1045, %v1047
        %1052 = vrot.lane.b32.xlu0 %v1048, 96
        %v1053 = vpop.permute.xlu0 %1052
        %1054 = vrot.lane.b32.xlu0 %v1049, 96
        %v1055 = vpop.permute.xlu0 %1054
        %1058 = vst.msk [vmem:[#allocation2 + $0x20] sm:$0xff] %vm768, %v1053
        %1059 = vst.msk [vmem:[#allocation2 + $0x28] sm:$0xff] %vm768, %v1055
        %v1060 = vsel %vm768, %v1053, 0
        %v1062 = vsel %vm768, %v1055, 0
        %1064 = vmatprep.subr.mxu0 0.0
        %1065 = vmatpush1.msra.mxu0 0.0
        %1066 = vmatprep.subr.mxu0 0.0
        %1067 = vmatpush1.msra.mxu0 0.0
        %1068 = vmatprep.subr.mxu0 0.0
        %1069 = vmatpush1.msra.mxu0 0.0
        %1070 = vmatprep.subr.mxu0 0.0
        %1071 = vmatpush1.msra.mxu0 0.0
        %1072 = vmatprep.subr.mxu0 0.0
        %1073 = vmatpush1.msra.mxu0 0.0
        %1074 = vmatprep.subr.mxu0 0.0
        %1075 = vmatpush1.msra.mxu0 0.0
        %1076 = vmatprep.subr.mxu0 0.0
        %1077 = vmatpush1.msra.mxu0 0.0
        %1078 = vmatprep.subr.mxu0 0.0
        %1079 = vmatpush1.msra.mxu0 0.0
        %1080 = vmatprep.subr.mxu0 0.0
        %1081 = vmatpush1.msra.mxu0 0.0
        %1082 = vmatprep.subr.mxu0 0.0
        %1083 = vmatpush1.msra.mxu0 0.0
        %1084 = vmatprep.subr.mxu0 0.0
        %1085 = vmatpush1.msra.mxu0 0.0
        %1086 = vmatprep.subr.mxu0 0.0
        %1087 = vmatpush1.msra.mxu0 0.0
        %1088 = vmatprep.subr.mxu0 0.0
        %1089 = vmatpush1.msra.mxu0 %v713
        %1090 = vmatprep.subr.mxu0 0.0
        %1091 = vmatpush1.msra.mxu0 %v711
        %1092 = vmatprep.subr.mxu0 0.0
        %1093 = vmatpush1.msra.mxu0 %v709
        %1094 = vmatprep.subr.mxu0 0.0
        %1095 = vmatpush1.msra.mxu0 %v707
        %1096 = vmatprep.subr.mxu0 0.0
        %1097 = vmatpush2.msra.mxu0 0.0
        %1098 = vmatprep.subr.mxu0 0.0
        %1099 = vmatpush2.msra.mxu0 0.0
        %1100 = vmatprep.subr.mxu0 0.0
        %1101 = vmatpush2.msra.mxu0 0.0
        %1102 = vmatprep.subr.mxu0 0.0
        %1103 = vmatpush2.msra.mxu0 0.0
        %1104 = vmatprep.subr.mxu0 0.0
        %1105 = vmatpush2.msra.mxu0 0.0
        %1106 = vmatprep.subr.mxu0 0.0
        %1107 = vmatpush2.msra.mxu0 0.0
        %1108 = vmatprep.subr.mxu0 0.0
        %1109 = vmatpush2.msra.mxu0 0.0
        %1110 = vmatprep.subr.mxu0 0.0
        %1111 = vmatpush2.msra.mxu0 0.0
        %1112 = vmatprep.subr.mxu0 0.0
        %1113 = vmatpush2.msra.mxu0 0.0
        %1114 = vmatprep.subr.mxu0 0.0
        %1115 = vmatpush2.msra.mxu0 0.0
        %1116 = vmatprep.subr.mxu0 0.0
        %1117 = vmatpush2.msra.mxu0 0.0
        %1118 = vmatprep.subr.mxu0 0.0
        %1119 = vmatpush2.msra.mxu0 0.0
        %1120 = vmatprep.subr.mxu0 0.0
        %1121 = vmatpush2.msra.mxu0 0.0
        %1122 = vmatprep.subr.mxu0 0.0
        %1123 = vmatpush2.msra.mxu0 0.0
        %1124 = vmatprep.subr.mxu0 0.0
        %1125 = vmatpush2.msra.mxu0 0.0
        %1126 = vmatprep.subr.mxu0 0.0
        %1127 = vmatpush2.msra.mxu0 0.0
        %1128 = vmatprep.mubr.f32.mxu0 0.0
        %1129 = vmatmul.mubr.f32.gmra.mxu0 %v1060
        %v1130 = vpop.f32.mrf.mxu0
        %v1131 = vadd.f32 0.0, %v1130
        %v1132 = vpop.f32.mrf.mxu0
        %1133 = vmatprep.mubr.f32.mxu0 0.0
        %1134 = vmatmul.mubr.f32.gmra.mxu0 %v1062
        %v1135 = vpop.f32.mrf.mxu0
        %v1136 = vadd.f32 0.0, %v1135
        %v1137 = vpop.f32.mrf.mxu0
        %1138 = vdwg.mxu0
        %v1139 = vadd.f32 %v699, %v1131
        %v1140 = vadd.f32 %v703, %v1136
        %v1141 = vxor.u32 %v1139, 2147483648
        %v1142 = vxor.u32 %v1140, 2147483648
        %v1143 = vmul.f32 %v1141, 1.442695
        %v1144 = vpow.pop %v1143
        %v1145 = vmul.f32 %v1142, 1.442695
        %v1146 = vpow.pop %v1145
        %v1147 = vadd.f32 %v1144, 1.0
        %v1148 = vadd.f32 %v1146, 1.0
        %v1149 = vrcp.pop %v1147
        %v1150 = vmul.f32 1.0, %v1149
        %v1151 = vrcp.pop %v1148
        %v1152 = vmul.f32 1.0, %v1151
        %v1153 = vadd.f32 %v1131, %v865
        %v1154 = vadd.f32 %v1136, %v865
        %1157 = vrot.lane.b32.xlu0 %v1153, 64
        %v1158 = vpop.permute.xlu0 %1157
        %1159 = vrot.lane.b32.xlu0 %v1154, 64
        %v1160 = vpop.permute.xlu0 %1159
        %v1163 = vmul.f32 %v1150, %v1158
        %v1164 = vmul.f32 %v1152, %v1160
        %1167 = vrot.lane.b32.xlu0 %v1163, 64
        %v1168 = vpop.permute.xlu0 %1167
        %1169 = vrot.lane.b32.xlu0 %v1164, 64
        %v1170 = vpop.permute.xlu0 %1169
        %v1173 = vadd.f32 %v699, %v1168
        %v1174 = vadd.f32 %v703, %v1170
        %v1175 = vtanh.pop %v1173
        %v1176 = vtanh.pop %v1174
        %v1177 = vsub.f32 1.0, %v1150
        %v1178 = vsub.f32 1.0, %v1152
        %1181 = vrot.lane.b32.xlu0 %v1175, 96
        %v1182 = vpop.permute.xlu0 %1181
        %1183 = vrot.lane.b32.xlu0 %v1176, 96
        %v1184 = vpop.permute.xlu0 %1183
        %v1187 = vmul.f32 %v1177, %v1182
        %v1188 = vmul.f32 %v1178, %v1184
        %v1189 = vmul.f32 %v1150, %v1048
        %v1190 = vmul.f32 %v1152, %v1049
        %v1191 = vadd.f32 %v1187, %v1189
        %v1192 = vadd.f32 %v1188, %v1190
        %1195 = vrot.lane.b32.xlu0 %v1191, 96
        %v1196 = vpop.permute.xlu0 %1195
        %1197 = vrot.lane.b32.xlu0 %v1192, 96
        %v1198 = vpop.permute.xlu0 %1197
        %1201 = vst.msk [vmem:[#allocation2 + $0x30] sm:$0xff] %vm768, %v1196
        %1202 = vst.msk [vmem:[#allocation2 + $0x38] sm:$0xff] %vm768, %v1198
        %v1203 = vxor.u32 %v671, 2147483648
        %v1204 = vxor.u32 %v675, 2147483648
        %v1205 = vmul.f32 %v1203, 1.442695
        %v1206 = vpow.pop %v1205
        %v1207 = vmul.f32 %v1204, 1.442695
        %v1208 = vpow.pop %v1207
        %v1209 = vadd.f32 %v1206, 1.0
        %v1210 = vadd.f32 %v1208, 1.0
        %v1211 = vrcp.pop %v1209
        %v1212 = vmul.f32 1.0, %v1211
        %v1213 = vrcp.pop %v1210
        %v1214 = vmul.f32 1.0, %v1213
        %v1215 = vmul.f32 %v725, %v865
        %v1216 = vmul.f32 %v727, %v865
        %1219 = vrot.lane.b32.xlu0 %v1215, 64
        %v1220 = vpop.permute.xlu0 %1219
        %1221 = vrot.lane.b32.xlu0 %v1216, 64
        %v1222 = vpop.permute.xlu0 %1221
        %v1225 = vadd.f32 %v671, %v1220
        %v1226 = vadd.f32 %v675, %v1222
        %v1227 = vtanh.pop %v1225
        %v1228 = vtanh.pop %v1226
        %v1229 = vsub.f32 1.0, %v1212
        %v1230 = vsub.f32 1.0, %v1214
        %1233 = vrot.lane.b32.xlu0 %v1227, 96
        %v1234 = vpop.permute.xlu0 %1233
        %1235 = vrot.lane.b32.xlu0 %v1228, 96
        %v1236 = vpop.permute.xlu0 %1235
        %v1239 = vmul.f32 %v1229, %v1234
        %v1240 = vmul.f32 %v1230, %v1236
        %1241 = vst.msk [vmem:[#allocation3] sm:$0xff] %vm768, %v1239
        %1242 = vst.msk [vmem:[#allocation3 + $0x8] sm:$0xff] %vm768, %v1240
        %1251 = vrot.lane.b32.xlu0 %v707, 32
        %v1252 = vpop.permute.xlu0 %1251
        %1253 = vrot.lane.b32.xlu0 %v708, 32
        %v1254 = vpop.permute.xlu0 %1253
        %1255 = vrot.lane.b32.xlu0 %v709, 32
        %v1256 = vpop.permute.xlu0 %1255
        %1257 = vrot.lane.b32.xlu0 %v710, 32
        %v1258 = vpop.permute.xlu0 %1257
        %1259 = vrot.lane.b32.xlu0 %v711, 32
        %v1260 = vpop.permute.xlu0 %1259
        %1261 = vrot.lane.b32.xlu0 %v712, 32
        %v1262 = vpop.permute.xlu0 %1261
        %1263 = vrot.lane.b32.xlu0 %v713, 32
        %v1264 = vpop.permute.xlu0 %1263
        %1265 = vrot.lane.b32.xlu0 %v714, 32
        %v1266 = vpop.permute.xlu0 %1265
        %v1267 = vsel %vm768, %v1252, %v1254
        %v1268 = vsel %vm768, %v1256, %v1258
        %v1269 = vsel %vm768, %v1260, %v1262
        %v1270 = vsel %vm768, %v1264, %v1266
        %v1276 = vsel %vm768, %v1239, 0
        %v1279 = vsel %vm768, %v1240, 0
        %1281 = vmatprep.subr.mxu0 0.0
        %1282 = vmatpush1.msra.mxu0 0.0
        %1283 = vmatprep.subr.mxu0 0.0
        %1284 = vmatpush1.msra.mxu0 0.0
        %1285 = vmatprep.subr.mxu0 0.0
        %1286 = vmatpush1.msra.mxu0 0.0
        %1287 = vmatprep.subr.mxu0 0.0
        %1288 = vmatpush1.msra.mxu0 0.0
        %1289 = vmatprep.subr.mxu0 0.0
        %1290 = vmatpush1.msra.mxu0 0.0
        %1291 = vmatprep.subr.mxu0 0.0
        %1292 = vmatpush1.msra.mxu0 0.0
        %1293 = vmatprep.subr.mxu0 0.0
        %1294 = vmatpush1.msra.mxu0 0.0
        %1295 = vmatprep.subr.mxu0 0.0
        %1296 = vmatpush1.msra.mxu0 0.0
        %1297 = vmatprep.subr.mxu0 0.0
        %1298 = vmatpush1.msra.mxu0 0.0
        %1299 = vmatprep.subr.mxu0 0.0
        %1300 = vmatpush1.msra.mxu0 0.0
        %1301 = vmatprep.subr.mxu0 0.0
        %1302 = vmatpush1.msra.mxu0 0.0
        %1303 = vmatprep.subr.mxu0 0.0
        %1304 = vmatpush1.msra.mxu0 0.0
        %1305 = vmatprep.subr.mxu0 0.0
        %1306 = vmatpush1.msra.mxu0 %v1270
        %1307 = vmatprep.subr.mxu0 0.0
        %1308 = vmatpush1.msra.mxu0 %v1269
        %1309 = vmatprep.subr.mxu0 0.0
        %1310 = vmatpush1.msra.mxu0 %v1268
        %1311 = vmatprep.subr.mxu0 0.0
        %1312 = vmatpush1.msra.mxu0 %v1267
        %1313 = vmatprep.subr.mxu0 0.0
        %1314 = vmatpush2.msra.mxu0 0.0
        %1315 = vmatprep.subr.mxu0 0.0
        %1316 = vmatpush2.msra.mxu0 0.0
        %1317 = vmatprep.subr.mxu0 0.0
        %1318 = vmatpush2.msra.mxu0 0.0
        %1319 = vmatprep.subr.mxu0 0.0
        %1320 = vmatpush2.msra.mxu0 0.0
        %1321 = vmatprep.subr.mxu0 0.0
        %1322 = vmatpush2.msra.mxu0 0.0
        %1323 = vmatprep.subr.mxu0 0.0
        %1324 = vmatpush2.msra.mxu0 0.0
        %1325 = vmatprep.subr.mxu0 0.0
        %1326 = vmatpush2.msra.mxu0 0.0
        %1327 = vmatprep.subr.mxu0 0.0
        %1328 = vmatpush2.msra.mxu0 0.0
        %1329 = vmatprep.subr.mxu0 0.0
        %1330 = vmatpush2.msra.mxu0 0.0
        %1331 = vmatprep.subr.mxu0 0.0
        %1332 = vmatpush2.msra.mxu0 0.0
        %1333 = vmatprep.subr.mxu0 0.0
        %1334 = vmatpush2.msra.mxu0 0.0
        %1335 = vmatprep.subr.mxu0 0.0
        %1336 = vmatpush2.msra.mxu0 0.0
        %1337 = vmatprep.subr.mxu0 0.0
        %1338 = vmatpush2.msra.mxu0 0.0
        %1339 = vmatprep.subr.mxu0 0.0
        %1340 = vmatpush2.msra.mxu0 0.0
        %1341 = vmatprep.subr.mxu0 0.0
        %1342 = vmatpush2.msra.mxu0 0.0
        %1343 = vmatprep.subr.mxu0 0.0
        %1344 = vmatpush2.msra.mxu0 0.0
        %1345 = vmatprep.mubr.f32.mxu0 0.0
        %1346 = vmatmul.mubr.f32.gmra.mxu0 %v1276
        %v1347 = vpop.f32.mrf.mxu0
        %v1348 = vadd.f32 0.0, %v1347
        %v1349 = vpop.f32.mrf.mxu0
        %1350 = vmatprep.mubr.f32.mxu0 0.0
        %1351 = vmatmul.mubr.f32.gmra.mxu0 %v1279
        %v1352 = vpop.f32.mrf.mxu0
        %v1353 = vadd.f32 0.0, %v1352
        %v1354 = vpop.f32.mrf.mxu0
        %1355 = vdwg.mxu0
        %1358 = vrot.lane.b32.xlu0 %v1348, 96
        %v1359 = vpop.permute.xlu0 %1358
        %1360 = vrot.lane.b32.xlu0 %v1353, 96
        %v1361 = vpop.permute.xlu0 %1360
        %v1364 = vadd.f32 %v679, %v1359
        %v1365 = vadd.f32 %v683, %v1361
        %v1366 = vxor.u32 %v1364, 2147483648
        %v1367 = vxor.u32 %v1365, 2147483648
        %v1368 = vmul.f32 %v1366, 1.442695
        %v1369 = vpow.pop %v1368
        %v1370 = vmul.f32 %v1367, 1.442695
        %v1371 = vpow.pop %v1370
        %v1372 = vadd.f32 %v1369, 1.0
        %v1373 = vadd.f32 %v1371, 1.0
        %v1374 = vrcp.pop %v1372
        %v1375 = vmul.f32 1.0, %v1374
        %v1376 = vrcp.pop %v1373
        %v1377 = vmul.f32 1.0, %v1376
        %v1378 = vadd.f32 %v681, %v1359
        %v1379 = vadd.f32 %v685, %v1361
        %v1380 = vxor.u32 %v1378, 2147483648
        %v1381 = vxor.u32 %v1379, 2147483648
        %v1382 = vmul.f32 %v1380, 1.442695
        %v1383 = vpow.pop %v1382
        %v1384 = vmul.f32 %v1381, 1.442695
        %v1385 = vpow.pop %v1384
        %v1386 = vadd.f32 %v1383, 1.0
        %v1387 = vadd.f32 %v1385, 1.0
        %v1388 = vrcp.pop %v1386
        %v1389 = vmul.f32 1.0, %v1388
        %v1390 = vrcp.pop %v1387
        %v1391 = vmul.f32 1.0, %v1390
        %1392 = vrot.lane.b32.xlu0 %v732, 32
        %v1393 = vpop.permute.xlu0 %1392
        %v1395 = vadd.f32 %v1348, %v1393
        %v1396 = vadd.f32 %v1353, %v1393
        %1399 = vrot.lane.b32.xlu0 %v1395, 32
        %v1400 = vpop.permute.xlu0 %1399
        %1401 = vrot.lane.b32.xlu0 %v1396, 32
        %v1402 = vpop.permute.xlu0 %1401
        %v1405 = vmul.f32 %v1375, %v1400
        %v1406 = vmul.f32 %v1377, %v1402
        %1409 = vrot.lane.b32.xlu0 %v1405, 64
        %v1410 = vpop.permute.xlu0 %1409
        %1411 = vrot.lane.b32.xlu0 %v1406, 64
        %v1412 = vpop.permute.xlu0 %1411
        %v1415 = vadd.f32 %v681, %v1410
        %v1416 = vadd.f32 %v685, %v1412
        %v1417 = vtanh.pop %v1415
        %v1418 = vtanh.pop %v1416
        %v1419 = vsub.f32 1.0, %v1389
        %v1420 = vsub.f32 1.0, %v1391
        %1423 = vrot.lane.b32.xlu0 %v1417, 96
        %v1424 = vpop.permute.xlu0 %1423
        %1425 = vrot.lane.b32.xlu0 %v1418, 96
        %v1426 = vpop.permute.xlu0 %1425
        %v1429 = vmul.f32 %v1419, %v1424
        %v1430 = vmul.f32 %v1420, %v1426
        %v1431 = vmul.f32 %v1389, %v1239
        %v1432 = vmul.f32 %v1391, %v1240
        %v1433 = vadd.f32 %v1429, %v1431
        %v1434 = vadd.f32 %v1430, %v1432
        %1435 = vst.msk [vmem:[#allocation3 + $0x10] sm:$0xff] %vm768, %v1433
        %1436 = vst.msk [vmem:[#allocation3 + $0x18] sm:$0xff] %vm768, %v1434
        %v1438 = vsel %vm768, %v1433, 0
        %v1441 = vsel %vm768, %v1434, 0
        %1443 = vmatprep.subr.mxu0 0.0
        %1444 = vmatpush1.msra.mxu0 0.0
        %1445 = vmatprep.subr.mxu0 0.0
        %1446 = vmatpush1.msra.mxu0 0.0
        %1447 = vmatprep.subr.mxu0 0.0
        %1448 = vmatpush1.msra.mxu0 0.0
        %1449 = vmatprep.subr.mxu0 0.0
        %1450 = vmatpush1.msra.mxu0 0.0
        %1451 = vmatprep.subr.mxu0 0.0
        %1452 = vmatpush1.msra.mxu0 0.0
        %1453 = vmatprep.subr.mxu0 0.0
        %1454 = vmatpush1.msra.mxu0 0.0
        %1455 = vmatprep.subr.mxu0 0.0
        %1456 = vmatpush1.msra.mxu0 0.0
        %1457 = vmatprep.subr.mxu0 0.0
        %1458 = vmatpush1.msra.mxu0 0.0
        %1459 = vmatprep.subr.mxu0 0.0
        %1460 = vmatpush1.msra.mxu0 0.0
        %1461 = vmatprep.subr.mxu0 0.0
        %1462 = vmatpush1.msra.mxu0 0.0
        %1463 = vmatprep.subr.mxu0 0.0
        %1464 = vmatpush1.msra.mxu0 0.0
        %1465 = vmatprep.subr.mxu0 0.0
        %1466 = vmatpush1.msra.mxu0 0.0
        %1467 = vmatprep.subr.mxu0 0.0
        %1468 = vmatpush1.msra.mxu0 %v1270
        %1469 = vmatprep.subr.mxu0 0.0
        %1470 = vmatpush1.msra.mxu0 %v1269
        %1471 = vmatprep.subr.mxu0 0.0
        %1472 = vmatpush1.msra.mxu0 %v1268
        %1473 = vmatprep.subr.mxu0 0.0
        %1474 = vmatpush1.msra.mxu0 %v1267
        %1475 = vmatprep.subr.mxu0 0.0
        %1476 = vmatpush2.msra.mxu0 0.0
        %1477 = vmatprep.subr.mxu0 0.0
        %1478 = vmatpush2.msra.mxu0 0.0
        %1479 = vmatprep.subr.mxu0 0.0
        %1480 = vmatpush2.msra.mxu0 0.0
        %1481 = vmatprep.subr.mxu0 0.0
        %1482 = vmatpush2.msra.mxu0 0.0
        %1483 = vmatprep.subr.mxu0 0.0
        %1484 = vmatpush2.msra.mxu0 0.0
        %1485 = vmatprep.subr.mxu0 0.0
        %1486 = vmatpush2.msra.mxu0 0.0
        %1487 = vmatprep.subr.mxu0 0.0
        %1488 = vmatpush2.msra.mxu0 0.0
        %1489 = vmatprep.subr.mxu0 0.0
        %1490 = vmatpush2.msra.mxu0 0.0
        %1491 = vmatprep.subr.mxu0 0.0
        %1492 = vmatpush2.msra.mxu0 0.0
        %1493 = vmatprep.subr.mxu0 0.0
        %1494 = vmatpush2.msra.mxu0 0.0
        %1495 = vmatprep.subr.mxu0 0.0
        %1496 = vmatpush2.msra.mxu0 0.0
        %1497 = vmatprep.subr.mxu0 0.0
        %1498 = vmatpush2.msra.mxu0 0.0
        %1499 = vmatprep.subr.mxu0 0.0
        %1500 = vmatpush2.msra.mxu0 0.0
        %1501 = vmatprep.subr.mxu0 0.0
        %1502 = vmatpush2.msra.mxu0 0.0
        %1503 = vmatprep.subr.mxu0 0.0
        %1504 = vmatpush2.msra.mxu0 0.0
        %1505 = vmatprep.subr.mxu0 0.0
        %1506 = vmatpush2.msra.mxu0 0.0
        %1507 = vmatprep.mubr.f32.mxu0 0.0
        %1508 = vmatmul.mubr.f32.gmra.mxu0 %v1438
        %v1509 = vpop.f32.mrf.mxu0
        %v1510 = vadd.f32 0.0, %v1509
        %v1511 = vpop.f32.mrf.mxu0
        %1512 = vmatprep.mubr.f32.mxu0 0.0
        %1513 = vmatmul.mubr.f32.gmra.mxu0 %v1441
        %v1514 = vpop.f32.mrf.mxu0
        %v1515 = vadd.f32 0.0, %v1514
        %v1516 = vpop.f32.mrf.mxu0
        %1517 = vdwg.mxu0
        %1520 = vrot.lane.b32.xlu0 %v1510, 96
        %v1521 = vpop.permute.xlu0 %1520
        %1522 = vrot.lane.b32.xlu0 %v1515, 96
        %v1523 = vpop.permute.xlu0 %1522
        %v1526 = vadd.f32 %v689, %v1521
        %v1527 = vadd.f32 %v693, %v1523
        %v1528 = vxor.u32 %v1526, 2147483648
        %v1529 = vxor.u32 %v1527, 2147483648
        %v1530 = vmul.f32 %v1528, 1.442695
        %v1531 = vpow.pop %v1530
        %v1532 = vmul.f32 %v1529, 1.442695
        %v1533 = vpow.pop %v1532
        %v1534 = vadd.f32 %v1531, 1.0
        %v1535 = vadd.f32 %v1533, 1.0
        %v1536 = vrcp.pop %v1534
        %v1537 = vmul.f32 1.0, %v1536
        %v1538 = vrcp.pop %v1535
        %v1539 = vmul.f32 1.0, %v1538
        %v1540 = vadd.f32 %v691, %v1521
        %v1541 = vadd.f32 %v695, %v1523
        %v1542 = vxor.u32 %v1540, 2147483648
        %v1543 = vxor.u32 %v1541, 2147483648
        %v1544 = vmul.f32 %v1542, 1.442695
        %v1545 = vpow.pop %v1544
        %v1546 = vmul.f32 %v1543, 1.442695
        %v1547 = vpow.pop %v1546
        %v1548 = vadd.f32 %v1545, 1.0
        %v1549 = vadd.f32 %v1547, 1.0
        %v1550 = vrcp.pop %v1548
        %v1551 = vmul.f32 1.0, %v1550
        %v1552 = vrcp.pop %v1549
        %v1553 = vmul.f32 1.0, %v1552
        %v1554 = vadd.f32 %v1510, %v1393
        %v1555 = vadd.f32 %v1515, %v1393
        %1558 = vrot.lane.b32.xlu0 %v1554, 32
        %v1559 = vpop.permute.xlu0 %1558
        %1560 = vrot.lane.b32.xlu0 %v1555, 32
        %v1561 = vpop.permute.xlu0 %1560
        %v1564 = vmul.f32 %v1537, %v1559
        %v1565 = vmul.f32 %v1539, %v1561
        %1568 = vrot.lane.b32.xlu0 %v1564, 64
        %v1569 = vpop.permute.xlu0 %1568
        %1570 = vrot.lane.b32.xlu0 %v1565, 64
        %v1571 = vpop.permute.xlu0 %1570
        %v1574 = vadd.f32 %v691, %v1569
        %v1575 = vadd.f32 %v695, %v1571
        %v1576 = vtanh.pop %v1574
        %v1577 = vtanh.pop %v1575
        %v1578 = vsub.f32 1.0, %v1551
        %v1579 = vsub.f32 1.0, %v1553
        %1582 = vrot.lane.b32.xlu0 %v1576, 96
        %v1583 = vpop.permute.xlu0 %1582
        %1584 = vrot.lane.b32.xlu0 %v1577, 96
        %v1585 = vpop.permute.xlu0 %1584
        %v1588 = vmul.f32 %v1578, %v1583
        %v1589 = vmul.f32 %v1579, %v1585
        %v1590 = vmul.f32 %v1551, %v1433
        %v1591 = vmul.f32 %v1553, %v1434
        %v1592 = vadd.f32 %v1588, %v1590
        %v1593 = vadd.f32 %v1589, %v1591
        %1594 = vst.msk [vmem:[#allocation3 + $0x20] sm:$0xff] %vm768, %v1592
        %1595 = vst.msk [vmem:[#allocation3 + $0x28] sm:$0xff] %vm768, %v1593
        %v1597 = vsel %vm768, %v1592, 0
        %v1600 = vsel %vm768, %v1593, 0
        %1602 = vmatprep.subr.mxu0 0.0
        %1603 = vmatpush1.msra.mxu0 0.0
        %1604 = vmatprep.subr.mxu0 0.0
        %1605 = vmatpush1.msra.mxu0 0.0
        %1606 = vmatprep.subr.mxu0 0.0
        %1607 = vmatpush1.msra.mxu0 0.0
        %1608 = vmatprep.subr.mxu0 0.0
        %1609 = vmatpush1.msra.mxu0 0.0
        %1610 = vmatprep.subr.mxu0 0.0
        %1611 = vmatpush1.msra.mxu0 0.0
        %1612 = vmatprep.subr.mxu0 0.0
        %1613 = vmatpush1.msra.mxu0 0.0
        %1614 = vmatprep.subr.mxu0 0.0
        %1615 = vmatpush1.msra.mxu0 0.0
        %1616 = vmatprep.subr.mxu0 0.0
        %1617 = vmatpush1.msra.mxu0 0.0
        %1618 = vmatprep.subr.mxu0 0.0
        %1619 = vmatpush1.msra.mxu0 0.0
        %1620 = vmatprep.subr.mxu0 0.0
        %1621 = vmatpush1.msra.mxu0 0.0
        %1622 = vmatprep.subr.mxu0 0.0
        %1623 = vmatpush1.msra.mxu0 0.0
        %1624 = vmatprep.subr.mxu0 0.0
        %1625 = vmatpush1.msra.mxu0 0.0
        %1626 = vmatprep.subr.mxu0 0.0
        %1627 = vmatpush1.msra.mxu0 %v1270
        %1628 = vmatprep.subr.mxu0 0.0
        %1629 = vmatpush1.msra.mxu0 %v1269
        %1630 = vmatprep.subr.mxu0 0.0
        %1631 = vmatpush1.msra.mxu0 %v1268
        %1632 = vmatprep.subr.mxu0 0.0
        %1633 = vmatpush1.msra.mxu0 %v1267
        %1634 = vmatprep.subr.mxu0 0.0
        %1635 = vmatpush2.msra.mxu0 0.0
        %1636 = vmatprep.subr.mxu0 0.0
        %1637 = vmatpush2.msra.mxu0 0.0
        %1638 = vmatprep.subr.mxu0 0.0
        %1639 = vmatpush2.msra.mxu0 0.0
        %1640 = vmatprep.subr.mxu0 0.0
        %1641 = vmatpush2.msra.mxu0 0.0
        %1642 = vmatprep.subr.mxu0 0.0
        %1643 = vmatpush2.msra.mxu0 0.0
        %1644 = vmatprep.subr.mxu0 0.0
        %1645 = vmatpush2.msra.mxu0 0.0
        %1646 = vmatprep.subr.mxu0 0.0
        %1647 = vmatpush2.msra.mxu0 0.0
        %1648 = vmatprep.subr.mxu0 0.0
        %1649 = vmatpush2.msra.mxu0 0.0
        %1650 = vmatprep.subr.mxu0 0.0
        %1651 = vmatpush2.msra.mxu0 0.0
        %1652 = vmatprep.subr.mxu0 0.0
        %1653 = vmatpush2.msra.mxu0 0.0
        %1654 = vmatprep.subr.mxu0 0.0
        %1655 = vmatpush2.msra.mxu0 0.0
        %1656 = vmatprep.subr.mxu0 0.0
        %1657 = vmatpush2.msra.mxu0 0.0
        %1658 = vmatprep.subr.mxu0 0.0
        %1659 = vmatpush2.msra.mxu0 0.0
        %1660 = vmatprep.subr.mxu0 0.0
        %1661 = vmatpush2.msra.mxu0 0.0
        %1662 = vmatprep.subr.mxu0 0.0
        %1663 = vmatpush2.msra.mxu0 0.0
        %1664 = vmatprep.subr.mxu0 0.0
        %1665 = vmatpush2.msra.mxu0 0.0
        %1666 = vmatprep.mubr.f32.mxu0 0.0
        %1667 = vmatmul.mubr.f32.gmra.mxu0 %v1597
        %v1668 = vpop.f32.mrf.mxu0
        %v1669 = vadd.f32 0.0, %v1668
        %v1670 = vpop.f32.mrf.mxu0
        %1671 = vmatprep.mubr.f32.mxu0 0.0
        %1672 = vmatmul.mubr.f32.gmra.mxu0 %v1600
        %v1673 = vpop.f32.mrf.mxu0
        %v1674 = vadd.f32 0.0, %v1673
        %v1675 = vpop.f32.mrf.mxu0
        %1676 = vdwg.mxu0
        %1679 = vrot.lane.b32.xlu0 %v1669, 96
        %v1680 = vpop.permute.xlu0 %1679
        %1681 = vrot.lane.b32.xlu0 %v1674, 96
        %v1682 = vpop.permute.xlu0 %1681
        %v1685 = vadd.f32 %v699, %v1680
        %v1686 = vadd.f32 %v703, %v1682
        %v1687 = vxor.u32 %v1685, 2147483648
        %v1688 = vxor.u32 %v1686, 2147483648
        %v1689 = vmul.f32 %v1687, 1.442695
        %v1690 = vpow.pop %v1689
        %v1691 = vmul.f32 %v1688, 1.442695
        %v1692 = vpow.pop %v1691
        %v1693 = vadd.f32 %v1690, 1.0
        %v1694 = vadd.f32 %v1692, 1.0
        %v1695 = vrcp.pop %v1693
        %v1696 = vmul.f32 1.0, %v1695
        %v1697 = vrcp.pop %v1694
        %v1698 = vmul.f32 1.0, %v1697
        %v1699 = vadd.f32 %v701, %v1680
        %v1700 = vadd.f32 %v705, %v1682
        %v1701 = vxor.u32 %v1699, 2147483648
        %v1702 = vxor.u32 %v1700, 2147483648
        %v1703 = vmul.f32 %v1701, 1.442695
        %v1704 = vpow.pop %v1703
        %v1705 = vmul.f32 %v1702, 1.442695
        %v1706 = vpow.pop %v1705
        %v1707 = vadd.f32 %v1704, 1.0
        %v1708 = vadd.f32 %v1706, 1.0
        %v1709 = vrcp.pop %v1707
        %v1710 = vmul.f32 1.0, %v1709
        %v1711 = vrcp.pop %v1708
        %v1712 = vmul.f32 1.0, %v1711
        %v1713 = vadd.f32 %v1669, %v1393
        %v1714 = vadd.f32 %v1674, %v1393
        %1717 = vrot.lane.b32.xlu0 %v1713, 32
        %v1718 = vpop.permute.xlu0 %1717
        %1719 = vrot.lane.b32.xlu0 %v1714, 32
        %v1720 = vpop.permute.xlu0 %1719
        %v1723 = vmul.f32 %v1696, %v1718
        %v1724 = vmul.f32 %v1698, %v1720
        %1727 = vrot.lane.b32.xlu0 %v1723, 64
        %v1728 = vpop.permute.xlu0 %1727
        %1729 = vrot.lane.b32.xlu0 %v1724, 64
        %v1730 = vpop.permute.xlu0 %1729
        %v1733 = vadd.f32 %v701, %v1728
        %v1734 = vadd.f32 %v705, %v1730
        %v1735 = vtanh.pop %v1733
        %v1736 = vtanh.pop %v1734
        %v1737 = vsub.f32 1.0, %v1710
        %v1738 = vsub.f32 1.0, %v1712
        %1741 = vrot.lane.b32.xlu0 %v1735, 96
        %v1742 = vpop.permute.xlu0 %1741
        %1743 = vrot.lane.b32.xlu0 %v1736, 96
        %v1744 = vpop.permute.xlu0 %1743
        %v1747 = vmul.f32 %v1737, %v1742
        %v1748 = vmul.f32 %v1738, %v1744
        %v1749 = vmul.f32 %v1710, %v1592
        %v1750 = vmul.f32 %v1712, %v1593
        %v1751 = vadd.f32 %v1747, %v1749
        %v1752 = vadd.f32 %v1748, %v1750
        %1753 = vst.msk [vmem:[#allocation3 + $0x30] sm:$0xff] %vm768, %v1751
        %1754 = vst.msk [vmem:[#allocation3 + $0x38] sm:$0xff] %vm768, %v1752
        %v1755 = vld [vmem:[%s454] sm:$0xff]
        %v1756 = vld [vmem:[%s454 + $0x8] sm:$0xff]
        %v1757 = vld [vmem:[%s454 + $0x10] sm:$0xff]
        %v1758 = vld [vmem:[%s454 + $0x18] sm:$0xff]
        %v1759 = vld [vmem:[%s454 + $0x20] sm:$0xff]
        %v1760 = vld [vmem:[%s454 + $0x28] sm:$0xff]
        %v1761 = vld [vmem:[%s454 + $0x30] sm:$0xff]
        %v1762 = vld [vmem:[%s454 + $0x38] sm:$0xff]
        %v1763 = vld [vmem:[%s558] sm:$0x1]
        %v1764 = vld [vmem:[%s445] sm:$0xff]
        %v1765 = vld [vmem:[%s445 + $0x8] sm:$0xff]
        %v1766 = vld [vmem:[%s445 + $0x10] sm:$0xff]
        %v1767 = vld [vmem:[%s445 + $0x18] sm:$0xff]
        %v1768 = vld [vmem:[%s445 + $0x20] sm:$0xff]
        %v1769 = vld [vmem:[%s445 + $0x28] sm:$0xff]
        %v1770 = vld [vmem:[%s445 + $0x30] sm:$0xff]
        %v1771 = vld [vmem:[%s445 + $0x38] sm:$0xff]
        %v1772 = vld [vmem:[%s555] sm:$0x3]
        %v1773 = vld [vmem:[#allocation2] sm:$0xff]
        %v1774 = vld [vmem:[#allocation2 + $0x8] sm:$0xff]
        %v1775 = vld [vmem:[#allocation2 + $0x10] sm:$0xff]
        %v1776 = vld [vmem:[#allocation2 + $0x18] sm:$0xff]
        %v1777 = vld [vmem:[#allocation2 + $0x20] sm:$0xff]
        %v1778 = vld [vmem:[#allocation2 + $0x28] sm:$0xff]
        %v1779 = vld [vmem:[#allocation2 + $0x30] sm:$0xff]
        %v1780 = vld [vmem:[#allocation2 + $0x38] sm:$0xff]
        %v1782 = vlaneseq
        %v1783 = vshrl.u32 %v1782, 7
        %v1784 = vsub.s32 0, %v1783
        %v1785 = vrot.slane %v1772, %v1784
        %v1788 = vsel %vm768, %v1773, 0
        %v1791 = vsel %vm768, %v1774, 0
        %v1794 = vsel %vm768, %v1775, 0
        %v1797 = vsel %vm768, %v1776, 0
        %v1800 = vsel %vm768, %v1777, 0
        %v1803 = vsel %vm768, %v1778, 0
        %v1806 = vsel %vm768, %v1779, 0
        %v1809 = vsel %vm768, %v1780, 0
        %1811 = vmatprep.subr.mxu0 0.0
        %1812 = vmatpush1.msra.mxu0 0.0
        %1813 = vmatprep.subr.mxu0 0.0
        %1814 = vmatpush1.msra.mxu0 0.0
        %1815 = vmatprep.subr.mxu0 0.0
        %1816 = vmatpush1.msra.mxu0 0.0
        %1817 = vmatprep.subr.mxu0 0.0
        %1818 = vmatpush1.msra.mxu0 0.0
        %1819 = vmatprep.subr.mxu0 0.0
        %1820 = vmatpush1.msra.mxu0 0.0
        %1821 = vmatprep.subr.mxu0 0.0
        %1822 = vmatpush1.msra.mxu0 0.0
        %1823 = vmatprep.subr.mxu0 0.0
        %1824 = vmatpush1.msra.mxu0 0.0
        %1825 = vmatprep.subr.mxu0 0.0
        %1826 = vmatpush1.msra.mxu0 0.0
        %1827 = vmatprep.subr.mxu0 0.0
        %1828 = vmatpush1.msra.mxu0 0.0
        %1829 = vmatprep.subr.mxu0 0.0
        %1830 = vmatpush1.msra.mxu0 0.0
        %1831 = vmatprep.subr.mxu0 0.0
        %1832 = vmatpush1.msra.mxu0 0.0
        %1833 = vmatprep.subr.mxu0 0.0
        %1834 = vmatpush1.msra.mxu0 0.0
        %1835 = vmatprep.subr.mxu0 0.0
        %1836 = vmatpush1.msra.mxu0 %v1770
        %1837 = vmatprep.subr.mxu0 0.0
        %1838 = vmatpush1.msra.mxu0 %v1768
        %1839 = vmatprep.subr.mxu0 0.0
        %1840 = vmatpush1.msra.mxu0 %v1766
        %1841 = vmatprep.subr.mxu0 0.0
        %1842 = vmatpush1.msra.mxu0 %v1764
        %1843 = vmatprep.subr.mxu0 0.0
        %1844 = vmatpush2.msra.mxu0 0.0
        %1845 = vmatprep.subr.mxu0 0.0
        %1846 = vmatpush2.msra.mxu0 0.0
        %1847 = vmatprep.subr.mxu0 0.0
        %1848 = vmatpush2.msra.mxu0 0.0
        %1849 = vmatprep.subr.mxu0 0.0
        %1850 = vmatpush2.msra.mxu0 0.0
        %1851 = vmatprep.subr.mxu0 0.0
        %1852 = vmatpush2.msra.mxu0 0.0
        %1853 = vmatprep.subr.mxu0 0.0
        %1854 = vmatpush2.msra.mxu0 0.0
        %1855 = vmatprep.subr.mxu0 0.0
        %1856 = vmatpush2.msra.mxu0 0.0
        %1857 = vmatprep.subr.mxu0 0.0
        %1858 = vmatpush2.msra.mxu0 0.0
        %1859 = vmatprep.subr.mxu0 0.0
        %1860 = vmatpush2.msra.mxu0 0.0
        %1861 = vmatprep.subr.mxu0 0.0
        %1862 = vmatpush2.msra.mxu0 0.0
        %1863 = vmatprep.subr.mxu0 0.0
        %1864 = vmatpush2.msra.mxu0 0.0
        %1865 = vmatprep.subr.mxu0 0.0
        %1866 = vmatpush2.msra.mxu0 0.0
        %1867 = vmatprep.subr.mxu0 0.0
        %1868 = vmatpush2.msra.mxu0 0.0
        %1869 = vmatprep.subr.mxu0 0.0
        %1870 = vmatpush2.msra.mxu0 0.0
        %1871 = vmatprep.subr.mxu0 0.0
        %1872 = vmatpush2.msra.mxu0 0.0
        %1873 = vmatprep.subr.mxu0 0.0
        %1874 = vmatpush2.msra.mxu0 0.0
        %1875 = vmatprep.mubr.f32.mxu0 0.0
        %1876 = vmatmul.mubr.f32.gmra.mxu0 %v1788
        %v1877 = vpop.f32.mrf.mxu0
        %v1878 = vadd.f32 %v1785, %v1877
        %v1879 = vpop.f32.mrf.mxu0
        %1880 = vmatprep.mubr.f32.mxu0 0.0
        %1881 = vmatmul.mubr.f32.gmra.mxu0 %v1791
        %v1882 = vpop.f32.mrf.mxu0
        %v1883 = vadd.f32 %v1785, %v1882
        %v1884 = vpop.f32.mrf.mxu0
        %1885 = vmatprep.mubr.f32.mxu0 0.0
        %1886 = vmatmul.mubr.f32.gmra.mxu0 %v1794
        %v1887 = vpop.f32.mrf.mxu0
        %v1888 = vadd.f32 %v1785, %v1887
        %v1889 = vpop.f32.mrf.mxu0
        %1890 = vmatprep.mubr.f32.mxu0 0.0
        %1891 = vmatmul.mubr.f32.gmra.mxu0 %v1797
        %v1892 = vpop.f32.mrf.mxu0
        %v1893 = vadd.f32 %v1785, %v1892
        %v1894 = vpop.f32.mrf.mxu0
        %1895 = vmatprep.mubr.f32.mxu0 0.0
        %1896 = vmatmul.mubr.f32.gmra.mxu0 %v1800
        %v1897 = vpop.f32.mrf.mxu0
        %v1898 = vadd.f32 %v1785, %v1897
        %v1899 = vpop.f32.mrf.mxu0
        %1900 = vmatprep.mubr.f32.mxu0 0.0
        %1901 = vmatmul.mubr.f32.gmra.mxu0 %v1803
        %v1902 = vpop.f32.mrf.mxu0
        %v1903 = vadd.f32 %v1785, %v1902
        %v1904 = vpop.f32.mrf.mxu0
        %1905 = vmatprep.mubr.f32.mxu0 0.0
        %1906 = vmatmul.mubr.f32.gmra.mxu0 %v1806
        %v1907 = vpop.f32.mrf.mxu0
        %v1908 = vadd.f32 %v1785, %v1907
        %v1909 = vpop.f32.mrf.mxu0
        %1910 = vmatprep.mubr.f32.mxu0 0.0
        %1911 = vmatmul.mubr.f32.gmra.mxu0 %v1809
        %v1912 = vpop.f32.mrf.mxu0
        %v1913 = vadd.f32 %v1785, %v1912
        %v1914 = vpop.f32.mrf.mxu0
        %1915 = vdwg.mxu0
        %v1916 = vxor.u32 %v1878, 2147483648
        %v1917 = vxor.u32 %v1883, 2147483648
        %v1918 = vmul.f32 %v1916, 1.442695
        %v1919 = vpow.pop %v1918
        %v1920 = vmul.f32 %v1917, 1.442695
        %v1921 = vpow.pop %v1920
        %v1922 = vadd.f32 %v1919, 1.0
        %v1923 = vadd.f32 %v1921, 1.0
        %v1924 = vrcp.pop %v1922
        %v1925 = vmul.f32 1.0, %v1924
        %v1926 = vrcp.pop %v1923
        %v1927 = vmul.f32 1.0, %v1926
        %v1929 = vlaneseq
        %v1930 = vshrl.u32 %v1929, 7
        %v1931 = vsub.s32 0, %v1930
        %v1932 = vrot.slane %v1763, %v1931
        %v1934 = vmul.f32 %v1925, %v1932
        %v1935 = vmul.f32 %v1927, %v1932
        %1938 = vrot.lane.b32.xlu0 %v1934, 64
        %v1939 = vpop.permute.xlu0 %1938
        %1940 = vrot.lane.b32.xlu0 %v1935, 64
        %v1941 = vpop.permute.xlu0 %1940
        %v1944 = vadd.f32 %v1878, %v1939
        %v1945 = vadd.f32 %v1883, %v1941
        %v1946 = vtanh.pop %v1944
        %v1947 = vtanh.pop %v1945
        %v1948 = vsub.f32 1.0, %v1925
        %v1949 = vsub.f32 1.0, %v1927
        %1952 = vrot.lane.b32.xlu0 %v1946, 96
        %v1953 = vpop.permute.xlu0 %1952
        %1954 = vrot.lane.b32.xlu0 %v1947, 96
        %v1955 = vpop.permute.xlu0 %1954
        %v1958 = vmul.f32 %v1948, %v1953
        %v1959 = vmul.f32 %v1949, %v1955
        %1962 = vrot.lane.b32.xlu0 %v1958, 96
        %v1963 = vpop.permute.xlu0 %1962
        %1964 = vrot.lane.b32.xlu0 %v1959, 96
        %v1965 = vpop.permute.xlu0 %1964
        %1968 = vst.msk [vmem:[#allocation2] sm:$0xff] %vm768, %v1963
        %1969 = vst.msk [vmem:[#allocation2 + $0x8] sm:$0xff] %vm768, %v1965
        %v1970 = vsel %vm768, %v1963, 0
        %v1972 = vsel %vm768, %v1965, 0
        %1974 = vmatprep.subr.mxu0 0.0
        %1975 = vmatpush1.msra.mxu0 0.0
        %1976 = vmatprep.subr.mxu0 0.0
        %1977 = vmatpush1.msra.mxu0 0.0
        %1978 = vmatprep.subr.mxu0 0.0
        %1979 = vmatpush1.msra.mxu0 0.0
        %1980 = vmatprep.subr.mxu0 0.0
        %1981 = vmatpush1.msra.mxu0 0.0
        %1982 = vmatprep.subr.mxu0 0.0
        %1983 = vmatpush1.msra.mxu0 0.0
        %1984 = vmatprep.subr.mxu0 0.0
        %1985 = vmatpush1.msra.mxu0 0.0
        %1986 = vmatprep.subr.mxu0 0.0
        %1987 = vmatpush1.msra.mxu0 0.0
        %1988 = vmatprep.subr.mxu0 0.0
        %1989 = vmatpush1.msra.mxu0 0.0
        %1990 = vmatprep.subr.mxu0 0.0
        %1991 = vmatpush1.msra.mxu0 0.0
        %1992 = vmatprep.subr.mxu0 0.0
        %1993 = vmatpush1.msra.mxu0 0.0
        %1994 = vmatprep.subr.mxu0 0.0
        %1995 = vmatpush1.msra.mxu0 0.0
        %1996 = vmatprep.subr.mxu0 0.0
        %1997 = vmatpush1.msra.mxu0 0.0
        %1998 = vmatprep.subr.mxu0 0.0
        %1999 = vmatpush1.msra.mxu0 %v1761
        %2000 = vmatprep.subr.mxu0 0.0
        %2001 = vmatpush1.msra.mxu0 %v1759
        %2002 = vmatprep.subr.mxu0 0.0
        %2003 = vmatpush1.msra.mxu0 %v1757
        %2004 = vmatprep.subr.mxu0 0.0
        %2005 = vmatpush1.msra.mxu0 %v1755
        %2006 = vmatprep.subr.mxu0 0.0
        %2007 = vmatpush2.msra.mxu0 0.0
        %2008 = vmatprep.subr.mxu0 0.0
        %2009 = vmatpush2.msra.mxu0 0.0
        %2010 = vmatprep.subr.mxu0 0.0
        %2011 = vmatpush2.msra.mxu0 0.0
        %2012 = vmatprep.subr.mxu0 0.0
        %2013 = vmatpush2.msra.mxu0 0.0
        %2014 = vmatprep.subr.mxu0 0.0
        %2015 = vmatpush2.msra.mxu0 0.0
        %2016 = vmatprep.subr.mxu0 0.0
        %2017 = vmatpush2.msra.mxu0 0.0
        %2018 = vmatprep.subr.mxu0 0.0
        %2019 = vmatpush2.msra.mxu0 0.0
        %2020 = vmatprep.subr.mxu0 0.0
        %2021 = vmatpush2.msra.mxu0 0.0
        %2022 = vmatprep.subr.mxu0 0.0
        %2023 = vmatpush2.msra.mxu0 0.0
        %2024 = vmatprep.subr.mxu0 0.0
        %2025 = vmatpush2.msra.mxu0 0.0
        %2026 = vmatprep.subr.mxu0 0.0
        %2027 = vmatpush2.msra.mxu0 0.0
        %2028 = vmatprep.subr.mxu0 0.0
        %2029 = vmatpush2.msra.mxu0 0.0
        %2030 = vmatprep.subr.mxu0 0.0
        %2031 = vmatpush2.msra.mxu0 0.0
        %2032 = vmatprep.subr.mxu0 0.0
        %2033 = vmatpush2.msra.mxu0 0.0
        %2034 = vmatprep.subr.mxu0 0.0
        %2035 = vmatpush2.msra.mxu0 0.0
        %2036 = vmatprep.subr.mxu0 0.0
        %2037 = vmatpush2.msra.mxu0 0.0
        %2038 = vmatprep.mubr.f32.mxu0 0.0
        %2039 = vmatmul.mubr.f32.gmra.mxu0 %v1970
        %v2040 = vpop.f32.mrf.mxu0
        %v2041 = vadd.f32 0.0, %v2040
        %v2042 = vpop.f32.mrf.mxu0
        %2043 = vmatprep.mubr.f32.mxu0 0.0
        %2044 = vmatmul.mubr.f32.gmra.mxu0 %v1972
        %v2045 = vpop.f32.mrf.mxu0
        %v2046 = vadd.f32 0.0, %v2045
        %v2047 = vpop.f32.mrf.mxu0
        %2048 = vdwg.mxu0
        %v2049 = vadd.f32 %v1888, %v2041
        %v2050 = vadd.f32 %v1893, %v2046
        %v2051 = vxor.u32 %v2049, 2147483648
        %v2052 = vxor.u32 %v2050, 2147483648
        %v2053 = vmul.f32 %v2051, 1.442695
        %v2054 = vpow.pop %v2053
        %v2055 = vmul.f32 %v2052, 1.442695
        %v2056 = vpow.pop %v2055
        %v2057 = vadd.f32 %v2054, 1.0
        %v2058 = vadd.f32 %v2056, 1.0
        %v2059 = vrcp.pop %v2057
        %v2060 = vmul.f32 1.0, %v2059
        %v2061 = vrcp.pop %v2058
        %v2062 = vmul.f32 1.0, %v2061
        %2063 = vrot.lane.b32.xlu0 %v1932, 64
        %v2064 = vpop.permute.xlu0 %2063
        %v2066 = vadd.f32 %v2041, %v2064
        %v2067 = vadd.f32 %v2046, %v2064
        %2070 = vrot.lane.b32.xlu0 %v2066, 64
        %v2071 = vpop.permute.xlu0 %2070
        %2072 = vrot.lane.b32.xlu0 %v2067, 64
        %v2073 = vpop.permute.xlu0 %2072
        %v2076 = vmul.f32 %v2060, %v2071
        %v2077 = vmul.f32 %v2062, %v2073
        %2080 = vrot.lane.b32.xlu0 %v2076, 64
        %v2081 = vpop.permute.xlu0 %2080
        %2082 = vrot.lane.b32.xlu0 %v2077, 64
        %v2083 = vpop.permute.xlu0 %2082
        %v2086 = vadd.f32 %v1888, %v2081
        %v2087 = vadd.f32 %v1893, %v2083
        %v2088 = vtanh.pop %v2086
        %v2089 = vtanh.pop %v2087
        %v2090 = vsub.f32 1.0, %v2060
        %v2091 = vsub.f32 1.0, %v2062
        %2094 = vrot.lane.b32.xlu0 %v2088, 96
        %v2095 = vpop.permute.xlu0 %2094
        %2096 = vrot.lane.b32.xlu0 %v2089, 96
        %v2097 = vpop.permute.xlu0 %2096
        %v2100 = vmul.f32 %v2090, %v2095
        %v2101 = vmul.f32 %v2091, %v2097
        %v2102 = vmul.f32 %v2060, %v1958
        %v2103 = vmul.f32 %v2062, %v1959
        %v2104 = vadd.f32 %v2100, %v2102
        %v2105 = vadd.f32 %v2101, %v2103
        %2108 = vrot.lane.b32.xlu0 %v2104, 96
        %v2109 = vpop.permute.xlu0 %2108
        %2110 = vrot.lane.b32.xlu0 %v2105, 96
        %v2111 = vpop.permute.xlu0 %2110
        %2114 = vst.msk [vmem:[#allocation2 + $0x10] sm:$0xff] %vm768, %v2109
        %2115 = vst.msk [vmem:[#allocation2 + $0x18] sm:$0xff] %vm768, %v2111
        %v2116 = vsel %vm768, %v2109, 0
        %v2118 = vsel %vm768, %v2111, 0
        %2120 = vmatprep.subr.mxu0 0.0
        %2121 = vmatpush1.msra.mxu0 0.0
        %2122 = vmatprep.subr.mxu0 0.0
        %2123 = vmatpush1.msra.mxu0 0.0
        %2124 = vmatprep.subr.mxu0 0.0
        %2125 = vmatpush1.msra.mxu0 0.0
        %2126 = vmatprep.subr.mxu0 0.0
        %2127 = vmatpush1.msra.mxu0 0.0
        %2128 = vmatprep.subr.mxu0 0.0
        %2129 = vmatpush1.msra.mxu0 0.0
        %2130 = vmatprep.subr.mxu0 0.0
        %2131 = vmatpush1.msra.mxu0 0.0
        %2132 = vmatprep.subr.mxu0 0.0
        %2133 = vmatpush1.msra.mxu0 0.0
        %2134 = vmatprep.subr.mxu0 0.0
        %2135 = vmatpush1.msra.mxu0 0.0
        %2136 = vmatprep.subr.mxu0 0.0
        %2137 = vmatpush1.msra.mxu0 0.0
        %2138 = vmatprep.subr.mxu0 0.0
        %2139 = vmatpush1.msra.mxu0 0.0
        %2140 = vmatprep.subr.mxu0 0.0
        %2141 = vmatpush1.msra.mxu0 0.0
        %2142 = vmatprep.subr.mxu0 0.0
        %2143 = vmatpush1.msra.mxu0 0.0
        %2144 = vmatprep.subr.mxu0 0.0
        %2145 = vmatpush1.msra.mxu0 %v1761
        %2146 = vmatprep.subr.mxu0 0.0
        %2147 = vmatpush1.msra.mxu0 %v1759
        %2148 = vmatprep.subr.mxu0 0.0
        %2149 = vmatpush1.msra.mxu0 %v1757
        %2150 = vmatprep.subr.mxu0 0.0
        %2151 = vmatpush1.msra.mxu0 %v1755
        %2152 = vmatprep.subr.mxu0 0.0
        %2153 = vmatpush2.msra.mxu0 0.0
        %2154 = vmatprep.subr.mxu0 0.0
        %2155 = vmatpush2.msra.mxu0 0.0
        %2156 = vmatprep.subr.mxu0 0.0
        %2157 = vmatpush2.msra.mxu0 0.0
        %2158 = vmatprep.subr.mxu0 0.0
        %2159 = vmatpush2.msra.mxu0 0.0
        %2160 = vmatprep.subr.mxu0 0.0
        %2161 = vmatpush2.msra.mxu0 0.0
        %2162 = vmatprep.subr.mxu0 0.0
        %2163 = vmatpush2.msra.mxu0 0.0
        %2164 = vmatprep.subr.mxu0 0.0
        %2165 = vmatpush2.msra.mxu0 0.0
        %2166 = vmatprep.subr.mxu0 0.0
        %2167 = vmatpush2.msra.mxu0 0.0
        %2168 = vmatprep.subr.mxu0 0.0
        %2169 = vmatpush2.msra.mxu0 0.0
        %2170 = vmatprep.subr.mxu0 0.0
        %2171 = vmatpush2.msra.mxu0 0.0
        %2172 = vmatprep.subr.mxu0 0.0
        %2173 = vmatpush2.msra.mxu0 0.0
        %2174 = vmatprep.subr.mxu0 0.0
        %2175 = vmatpush2.msra.mxu0 0.0
        %2176 = vmatprep.subr.mxu0 0.0
        %2177 = vmatpush2.msra.mxu0 0.0
        %2178 = vmatprep.subr.mxu0 0.0
        %2179 = vmatpush2.msra.mxu0 0.0
        %2180 = vmatprep.subr.mxu0 0.0
        %2181 = vmatpush2.msra.mxu0 0.0
        %2182 = vmatprep.subr.mxu0 0.0
        %2183 = vmatpush2.msra.mxu0 0.0
        %2184 = vmatprep.mubr.f32.mxu0 0.0
        %2185 = vmatmul.mubr.f32.gmra.mxu0 %v2116
        %v2186 = vpop.f32.mrf.mxu0
        %v2187 = vadd.f32 0.0, %v2186
        %v2188 = vpop.f32.mrf.mxu0
        %2189 = vmatprep.mubr.f32.mxu0 0.0
        %2190 = vmatmul.mubr.f32.gmra.mxu0 %v2118
        %v2191 = vpop.f32.mrf.mxu0
        %v2192 = vadd.f32 0.0, %v2191
        %v2193 = vpop.f32.mrf.mxu0
        %2194 = vdwg.mxu0
        %v2195 = vadd.f32 %v1898, %v2187
        %v2196 = vadd.f32 %v1903, %v2192
        %v2197 = vxor.u32 %v2195, 2147483648
        %v2198 = vxor.u32 %v2196, 2147483648
        %v2199 = vmul.f32 %v2197, 1.442695
        %v2200 = vpow.pop %v2199
        %v2201 = vmul.f32 %v2198, 1.442695
        %v2202 = vpow.pop %v2201
        %v2203 = vadd.f32 %v2200, 1.0
        %v2204 = vadd.f32 %v2202, 1.0
        %v2205 = vrcp.pop %v2203
        %v2206 = vmul.f32 1.0, %v2205
        %v2207 = vrcp.pop %v2204
        %v2208 = vmul.f32 1.0, %v2207
        %v2209 = vadd.f32 %v2187, %v2064
        %v2210 = vadd.f32 %v2192, %v2064
        %2213 = vrot.lane.b32.xlu0 %v2209, 64
        %v2214 = vpop.permute.xlu0 %2213
        %2215 = vrot.lane.b32.xlu0 %v2210, 64
        %v2216 = vpop.permute.xlu0 %2215
        %v2219 = vmul.f32 %v2206, %v2214
        %v2220 = vmul.f32 %v2208, %v2216
        %2223 = vrot.lane.b32.xlu0 %v2219, 64
        %v2224 = vpop.permute.xlu0 %2223
        %2225 = vrot.lane.b32.xlu0 %v2220, 64
        %v2226 = vpop.permute.xlu0 %2225
        %v2229 = vadd.f32 %v1898, %v2224
        %v2230 = vadd.f32 %v1903, %v2226
        %v2231 = vtanh.pop %v2229
        %v2232 = vtanh.pop %v2230
        %v2233 = vsub.f32 1.0, %v2206
        %v2234 = vsub.f32 1.0, %v2208
        %2237 = vrot.lane.b32.xlu0 %v2231, 96
        %v2238 = vpop.permute.xlu0 %2237
        %2239 = vrot.lane.b32.xlu0 %v2232, 96
        %v2240 = vpop.permute.xlu0 %2239
        %v2243 = vmul.f32 %v2233, %v2238
        %v2244 = vmul.f32 %v2234, %v2240
        %v2245 = vmul.f32 %v2206, %v2104
        %v2246 = vmul.f32 %v2208, %v2105
        %v2247 = vadd.f32 %v2243, %v2245
        %v2248 = vadd.f32 %v2244, %v2246
        %2251 = vrot.lane.b32.xlu0 %v2247, 96
        %v2252 = vpop.permute.xlu0 %2251
        %2253 = vrot.lane.b32.xlu0 %v2248, 96
        %v2254 = vpop.permute.xlu0 %2253
        %2257 = vst.msk [vmem:[#allocation2 + $0x20] sm:$0xff] %vm768, %v2252
        %2258 = vst.msk [vmem:[#allocation2 + $0x28] sm:$0xff] %vm768, %v2254
        %v2259 = vsel %vm768, %v2252, 0
        %v2261 = vsel %vm768, %v2254, 0
        %2263 = vmatprep.subr.mxu0 0.0
        %2264 = vmatpush1.msra.mxu0 0.0
        %2265 = vmatprep.subr.mxu0 0.0
        %2266 = vmatpush1.msra.mxu0 0.0
        %2267 = vmatprep.subr.mxu0 0.0
        %2268 = vmatpush1.msra.mxu0 0.0
        %2269 = vmatprep.subr.mxu0 0.0
        %2270 = vmatpush1.msra.mxu0 0.0
        %2271 = vmatprep.subr.mxu0 0.0
        %2272 = vmatpush1.msra.mxu0 0.0
        %2273 = vmatprep.subr.mxu0 0.0
        %2274 = vmatpush1.msra.mxu0 0.0
        %2275 = vmatprep.subr.mxu0 0.0
        %2276 = vmatpush1.msra.mxu0 0.0
        %2277 = vmatprep.subr.mxu0 0.0
        %2278 = vmatpush1.msra.mxu0 0.0
        %2279 = vmatprep.subr.mxu0 0.0
        %2280 = vmatpush1.msra.mxu0 0.0
        %2281 = vmatprep.subr.mxu0 0.0
        %2282 = vmatpush1.msra.mxu0 0.0
        %2283 = vmatprep.subr.mxu0 0.0
        %2284 = vmatpush1.msra.mxu0 0.0
        %2285 = vmatprep.subr.mxu0 0.0
        %2286 = vmatpush1.msra.mxu0 0.0
        %2287 = vmatprep.subr.mxu0 0.0
        %2288 = vmatpush1.msra.mxu0 %v1761
        %2289 = vmatprep.subr.mxu0 0.0
        %2290 = vmatpush1.msra.mxu0 %v1759
        %2291 = vmatprep.subr.mxu0 0.0
        %2292 = vmatpush1.msra.mxu0 %v1757
        %2293 = vmatprep.subr.mxu0 0.0
        %2294 = vmatpush1.msra.mxu0 %v1755
        %2295 = vmatprep.subr.mxu0 0.0
        %2296 = vmatpush2.msra.mxu0 0.0
        %2297 = vmatprep.subr.mxu0 0.0
        %2298 = vmatpush2.msra.mxu0 0.0
        %2299 = vmatprep.subr.mxu0 0.0
        %2300 = vmatpush2.msra.mxu0 0.0
        %2301 = vmatprep.subr.mxu0 0.0
        %2302 = vmatpush2.msra.mxu0 0.0
        %2303 = vmatprep.subr.mxu0 0.0
        %2304 = vmatpush2.msra.mxu0 0.0
        %2305 = vmatprep.subr.mxu0 0.0
        %2306 = vmatpush2.msra.mxu0 0.0
        %2307 = vmatprep.subr.mxu0 0.0
        %2308 = vmatpush2.msra.mxu0 0.0
        %2309 = vmatprep.subr.mxu0 0.0
        %2310 = vmatpush2.msra.mxu0 0.0
        %2311 = vmatprep.subr.mxu0 0.0
        %2312 = vmatpush2.msra.mxu0 0.0
        %2313 = vmatprep.subr.mxu0 0.0
        %2314 = vmatpush2.msra.mxu0 0.0
        %2315 = vmatprep.subr.mxu0 0.0
        %2316 = vmatpush2.msra.mxu0 0.0
        %2317 = vmatprep.subr.mxu0 0.0
        %2318 = vmatpush2.msra.mxu0 0.0
        %2319 = vmatprep.subr.mxu0 0.0
        %2320 = vmatpush2.msra.mxu0 0.0
        %2321 = vmatprep.subr.mxu0 0.0
        %2322 = vmatpush2.msra.mxu0 0.0
        %2323 = vmatprep.subr.mxu0 0.0
        %2324 = vmatpush2.msra.mxu0 0.0
        %2325 = vmatprep.subr.mxu0 0.0
        %2326 = vmatpush2.msra.mxu0 0.0
        %2327 = vmatprep.mubr.f32.mxu0 0.0
        %2328 = vmatmul.mubr.f32.gmra.mxu0 %v2259
        %v2329 = vpop.f32.mrf.mxu0
        %v2330 = vadd.f32 0.0, %v2329
        %v2331 = vpop.f32.mrf.mxu0
        %2332 = vmatprep.mubr.f32.mxu0 0.0
        %2333 = vmatmul.mubr.f32.gmra.mxu0 %v2261
        %v2334 = vpop.f32.mrf.mxu0
        %v2335 = vadd.f32 0.0, %v2334
        %v2336 = vpop.f32.mrf.mxu0
        %2337 = vdwg.mxu0
        %v2338 = vadd.f32 %v1908, %v2330
        %v2339 = vadd.f32 %v1913, %v2335
        %v2340 = vxor.u32 %v2338, 2147483648
        %v2341 = vxor.u32 %v2339, 2147483648
        %v2342 = vmul.f32 %v2340, 1.442695
        %v2343 = vpow.pop %v2342
        %v2344 = vmul.f32 %v2341, 1.442695
        %v2345 = vpow.pop %v2344
        %v2346 = vadd.f32 %v2343, 1.0
        %v2347 = vadd.f32 %v2345, 1.0
        %v2348 = vrcp.pop %v2346
        %v2349 = vmul.f32 1.0, %v2348
        %v2350 = vrcp.pop %v2347
        %v2351 = vmul.f32 1.0, %v2350
        %v2352 = vadd.f32 %v2330, %v2064
        %v2353 = vadd.f32 %v2335, %v2064
        %2356 = vrot.lane.b32.xlu0 %v2352, 64
        %v2357 = vpop.permute.xlu0 %2356
        %2358 = vrot.lane.b32.xlu0 %v2353, 64
        %v2359 = vpop.permute.xlu0 %2358
        %v2362 = vmul.f32 %v2349, %v2357
        %v2363 = vmul.f32 %v2351, %v2359
        %2366 = vrot.lane.b32.xlu0 %v2362, 64
        %v2367 = vpop.permute.xlu0 %2366
        %2368 = vrot.lane.b32.xlu0 %v2363, 64
        %v2369 = vpop.permute.xlu0 %2368
        %v2372 = vadd.f32 %v1908, %v2367
        %v2373 = vadd.f32 %v1913, %v2369
        %v2374 = vtanh.pop %v2372
        %v2375 = vtanh.pop %v2373
        %v2376 = vsub.f32 1.0, %v2349
        %v2377 = vsub.f32 1.0, %v2351
        %2380 = vrot.lane.b32.xlu0 %v2374, 96
        %v2381 = vpop.permute.xlu0 %2380
        %2382 = vrot.lane.b32.xlu0 %v2375, 96
        %v2383 = vpop.permute.xlu0 %2382
        %v2386 = vmul.f32 %v2376, %v2381
        %v2387 = vmul.f32 %v2377, %v2383
        %v2388 = vmul.f32 %v2349, %v2247
        %v2389 = vmul.f32 %v2351, %v2248
        %v2390 = vadd.f32 %v2386, %v2388
        %v2391 = vadd.f32 %v2387, %v2389
        %2394 = vrot.lane.b32.xlu0 %v2390, 96
        %v2395 = vpop.permute.xlu0 %2394
        %2396 = vrot.lane.b32.xlu0 %v2391, 96
        %v2397 = vpop.permute.xlu0 %2396
        %2400 = vst.msk [vmem:[#allocation2 + $0x30] sm:$0xff] %vm768, %v2395
        %2401 = vst.msk [vmem:[#allocation2 + $0x38] sm:$0xff] %vm768, %v2397
        %v2402 = vld [vmem:[#allocation3] sm:$0xff]
        %v2403 = vld [vmem:[#allocation3 + $0x8] sm:$0xff]
        %v2404 = vld [vmem:[#allocation3 + $0x10] sm:$0xff]
        %v2405 = vld [vmem:[#allocation3 + $0x18] sm:$0xff]
        %v2406 = vld [vmem:[#allocation3 + $0x20] sm:$0xff]
        %v2407 = vld [vmem:[#allocation3 + $0x28] sm:$0xff]
        %v2408 = vld [vmem:[#allocation3 + $0x30] sm:$0xff]
        %v2409 = vld [vmem:[#allocation3 + $0x38] sm:$0xff]
        %v2410 = vlaneseq
        %v2411 = vshrl.u32 %v2410, 7
        %v2412 = vsub.s32 1, %v2411
        %v2413 = vrot.slane %v1772, %v2412
        %2422 = vrot.lane.b32.xlu0 %v1764, 32
        %v2423 = vpop.permute.xlu0 %2422
        %2424 = vrot.lane.b32.xlu0 %v1765, 32
        %v2425 = vpop.permute.xlu0 %2424
        %2426 = vrot.lane.b32.xlu0 %v1766, 32
        %v2427 = vpop.permute.xlu0 %2426
        %2428 = vrot.lane.b32.xlu0 %v1767, 32
        %v2429 = vpop.permute.xlu0 %2428
        %2430 = vrot.lane.b32.xlu0 %v1768, 32
        %v2431 = vpop.permute.xlu0 %2430
        %2432 = vrot.lane.b32.xlu0 %v1769, 32
        %v2433 = vpop.permute.xlu0 %2432
        %2434 = vrot.lane.b32.xlu0 %v1770, 32
        %v2435 = vpop.permute.xlu0 %2434
        %2436 = vrot.lane.b32.xlu0 %v1771, 32
        %v2437 = vpop.permute.xlu0 %2436
        %v2438 = vsel %vm768, %v2423, %v2425
        %v2439 = vsel %vm768, %v2427, %v2429
        %v2440 = vsel %vm768, %v2431, %v2433
        %v2441 = vsel %vm768, %v2435, %v2437
        %2446 = vrot.lane.b32.xlu0 %v1785, 32
        %v2447 = vpop.permute.xlu0 %2446
        %2448 = vrot.lane.b32.xlu0 %v2413, 32
        %v2449 = vpop.permute.xlu0 %2448
        %v2450 = vsel %vm768, %v2447, %v2449
        %v2453 = vsel %vm768, %v2402, 0
        %v2456 = vsel %vm768, %v2403, 0
        %v2459 = vsel %vm768, %v2404, 0
        %v2462 = vsel %vm768, %v2405, 0
        %v2465 = vsel %vm768, %v2406, 0
        %v2468 = vsel %vm768, %v2407, 0
        %v2471 = vsel %vm768, %v2408, 0
        %v2474 = vsel %vm768, %v2409, 0
        %2476 = vmatprep.subr.mxu0 0.0
        %2477 = vmatpush1.msra.mxu0 0.0
        %2478 = vmatprep.subr.mxu0 0.0
        %2479 = vmatpush1.msra.mxu0 0.0
        %2480 = vmatprep.subr.mxu0 0.0
        %2481 = vmatpush1.msra.mxu0 0.0
        %2482 = vmatprep.subr.mxu0 0.0
        %2483 = vmatpush1.msra.mxu0 0.0
        %2484 = vmatprep.subr.mxu0 0.0
        %2485 = vmatpush1.msra.mxu0 0.0
        %2486 = vmatprep.subr.mxu0 0.0
        %2487 = vmatpush1.msra.mxu0 0.0
        %2488 = vmatprep.subr.mxu0 0.0
        %2489 = vmatpush1.msra.mxu0 0.0
        %2490 = vmatprep.subr.mxu0 0.0
        %2491 = vmatpush1.msra.mxu0 0.0
        %2492 = vmatprep.subr.mxu0 0.0
        %2493 = vmatpush1.msra.mxu0 0.0
        %2494 = vmatprep.subr.mxu0 0.0
        %2495 = vmatpush1.msra.mxu0 0.0
        %2496 = vmatprep.subr.mxu0 0.0
        %2497 = vmatpush1.msra.mxu0 0.0
        %2498 = vmatprep.subr.mxu0 0.0
        %2499 = vmatpush1.msra.mxu0 0.0
        %2500 = vmatprep.subr.mxu0 0.0
        %2501 = vmatpush1.msra.mxu0 %v2441
        %2502 = vmatprep.subr.mxu0 0.0
        %2503 = vmatpush1.msra.mxu0 %v2440
        %2504 = vmatprep.subr.mxu0 0.0
        %2505 = vmatpush1.msra.mxu0 %v2439
        %2506 = vmatprep.subr.mxu0 0.0
        %2507 = vmatpush1.msra.mxu0 %v2438
        %2508 = vmatprep.subr.mxu0 0.0
        %2509 = vmatpush2.msra.mxu0 0.0
        %2510 = vmatprep.subr.mxu0 0.0
        %2511 = vmatpush2.msra.mxu0 0.0
        %2512 = vmatprep.subr.mxu0 0.0
        %2513 = vmatpush2.msra.mxu0 0.0
        %2514 = vmatprep.subr.mxu0 0.0
        %2515 = vmatpush2.msra.mxu0 0.0
        %2516 = vmatprep.subr.mxu0 0.0
        %2517 = vmatpush2.msra.mxu0 0.0
        %2518 = vmatprep.subr.mxu0 0.0
        %2519 = vmatpush2.msra.mxu0 0.0
        %2520 = vmatprep.subr.mxu0 0.0
        %2521 = vmatpush2.msra.mxu0 0.0
        %2522 = vmatprep.subr.mxu0 0.0
        %2523 = vmatpush2.msra.mxu0 0.0
        %2524 = vmatprep.subr.mxu0 0.0
        %2525 = vmatpush2.msra.mxu0 0.0
        %2526 = vmatprep.subr.mxu0 0.0
        %2527 = vmatpush2.msra.mxu0 0.0
        %2528 = vmatprep.subr.mxu0 0.0
        %2529 = vmatpush2.msra.mxu0 0.0
        %2530 = vmatprep.subr.mxu0 0.0
        %2531 = vmatpush2.msra.mxu0 0.0
        %2532 = vmatprep.subr.mxu0 0.0
        %2533 = vmatpush2.msra.mxu0 0.0
        %2534 = vmatprep.subr.mxu0 0.0
        %2535 = vmatpush2.msra.mxu0 0.0
        %2536 = vmatprep.subr.mxu0 0.0
        %2537 = vmatpush2.msra.mxu0 0.0
        %2538 = vmatprep.subr.mxu0 0.0
        %2539 = vmatpush2.msra.mxu0 0.0
        %2540 = vmatprep.mubr.f32.mxu0 0.0
        %2541 = vmatmul.mubr.f32.gmra.mxu0 %v2453
        %v2542 = vpop.f32.mrf.mxu0
        %v2543 = vadd.f32 %v2450, %v2542
        %v2544 = vpop.f32.mrf.mxu0
        %2545 = vmatprep.mubr.f32.mxu0 0.0
        %2546 = vmatmul.mubr.f32.gmra.mxu0 %v2456
        %v2547 = vpop.f32.mrf.mxu0
        %v2548 = vadd.f32 %v2450, %v2547
        %v2549 = vpop.f32.mrf.mxu0
        %2550 = vmatprep.mubr.f32.mxu0 0.0
        %2551 = vmatmul.mubr.f32.gmra.mxu0 %v2459
        %v2552 = vpop.f32.mrf.mxu0
        %v2553 = vadd.f32 %v2450, %v2552
        %v2554 = vpop.f32.mrf.mxu0
        %2555 = vmatprep.mubr.f32.mxu0 0.0
        %2556 = vmatmul.mubr.f32.gmra.mxu0 %v2462
        %v2557 = vpop.f32.mrf.mxu0
        %v2558 = vadd.f32 %v2450, %v2557
        %v2559 = vpop.f32.mrf.mxu0
        %2560 = vmatprep.mubr.f32.mxu0 0.0
        %2561 = vmatmul.mubr.f32.gmra.mxu0 %v2465
        %v2562 = vpop.f32.mrf.mxu0
        %v2563 = vadd.f32 %v2450, %v2562
        %v2564 = vpop.f32.mrf.mxu0
        %2565 = vmatprep.mubr.f32.mxu0 0.0
        %2566 = vmatmul.mubr.f32.gmra.mxu0 %v2468
        %v2567 = vpop.f32.mrf.mxu0
        %v2568 = vadd.f32 %v2450, %v2567
        %v2569 = vpop.f32.mrf.mxu0
        %2570 = vmatprep.mubr.f32.mxu0 0.0
        %2571 = vmatmul.mubr.f32.gmra.mxu0 %v2471
        %v2572 = vpop.f32.mrf.mxu0
        %v2573 = vadd.f32 %v2450, %v2572
        %v2574 = vpop.f32.mrf.mxu0
        %2575 = vmatprep.mubr.f32.mxu0 0.0
        %2576 = vmatmul.mubr.f32.gmra.mxu0 %v2474
        %v2577 = vpop.f32.mrf.mxu0
        %v2578 = vadd.f32 %v2450, %v2577
        %v2579 = vpop.f32.mrf.mxu0
        %2580 = vdwg.mxu0
        %v2581 = vxor.u32 %v2543, 2147483648
        %v2582 = vxor.u32 %v2548, 2147483648
        %v2583 = vmul.f32 %v2581, 1.442695
        %v2584 = vpow.pop %v2583
        %v2585 = vmul.f32 %v2582, 1.442695
        %v2586 = vpow.pop %v2585
        %v2587 = vadd.f32 %v2584, 1.0
        %v2588 = vadd.f32 %v2586, 1.0
        %v2589 = vrcp.pop %v2587
        %v2590 = vmul.f32 1.0, %v2589
        %v2591 = vrcp.pop %v2588
        %v2592 = vmul.f32 1.0, %v2591
        %2593 = vrot.lane.b32.xlu0 %v1932, 96
        %v2594 = vpop.permute.xlu0 %2593
        %v2596 = vmul.f32 %v2590, %v2594
        %v2597 = vmul.f32 %v2592, %v2594
        %2600 = vrot.lane.b32.xlu0 %v2596, 64
        %v2601 = vpop.permute.xlu0 %2600
        %2602 = vrot.lane.b32.xlu0 %v2597, 64
        %v2603 = vpop.permute.xlu0 %2602
        %v2606 = vadd.f32 %v2543, %v2601
        %v2607 = vadd.f32 %v2548, %v2603
        %v2608 = vtanh.pop %v2606
        %v2609 = vtanh.pop %v2607
        %v2610 = vsub.f32 1.0, %v2590
        %v2611 = vsub.f32 1.0, %v2592
        %2614 = vrot.lane.b32.xlu0 %v2608, 96
        %v2615 = vpop.permute.xlu0 %2614
        %2616 = vrot.lane.b32.xlu0 %v2609, 96
        %v2617 = vpop.permute.xlu0 %2616
        %v2620 = vmul.f32 %v2610, %v2615
        %v2621 = vmul.f32 %v2611, %v2617
        %v2622 = vld [vmem:[#allocation2] sm:$0xff]
        %v2623 = vld [vmem:[#allocation2 + $0x8] sm:$0xff]
        %2626 = vrot.lane.b32.xlu0 %v2622, 32
        %v2627 = vpop.permute.xlu0 %2626
        %2628 = vrot.lane.b32.xlu0 %v2623, 32
        %v2629 = vpop.permute.xlu0 %2628
        %v2632 = vadd.f32 %v2620, %v2627
        %v2633 = vadd.f32 %v2621, %v2629
        %2636 = vrot.lane.b32.xlu0 %v2632, 96
        %v2637 = vpop.permute.xlu0 %2636
        %2638 = vrot.lane.b32.xlu0 %v2633, 96
        %v2639 = vpop.permute.xlu0 %2638
        %2642 = vst.msk [vmem:[%s567] sm:$0xff] %vm768, %v2637
        %2643 = vst.msk [vmem:[%s567 + $0x8] sm:$0xff] %vm768, %v2639
        %2646 = vrot.lane.b32.xlu0 %v2620, 96
        %v2647 = vpop.permute.xlu0 %2646
        %2648 = vrot.lane.b32.xlu0 %v2621, 96
        %v2649 = vpop.permute.xlu0 %2648
        %2658 = vrot.lane.b32.xlu0 %v1755, 32
        %v2659 = vpop.permute.xlu0 %2658
        %2660 = vrot.lane.b32.xlu0 %v1756, 32
        %v2661 = vpop.permute.xlu0 %2660
        %2662 = vrot.lane.b32.xlu0 %v1757, 32
        %v2663 = vpop.permute.xlu0 %2662
        %2664 = vrot.lane.b32.xlu0 %v1758, 32
        %v2665 = vpop.permute.xlu0 %2664
        %2666 = vrot.lane.b32.xlu0 %v1759, 32
        %v2667 = vpop.permute.xlu0 %2666
        %2668 = vrot.lane.b32.xlu0 %v1760, 32
        %v2669 = vpop.permute.xlu0 %2668
        %2670 = vrot.lane.b32.xlu0 %v1761, 32
        %v2671 = vpop.permute.xlu0 %2670
        %2672 = vrot.lane.b32.xlu0 %v1762, 32
        %v2673 = vpop.permute.xlu0 %2672
        %v2674 = vsel %vm768, %v2659, %v2661
        %v2675 = vsel %vm768, %v2663, %v2665
        %v2676 = vsel %vm768, %v2667, %v2669
        %v2677 = vsel %vm768, %v2671, %v2673
        %v2682 = vsel %vm768, %v2647, 0
        %v2684 = vsel %vm768, %v2649, 0
        %2686 = vmatprep.subr.mxu0 0.0
        %2687 = vmatpush1.msra.mxu0 0.0
        %2688 = vmatprep.subr.mxu0 0.0
        %2689 = vmatpush1.msra.mxu0 0.0
        %2690 = vmatprep.subr.mxu0 0.0
        %2691 = vmatpush1.msra.mxu0 0.0
        %2692 = vmatprep.subr.mxu0 0.0
        %2693 = vmatpush1.msra.mxu0 0.0
        %2694 = vmatprep.subr.mxu0 0.0
        %2695 = vmatpush1.msra.mxu0 0.0
        %2696 = vmatprep.subr.mxu0 0.0
        %2697 = vmatpush1.msra.mxu0 0.0
        %2698 = vmatprep.subr.mxu0 0.0
        %2699 = vmatpush1.msra.mxu0 0.0
        %2700 = vmatprep.subr.mxu0 0.0
        %2701 = vmatpush1.msra.mxu0 0.0
        %2702 = vmatprep.subr.mxu0 0.0
        %2703 = vmatpush1.msra.mxu0 0.0
        %2704 = vmatprep.subr.mxu0 0.0
        %2705 = vmatpush1.msra.mxu0 0.0
        %2706 = vmatprep.subr.mxu0 0.0
        %2707 = vmatpush1.msra.mxu0 0.0
        %2708 = vmatprep.subr.mxu0 0.0
        %2709 = vmatpush1.msra.mxu0 0.0
        %2710 = vmatprep.subr.mxu0 0.0
        %2711 = vmatpush1.msra.mxu0 %v2677
        %2712 = vmatprep.subr.mxu0 0.0
        %2713 = vmatpush1.msra.mxu0 %v2676
        %2714 = vmatprep.subr.mxu0 0.0
        %2715 = vmatpush1.msra.mxu0 %v2675
        %2716 = vmatprep.subr.mxu0 0.0
        %2717 = vmatpush1.msra.mxu0 %v2674
        %2718 = vmatprep.subr.mxu0 0.0
        %2719 = vmatpush2.msra.mxu0 0.0
        %2720 = vmatprep.subr.mxu0 0.0
        %2721 = vmatpush2.msra.mxu0 0.0
        %2722 = vmatprep.subr.mxu0 0.0
        %2723 = vmatpush2.msra.mxu0 0.0
        %2724 = vmatprep.subr.mxu0 0.0
        %2725 = vmatpush2.msra.mxu0 0.0
        %2726 = vmatprep.subr.mxu0 0.0
        %2727 = vmatpush2.msra.mxu0 0.0
        %2728 = vmatprep.subr.mxu0 0.0
        %2729 = vmatpush2.msra.mxu0 0.0
        %2730 = vmatprep.subr.mxu0 0.0
        %2731 = vmatpush2.msra.mxu0 0.0
        %2732 = vmatprep.subr.mxu0 0.0
        %2733 = vmatpush2.msra.mxu0 0.0
        %2734 = vmatprep.subr.mxu0 0.0
        %2735 = vmatpush2.msra.mxu0 0.0
        %2736 = vmatprep.subr.mxu0 0.0
        %2737 = vmatpush2.msra.mxu0 0.0
        %2738 = vmatprep.subr.mxu0 0.0
        %2739 = vmatpush2.msra.mxu0 0.0
        %2740 = vmatprep.subr.mxu0 0.0
        %2741 = vmatpush2.msra.mxu0 0.0
        %2742 = vmatprep.subr.mxu0 0.0
        %2743 = vmatpush2.msra.mxu0 0.0
        %2744 = vmatprep.subr.mxu0 0.0
        %2745 = vmatpush2.msra.mxu0 0.0
        %2746 = vmatprep.subr.mxu0 0.0
        %2747 = vmatpush2.msra.mxu0 0.0
        %2748 = vmatprep.subr.mxu0 0.0
        %2749 = vmatpush2.msra.mxu0 0.0
        %2750 = vmatprep.mubr.f32.mxu0 0.0
        %2751 = vmatmul.mubr.f32.gmra.mxu0 %v2682
        %v2752 = vpop.f32.mrf.mxu0
        %v2753 = vadd.f32 0.0, %v2752
        %v2754 = vpop.f32.mrf.mxu0
        %2755 = vmatprep.mubr.f32.mxu0 0.0
        %2756 = vmatmul.mubr.f32.gmra.mxu0 %v2684
        %v2757 = vpop.f32.mrf.mxu0
        %v2758 = vadd.f32 0.0, %v2757
        %v2759 = vpop.f32.mrf.mxu0
        %2760 = vdwg.mxu0
        %v2761 = vadd.f32 %v2553, %v2753
        %v2762 = vadd.f32 %v2558, %v2758
        %v2763 = vxor.u32 %v2761, 2147483648
        %v2764 = vxor.u32 %v2762, 2147483648
        %v2765 = vmul.f32 %v2763, 1.442695
        %v2766 = vpow.pop %v2765
        %v2767 = vmul.f32 %v2764, 1.442695
        %v2768 = vpow.pop %v2767
        %v2769 = vadd.f32 %v2766, 1.0
        %v2770 = vadd.f32 %v2768, 1.0
        %v2771 = vrcp.pop %v2769
        %v2772 = vmul.f32 1.0, %v2771
        %v2773 = vrcp.pop %v2770
        %v2774 = vmul.f32 1.0, %v2773
        %2775 = vrot.lane.b32.xlu0 %v1932, 32
        %v2776 = vpop.permute.xlu0 %2775
        %v2778 = vadd.f32 %v2753, %v2776
        %v2779 = vadd.f32 %v2758, %v2776
        %2782 = vrot.lane.b32.xlu0 %v2778, 64
        %v2783 = vpop.permute.xlu0 %2782
        %2784 = vrot.lane.b32.xlu0 %v2779, 64
        %v2785 = vpop.permute.xlu0 %2784
        %v2788 = vmul.f32 %v2772, %v2783
        %v2789 = vmul.f32 %v2774, %v2785
        %2792 = vrot.lane.b32.xlu0 %v2788, 64
        %v2793 = vpop.permute.xlu0 %2792
        %2794 = vrot.lane.b32.xlu0 %v2789, 64
        %v2795 = vpop.permute.xlu0 %2794
        %v2798 = vadd.f32 %v2553, %v2793
        %v2799 = vadd.f32 %v2558, %v2795
        %v2800 = vtanh.pop %v2798
        %v2801 = vtanh.pop %v2799
        %v2802 = vsub.f32 1.0, %v2772
        %v2803 = vsub.f32 1.0, %v2774
        %2806 = vrot.lane.b32.xlu0 %v2800, 96
        %v2807 = vpop.permute.xlu0 %2806
        %2808 = vrot.lane.b32.xlu0 %v2801, 96
        %v2809 = vpop.permute.xlu0 %2808
        %v2812 = vmul.f32 %v2802, %v2807
        %v2813 = vmul.f32 %v2803, %v2809
        %v2814 = vmul.f32 %v2772, %v2620
        %v2815 = vmul.f32 %v2774, %v2621
        %v2816 = vadd.f32 %v2812, %v2814
        %v2817 = vadd.f32 %v2813, %v2815
        %v2818 = vld [vmem:[#allocation2 + $0x10] sm:$0xff]
        %v2819 = vld [vmem:[#allocation2 + $0x18] sm:$0xff]
        %2822 = vrot.lane.b32.xlu0 %v2818, 32
        %v2823 = vpop.permute.xlu0 %2822
        %2824 = vrot.lane.b32.xlu0 %v2819, 32
        %v2825 = vpop.permute.xlu0 %2824
        %v2828 = vadd.f32 %v2816, %v2823
        %v2829 = vadd.f32 %v2817, %v2825
        %2832 = vrot.lane.b32.xlu0 %v2828, 96
        %v2833 = vpop.permute.xlu0 %2832
        %2834 = vrot.lane.b32.xlu0 %v2829, 96
        %v2835 = vpop.permute.xlu0 %2834
        %2838 = vst.msk [vmem:[%s567 + $0x10] sm:$0xff] %vm768, %v2833
        %2839 = vst.msk [vmem:[%s567 + $0x18] sm:$0xff] %vm768, %v2835
        %2842 = vrot.lane.b32.xlu0 %v2816, 96
        %v2843 = vpop.permute.xlu0 %2842
        %2844 = vrot.lane.b32.xlu0 %v2817, 96
        %v2845 = vpop.permute.xlu0 %2844
        %v2846 = vsel %vm768, %v2843, 0
        %v2848 = vsel %vm768, %v2845, 0
        %2850 = vmatprep.subr.mxu0 0.0
        %2851 = vmatpush1.msra.mxu0 0.0
        %2852 = vmatprep.subr.mxu0 0.0
        %2853 = vmatpush1.msra.mxu0 0.0
        %2854 = vmatprep.subr.mxu0 0.0
        %2855 = vmatpush1.msra.mxu0 0.0
        %2856 = vmatprep.subr.mxu0 0.0
        %2857 = vmatpush1.msra.mxu0 0.0
        %2858 = vmatprep.subr.mxu0 0.0
        %2859 = vmatpush1.msra.mxu0 0.0
        %2860 = vmatprep.subr.mxu0 0.0
        %2861 = vmatpush1.msra.mxu0 0.0
        %2862 = vmatprep.subr.mxu0 0.0
        %2863 = vmatpush1.msra.mxu0 0.0
        %2864 = vmatprep.subr.mxu0 0.0
        %2865 = vmatpush1.msra.mxu0 0.0
        %2866 = vmatprep.subr.mxu0 0.0
        %2867 = vmatpush1.msra.mxu0 0.0
        %2868 = vmatprep.subr.mxu0 0.0
        %2869 = vmatpush1.msra.mxu0 0.0
        %2870 = vmatprep.subr.mxu0 0.0
        %2871 = vmatpush1.msra.mxu0 0.0
        %2872 = vmatprep.subr.mxu0 0.0
        %2873 = vmatpush1.msra.mxu0 0.0
        %2874 = vmatprep.subr.mxu0 0.0
        %2875 = vmatpush1.msra.mxu0 %v2677
        %2876 = vmatprep.subr.mxu0 0.0
        %2877 = vmatpush1.msra.mxu0 %v2676
        %2878 = vmatprep.subr.mxu0 0.0
        %2879 = vmatpush1.msra.mxu0 %v2675
        %2880 = vmatprep.subr.mxu0 0.0
        %2881 = vmatpush1.msra.mxu0 %v2674
        %2882 = vmatprep.subr.mxu0 0.0
        %2883 = vmatpush2.msra.mxu0 0.0
        %2884 = vmatprep.subr.mxu0 0.0
        %2885 = vmatpush2.msra.mxu0 0.0
        %2886 = vmatprep.subr.mxu0 0.0
        %2887 = vmatpush2.msra.mxu0 0.0
        %2888 = vmatprep.subr.mxu0 0.0
        %2889 = vmatpush2.msra.mxu0 0.0
        %2890 = vmatprep.subr.mxu0 0.0
        %2891 = vmatpush2.msra.mxu0 0.0
        %2892 = vmatprep.subr.mxu0 0.0
        %2893 = vmatpush2.msra.mxu0 0.0
        %2894 = vmatprep.subr.mxu0 0.0
        %2895 = vmatpush2.msra.mxu0 0.0
        %2896 = vmatprep.subr.mxu0 0.0
        %2897 = vmatpush2.msra.mxu0 0.0
        %2898 = vmatprep.subr.mxu0 0.0
        %2899 = vmatpush2.msra.mxu0 0.0
        %2900 = vmatprep.subr.mxu0 0.0
        %2901 = vmatpush2.msra.mxu0 0.0
        %2902 = vmatprep.subr.mxu0 0.0
        %2903 = vmatpush2.msra.mxu0 0.0
        %2904 = vmatprep.subr.mxu0 0.0
        %2905 = vmatpush2.msra.mxu0 0.0
        %2906 = vmatprep.subr.mxu0 0.0
        %2907 = vmatpush2.msra.mxu0 0.0
        %2908 = vmatprep.subr.mxu0 0.0
        %2909 = vmatpush2.msra.mxu0 0.0
        %2910 = vmatprep.subr.mxu0 0.0
        %2911 = vmatpush2.msra.mxu0 0.0
        %2912 = vmatprep.subr.mxu0 0.0
        %2913 = vmatpush2.msra.mxu0 0.0
        %2914 = vmatprep.mubr.f32.mxu0 0.0
        %2915 = vmatmul.mubr.f32.gmra.mxu0 %v2846
        %v2916 = vpop.f32.mrf.mxu0
        %v2917 = vadd.f32 0.0, %v2916
        %v2918 = vpop.f32.mrf.mxu0
        %2919 = vmatprep.mubr.f32.mxu0 0.0
        %2920 = vmatmul.mubr.f32.gmra.mxu0 %v2848
        %v2921 = vpop.f32.mrf.mxu0
        %v2922 = vadd.f32 0.0, %v2921
        %v2923 = vpop.f32.mrf.mxu0
        %2924 = vdwg.mxu0
        %v2925 = vadd.f32 %v2563, %v2917
        %v2926 = vadd.f32 %v2568, %v2922
        %v2927 = vxor.u32 %v2925, 2147483648
        %v2928 = vxor.u32 %v2926, 2147483648
        %v2929 = vmul.f32 %v2927, 1.442695
        %v2930 = vpow.pop %v2929
        %v2931 = vmul.f32 %v2928, 1.442695
        %v2932 = vpow.pop %v2931
        %v2933 = vadd.f32 %v2930, 1.0
        %v2934 = vadd.f32 %v2932, 1.0
        %v2935 = vrcp.pop %v2933
        %v2936 = vmul.f32 1.0, %v2935
        %v2937 = vrcp.pop %v2934
        %v2938 = vmul.f32 1.0, %v2937
        %v2939 = vadd.f32 %v2917, %v2776
        %v2940 = vadd.f32 %v2922, %v2776
        %2943 = vrot.lane.b32.xlu0 %v2939, 64
        %v2944 = vpop.permute.xlu0 %2943
        %2945 = vrot.lane.b32.xlu0 %v2940, 64
        %v2946 = vpop.permute.xlu0 %2945
        %v2949 = vmul.f32 %v2936, %v2944
        %v2950 = vmul.f32 %v2938, %v2946
        %2953 = vrot.lane.b32.xlu0 %v2949, 64
        %v2954 = vpop.permute.xlu0 %2953
        %2955 = vrot.lane.b32.xlu0 %v2950, 64
        %v2956 = vpop.permute.xlu0 %2955
        %v2959 = vadd.f32 %v2563, %v2954
        %v2960 = vadd.f32 %v2568, %v2956
        %v2961 = vtanh.pop %v2959
        %v2962 = vtanh.pop %v2960
        %v2963 = vsub.f32 1.0, %v2936
        %v2964 = vsub.f32 1.0, %v2938
        %2967 = vrot.lane.b32.xlu0 %v2961, 96
        %v2968 = vpop.permute.xlu0 %2967
        %2969 = vrot.lane.b32.xlu0 %v2962, 96
        %v2970 = vpop.permute.xlu0 %2969
        %v2973 = vmul.f32 %v2963, %v2968
        %v2974 = vmul.f32 %v2964, %v2970
        %v2975 = vmul.f32 %v2936, %v2816
        %v2976 = vmul.f32 %v2938, %v2817
        %v2977 = vadd.f32 %v2973, %v2975
        %v2978 = vadd.f32 %v2974, %v2976
        %v2979 = vld [vmem:[#allocation2 + $0x20] sm:$0xff]
        %v2980 = vld [vmem:[#allocation2 + $0x28] sm:$0xff]
        %2983 = vrot.lane.b32.xlu0 %v2979, 32
        %v2984 = vpop.permute.xlu0 %2983
        %2985 = vrot.lane.b32.xlu0 %v2980, 32
        %v2986 = vpop.permute.xlu0 %2985
        %v2989 = vadd.f32 %v2977, %v2984
        %v2990 = vadd.f32 %v2978, %v2986
        %2993 = vrot.lane.b32.xlu0 %v2989, 96
        %v2994 = vpop.permute.xlu0 %2993
        %2995 = vrot.lane.b32.xlu0 %v2990, 96
        %v2996 = vpop.permute.xlu0 %2995
        %2999 = vst.msk [vmem:[%s567 + $0x20] sm:$0xff] %vm768, %v2994
        %3000 = vst.msk [vmem:[%s567 + $0x28] sm:$0xff] %vm768, %v2996
        %3003 = vrot.lane.b32.xlu0 %v2977, 96
        %v3004 = vpop.permute.xlu0 %3003
        %3005 = vrot.lane.b32.xlu0 %v2978, 96
        %v3006 = vpop.permute.xlu0 %3005
        %v3007 = vsel %vm768, %v3004, 0
        %v3009 = vsel %vm768, %v3006, 0
        %3011 = vmatprep.subr.mxu0 0.0
        %3012 = vmatpush1.msra.mxu0 0.0
        %3013 = vmatprep.subr.mxu0 0.0
        %3014 = vmatpush1.msra.mxu0 0.0
        %3015 = vmatprep.subr.mxu0 0.0
        %3016 = vmatpush1.msra.mxu0 0.0
        %3017 = vmatprep.subr.mxu0 0.0
        %3018 = vmatpush1.msra.mxu0 0.0
        %3019 = vmatprep.subr.mxu0 0.0
        %3020 = vmatpush1.msra.mxu0 0.0
        %3021 = vmatprep.subr.mxu0 0.0
        %3022 = vmatpush1.msra.mxu0 0.0
        %3023 = vmatprep.subr.mxu0 0.0
        %3024 = vmatpush1.msra.mxu0 0.0
        %3025 = vmatprep.subr.mxu0 0.0
        %3026 = vmatpush1.msra.mxu0 0.0
        %3027 = vmatprep.subr.mxu0 0.0
        %3028 = vmatpush1.msra.mxu0 0.0
        %3029 = vmatprep.subr.mxu0 0.0
        %3030 = vmatpush1.msra.mxu0 0.0
        %3031 = vmatprep.subr.mxu0 0.0
        %3032 = vmatpush1.msra.mxu0 0.0
        %3033 = vmatprep.subr.mxu0 0.0
        %3034 = vmatpush1.msra.mxu0 0.0
        %3035 = vmatprep.subr.mxu0 0.0
        %3036 = vmatpush1.msra.mxu0 %v2677
        %3037 = vmatprep.subr.mxu0 0.0
        %3038 = vmatpush1.msra.mxu0 %v2676
        %3039 = vmatprep.subr.mxu0 0.0
        %3040 = vmatpush1.msra.mxu0 %v2675
        %3041 = vmatprep.subr.mxu0 0.0
        %3042 = vmatpush1.msra.mxu0 %v2674
        %3043 = vmatprep.subr.mxu0 0.0
        %3044 = vmatpush2.msra.mxu0 0.0
        %3045 = vmatprep.subr.mxu0 0.0
        %3046 = vmatpush2.msra.mxu0 0.0
        %3047 = vmatprep.subr.mxu0 0.0
        %3048 = vmatpush2.msra.mxu0 0.0
        %3049 = vmatprep.subr.mxu0 0.0
        %3050 = vmatpush2.msra.mxu0 0.0
        %3051 = vmatprep.subr.mxu0 0.0
        %3052 = vmatpush2.msra.mxu0 0.0
        %3053 = vmatprep.subr.mxu0 0.0
        %3054 = vmatpush2.msra.mxu0 0.0
        %3055 = vmatprep.subr.mxu0 0.0
        %3056 = vmatpush2.msra.mxu0 0.0
        %3057 = vmatprep.subr.mxu0 0.0
        %3058 = vmatpush2.msra.mxu0 0.0
        %3059 = vmatprep.subr.mxu0 0.0
        %3060 = vmatpush2.msra.mxu0 0.0
        %3061 = vmatprep.subr.mxu0 0.0
        %3062 = vmatpush2.msra.mxu0 0.0
        %3063 = vmatprep.subr.mxu0 0.0
        %3064 = vmatpush2.msra.mxu0 0.0
        %3065 = vmatprep.subr.mxu0 0.0
        %3066 = vmatpush2.msra.mxu0 0.0
        %3067 = vmatprep.subr.mxu0 0.0
        %3068 = vmatpush2.msra.mxu0 0.0
        %3069 = vmatprep.subr.mxu0 0.0
        %3070 = vmatpush2.msra.mxu0 0.0
        %3071 = vmatprep.subr.mxu0 0.0
        %3072 = vmatpush2.msra.mxu0 0.0
        %3073 = vmatprep.subr.mxu0 0.0
        %3074 = vmatpush2.msra.mxu0 0.0
        %3075 = vmatprep.mubr.f32.mxu0 0.0
        %3076 = vmatmul.mubr.f32.gmra.mxu0 %v3007
        %v3077 = vpop.f32.mrf.mxu0
        %v3078 = vadd.f32 0.0, %v3077
        %v3079 = vpop.f32.mrf.mxu0
        %3080 = vmatprep.mubr.f32.mxu0 0.0
        %3081 = vmatmul.mubr.f32.gmra.mxu0 %v3009
        %v3082 = vpop.f32.mrf.mxu0
        %v3083 = vadd.f32 0.0, %v3082
        %v3084 = vpop.f32.mrf.mxu0
        %3085 = vdwg.mxu0
        %v3086 = vadd.f32 %v2573, %v3078
        %v3087 = vadd.f32 %v2578, %v3083
        %v3088 = vxor.u32 %v3086, 2147483648
        %v3089 = vxor.u32 %v3087, 2147483648
        %v3090 = vmul.f32 %v3088, 1.442695
        %v3091 = vpow.pop %v3090
        %v3092 = vmul.f32 %v3089, 1.442695
        %v3093 = vpow.pop %v3092
        %v3094 = vadd.f32 %v3091, 1.0
        %v3095 = vadd.f32 %v3093, 1.0
        %v3096 = vrcp.pop %v3094
        %v3097 = vmul.f32 1.0, %v3096
        %v3098 = vrcp.pop %v3095
        %v3099 = vmul.f32 1.0, %v3098
        %v3100 = vadd.f32 %v3078, %v2776
        %v3101 = vadd.f32 %v3083, %v2776
        %3104 = vrot.lane.b32.xlu0 %v3100, 64
        %v3105 = vpop.permute.xlu0 %3104
        %3106 = vrot.lane.b32.xlu0 %v3101, 64
        %v3107 = vpop.permute.xlu0 %3106
        %v3110 = vmul.f32 %v3097, %v3105
        %v3111 = vmul.f32 %v3099, %v3107
        %3114 = vrot.lane.b32.xlu0 %v3110, 64
        %v3115 = vpop.permute.xlu0 %3114
        %3116 = vrot.lane.b32.xlu0 %v3111, 64
        %v3117 = vpop.permute.xlu0 %3116
        %v3120 = vadd.f32 %v2573, %v3115
        %v3121 = vadd.f32 %v2578, %v3117
        %v3122 = vtanh.pop %v3120
        %v3123 = vtanh.pop %v3121
        %v3124 = vsub.f32 1.0, %v3097
        %v3125 = vsub.f32 1.0, %v3099
        %3128 = vrot.lane.b32.xlu0 %v3122, 96
        %v3129 = vpop.permute.xlu0 %3128
        %3130 = vrot.lane.b32.xlu0 %v3123, 96
        %v3131 = vpop.permute.xlu0 %3130
        %v3134 = vmul.f32 %v3124, %v3129
        %v3135 = vmul.f32 %v3125, %v3131
        %v3136 = vmul.f32 %v3097, %v2977
        %v3137 = vmul.f32 %v3099, %v2978
        %v3138 = vadd.f32 %v3134, %v3136
        %v3139 = vadd.f32 %v3135, %v3137
        %v3140 = vld [vmem:[#allocation2 + $0x30] sm:$0xff]
        %v3141 = vld [vmem:[#allocation2 + $0x38] sm:$0xff]
        %3144 = vrot.lane.b32.xlu0 %v3140, 32
        %v3145 = vpop.permute.xlu0 %3144
        %3146 = vrot.lane.b32.xlu0 %v3141, 32
        %v3147 = vpop.permute.xlu0 %3146
        %v3150 = vadd.f32 %v3138, %v3145
        %v3151 = vadd.f32 %v3139, %v3147
        %3154 = vrot.lane.b32.xlu0 %v3150, 96
        %v3155 = vpop.permute.xlu0 %3154
        %3156 = vrot.lane.b32.xlu0 %v3151, 96
        %v3157 = vpop.permute.xlu0 %3156
        %3160 = vst.msk [vmem:[%s567 + $0x30] sm:$0xff] %vm768, %v3155
        %3161 = vst.msk [vmem:[%s567 + $0x38] sm:$0xff] %vm768, %v3157
        %p3162 = scmp.lt.s32.totalorder %s30, 1
        %s3163 = scalar_select %p3162, %s30, 1
        %p3164 = scmp.lt.s32.totalorder %s31, 0
        %s3165 = scalar_select %p3164, %s31, 0
        %s3166 = smul.addr %s3165, 8
        %s3167 = smul.addr %s3163, 8
        %s3168 = sadd.s32 %s3166, %s3167
        %s3169 = smul.addr %s3168, 8
        %s3170 = scalar_lea.vmem %s9, %s3169
        // Predicated region
        $region69: #{tpu_custom_call.1} parent=55 // pred_check
          %p3171 = pneg %p294
        $region70: #{tpu_custom_call.1} parent=55 // pred_check_branch
          %3173 = sbr.rel (%p3171) target = $region72
        $region71: #{tpu_custom_call.1} parent=55 // pred_region
          _
        $region72: #{tpu_custom_call.1} parent=55 // pred_fallthru
          _
      $region56: #{tpu_custom_call.1} parent=5 // pred_fallthru
        _
      %p3174 = scmp.le.s32.totalorder 2, %s21
      // Predicated region
      $region73: #{tpu_custom_call.1} parent=5 // pred_check
        %p3175 = pneg %p3174
      $region74: #{tpu_custom_call.1} parent=5 // pred_check_branch
        %3177 = sbr.rel (%p3175) target = $region76
      $region75: #{tpu_custom_call.1} parent=5 // pred_region
        %s3178 = ssub.s32 %s21, 2
        // Predicated region
        $region77: #{tpu_custom_call.1} parent=75 // pred_check
          %p3179 = pneg %p300
        $region78: #{tpu_custom_call.1} parent=75 // pred_check_branch
          %3181 = sbr.rel (%p3179) target = $region80
        $region79: #{tpu_custom_call.1} parent=75 // pred_region
          %p3182 = scmp.lt.s32.totalorder %s32, 1
          %s3183 = scalar_select %p3182, %s32, 1
          %p3184 = scmp.lt.s32.totalorder %s33, 0
          %s3185 = scalar_select %p3184, %s33, 0
          %s3186 = smul.addr %s3185, 8
          %s3187 = smul.addr %s3183, 8
          %s3188 = sadd.s32 %s3186, %s3187
          %s3189 = smul.addr %s3188, 8
          %s3190 = scalar_lea.vmem %s9, %s3189
        $region80: #{tpu_custom_call.1} parent=75 // pred_fallthru
          _
      $region76: #{tpu_custom_call.1} parent=5 // pred_fallthru
        _
    $region6: #{tpu_custom_call.1} parent=1 // loop_footer
      %s25 = sadd.s32 1, %s21
    $region7: #{tpu_custom_call.1} parent=1 // loop_footer_branch
      %20 = sbr.rel target = $region3
    $region8: #{tpu_custom_call.1} parent=1 // loop_exit
      _
    %3191 = vsyncpa [#allocation5], 1
    %s3192 = scalar_lea.sflag [#allocation5], 1
    %3193 = vsyncpa %s3192, 1
    %3194 = vsyncpa [#allocation7], 1
    %s3195 = scalar_lea.sflag [#allocation7], 1
    %3196 = vsyncpa %s3195, 1

</llo_original>
